<compile_context>
chip_gen: v6e
topology: v6e:2x2x1
jax: 0.10.0
libtpu: 0.0.40
codegen_flags: <defaults>
</compile_context>

<pallas_src>
import math
import jax
import jax.numpy as jnp
from jax.experimental import pallas as pl
from jax.experimental.pallas import tpu as pltpu


def autopad(k, p=None, d=1):
    """Pad to 'same' shape outputs (matches the PyTorch helper)."""
    if d > 1:
        k = d * (k - 1) + 1 if isinstance(k, int) else [d * (x - 1) + 1 for x in k]
    if p is None:
        p = k // 2 if isinstance(k, int) else [x // 2 for x in k]
    return p


def _round_up(x, m):
    return ((x + m - 1) // m) * m


def _vmem_tile_bytes(shape, itemsize):
    """Conservative (sublane=16, lane=128)-tiled VMEM footprint of one buffer."""
    s = list(shape)
    if len(s) >= 1:
        s[-1] = _round_up(s[-1], 128)
    if len(s) >= 2:
        s[-2] = _round_up(s[-2], 16)
    n = 1
    for d in s:
        n *= int(d)
    return n * itemsize


def _make_kernel(K, dilation, stride, tile_h, Wo, C1, C2p):
    """Fused conv + folded-BN + SiLU kernel for one output row tile."""
    m2 = tile_h * Wo  # rows of the (m2, C2p) output tile (multiple of 8)

    def kernel(x_ref, w_ref, scale_ref, bias_ref, o_ref, acc_ref):
        # x_ref     : (1, Hp, Wp, C1)   bf16  -- whole padded image, VMEM-resident
        # w_ref     : (K*K, C1, C2p)    bf16  -- weights, VMEM-resident
        # scale_ref : (1, C2p)          f32   -- folded BN scale
        # bias_ref  : (1, C2p)          f32   -- folded BN bias
        # o_ref     : (1, m2, C2p)      out dtype
        # acc_ref   : (m2, C2p)         f32   -- VMEM scratch accumulator
        t = pl.program_id(1)
        r0 = pl.multiple_of(t * (tile_h * stride), tile_h * stride)

        first = True
        for ki in range(K):                      # small static loops -> unrolled
            for kj in range(K):
                if stride == 1:
                    rows = pl.ds(r0 + ki * dilation, tile_h)
                    cols = pl.ds(kj * dilation, Wo)
                else:
                    rows = pl.ds(r0 + ki * dilation, tile_h, stride)
                    cols = pl.ds(kj * dilation, Wo, stride)
                # Wo % 8 == 0 -> this reshape is layout preserving (no repack copy).
                xs = x_ref[0, rows, cols, :].reshape(m2, C1)
                d = jnp.dot(xs, w_ref[ki * K + kj],
                            preferred_element_type=jnp.float32)
                if first:
                    acc_ref[...] = d
                    first = False
                else:
                    acc_ref[...] += d

        y = acc_ref[...] * scale_ref[...] + bias_ref[...]   # folded BatchNorm (eval)
        # SiLU: exp + reciprocal on EUP slot, no VALU divide.
        y = y * pl.reciprocal(1.0 + jnp.exp(-y), approx=True)
        o_ref[0] = y.astype(o_ref.dtype)

    return kernel


def conv_bn_silu_nhwc(x_nhwc, weight, gamma, beta, run_mean, run_var, *,
                      stride=1, padding=None, dilation=1, eps=1e-5,
                      tile_h=None, out_dtype=None):
    """Fused Conv2d(no bias) + BatchNorm2d(eval) + SiLU.  NHWC in / NHWC out."""
    N, H, W, C1 = x_nhwc.shape
    C2, C1w, K, K2 = weight.shape
    assert C1w == C1 and K == K2, "groups != 1 / non-square kernels not supported"

    if out_dtype is None:
        out_dtype = x_nhwc.dtype

    pad = autopad(K, padding, dilation)
    kd = dilation * (K - 1) + 1                       # dilated kernel extent
    Ho = (H + 2 * pad - kd) // stride + 1
    Wo = (W + 2 * pad - kd) // stride + 1

    # Kernel-visible output width padded to a sublane multiple: keeps the in-kernel
    # reshape free and output stores unmasked.  Extra columns are garbage, sliced off.
    Wo_k = _round_up(Wo, 8)

    # Row tile: target >= ~1024 output pixels per grid step; prefer a divisor of Ho
    # so no garbage rows are computed / stored.
    if tile_h is None:
        tile_h = max(1, min(Ho, pl.cdiv(1024, Wo_k)))
        for cand in range(tile_h, max(tile_h // 2, 1) - 1, -1):
            if Ho % cand == 0:
                tile_h = cand
                break
    T = pl.cdiv(Ho, tile_h)
    Ho_pad = T * tile_h

    # Zero-pad the input once ('same' halo + extra rows/cols for padded-out tiles),
    # cast to bf16 (MXU-native).  Padded output rows/cols are never consumed.
    Hp_need = (Ho_pad - 1) * stride + kd
    Wp_need = (Wo_k - 1) * stride + kd
    pad_bot = max(pad, Hp_need - H - pad)
    pad_rgt = max(pad, Wp_need - W - pad)
    x = jnp.pad(x_nhwc, ((0, 0), (pad, pad_bot), (pad, pad_rgt), (0, 0)))
    x = x.astype(jnp.bfloat16)
    Hp, Wp = x.shape[1], x.shape[2]

    # Lane-dense output channels.
    C2p = _round_up(C2, 128)

    # weight (C2, C1, K, K) -> (K*K, C1, C2p), bf16.
    w = jnp.transpose(weight, (2, 3, 1, 0)).reshape(K * K, C1, C2)
    w = jnp.pad(w, ((0, 0), (0, 0), (0, C2p - C2))).astype(jnp.bfloat16)

    # Fold BatchNorm (eval mode, running stats) into per-channel scale / bias.
    scale = gamma / jnp.sqrt(run_var + eps)
    bias = beta - run_mean * scale
    scale = jnp.pad(scale, (0, C2p - C2)).reshape(1, C2p).astype(jnp.float32)
    bias = jnp.pad(bias, (0, C2p - C2)).reshape(1, C2p).astype(jnp.float32)

    m2 = tile_h * Wo_k
    kernel = _make_kernel(K, dilation, stride, tile_h, Wo_k, C1, C2p)

    # VMEM budget computed from actual (double-buffered, tile-padded) block sizes.
    out_isize = jnp.dtype(out_dtype).itemsize
    need = (2 * (_vmem_tile_bytes((Hp, Wp, C1), 2)
                 + _vmem_tile_bytes((K * K, C1, C2p), 2)
                 + 2 * _vmem_tile_bytes((1, C2p), 4)
                 + _vmem_tile_bytes((m2, C2p), out_isize))
            + _vmem_tile_bytes((m2, C2p), 4))
    try:
        vmem_cap = int(pltpu.get_tpu_info().vmem_capacity_bytes)
    except Exception:
        vmem_cap = 64 * 1024 * 1024
    vmem_limit = int(min(vmem_cap - 2 * 1024 * 1024,
                         max(int(need * 1.5) + 2 * 1024 * 1024, 32 * 1024 * 1024)))

    out = pl.pallas_call(
        kernel,
        out_shape=jax.ShapeDtypeStruct((N, Ho_pad * Wo_k, C2p), out_dtype),
        grid_spec=pltpu.PrefetchScalarGridSpec(
            num_scalar_prefetch=0,
            grid=(N, T),
            in_specs=[
                # Whole padded image of batch element n: constant across t, so it is
                # DMA'd once per image and stays VMEM-resident across the T row tiles.
                pl.BlockSpec((1, Hp, Wp, C1), lambda n, t: (n, 0, 0, 0)),
                pl.BlockSpec((K * K, C1, C2p), lambda n, t: (0, 0, 0)),
                pl.BlockSpec((1, C2p), lambda n, t: (0, 0)),
                pl.BlockSpec((1, C2p), lambda n, t: (0, 0)),
            ],
            out_specs=pl.BlockSpec((1, m2, C2p), lambda n, t: (n, t, 0)),
            scratch_shapes=[pltpu.VMEM((m2, C2p), jnp.float32)],
        ),
        compiler_params=pltpu.CompilerParams(
            dimension_semantics=("parallel", "parallel"),
            vmem_limit_bytes=vmem_limit,
        ),
    )(x, w, scale, bias)

    out = out.reshape(N, Ho_pad, Wo_k, C2p)
    if Ho_pad != Ho or Wo_k != Wo or C2p != C2:
        out = out[:, :Ho, :Wo, :C2]
    return out


def conv_bn_silu(x_nchw, weight, gamma, beta, run_mean, run_var, **kwargs):
    """NCHW wrapper matching the PyTorch module interface.

    NOTE: in a full network keep activations NHWC (and bf16) and call
    conv_bn_silu_nhwc directly so layout transposes happen once per network.
    """
    x = jnp.transpose(x_nchw, (0, 2, 3, 1))
    y = conv_bn_silu_nhwc(x, weight, gamma, beta, run_mean, run_var, **kwargs)
    return jnp.transpose(y, (0, 3, 1, 2))


def _reference(x_nchw, weight, gamma, beta, run_mean, run_var,
               *, stride=1, padding=None, dilation=1, eps=1e-5):
    """Pure-JAX f32 reference (lax conv) for a sanity check."""
    K = weight.shape[-1]
    pad = autopad(K, padding, dilation)
    y = jax.lax.conv_general_dilated(
        x_nchw, weight, window_strides=(stride, stride),
        padding=((pad, pad), (pad, pad)), rhs_dilation=(dilation, dilation),
        dimension_numbers=("NCHW", "OIHW", "NCHW"),
        precision=jax.lax.Precision.HIGHEST)
    scale = (gamma / jnp.sqrt(run_var + eps)).reshape(1, -1, 1, 1)
    bias = (beta - run_mean * gamma / jnp.sqrt(run_var + eps)).reshape(1, -1, 1, 1)
    y = y * scale + bias
    return y * jax.nn.sigmoid(y)


if __name__ == "__main__":
    # Small deterministic setup: Conv(c1=4, c2=8, k=3, s=1) -> (2, 8, 16, 16)
    key = jax.random.PRNGKey(0)
    k_x, k_w, k_g, k_b, k_m, k_v = jax.random.split(key, 6)

    N, C1, H, W = 2, 4, 16, 16
    C2, K = 8, 3

    x = jax.random.normal(k_x, (N, C1, H, W), dtype=jnp.float32)
    fan_in = C1 * K * K
    weight = jax.random.normal(k_w, (C2, C1, K, K), dtype=jnp.float32) / math.sqrt(fan_in)
    gamma = 1.0 + 0.1 * jax.random.normal(k_g, (C2,), dtype=jnp.float32)
    beta = 0.1 * jax.random.normal(k_b, (C2,), dtype=jnp.float32)
    run_mean = 0.1 * jax.random.normal(k_m, (C2,), dtype=jnp.float32)
    run_var = jnp.abs(1.0 + 0.1 * jax.random.normal(k_v, (C2,), dtype=jnp.float32))

    ref = _reference(x, weight, gamma, beta, run_mean, run_var, stride=1)

    # 1) tile_h=8 -> grid (N=2, T=2); exercises the dynamic row-offset path (f32 out).
    out = conv_bn_silu(x, weight, gamma, beta, run_mean, run_var, stride=1, tile_h=8)
    out = jax.block_until_ready(out)
    assert out.shape == (N, C2, H, W), out.shape
    max_err = float(jnp.max(jnp.abs(out - ref)))
    # bf16 operands / f32 accumulation / approx reciprocal vs f32 HIGHEST reference.
    assert jnp.allclose(out, ref, atol=3e-2, rtol=3e-2), max_err

    # 2) default tile heuristic (full-height tile, grid (2,1)) with bf16 output stream.
    out_bf16 = conv_bn_silu(x, weight, gamma, beta, run_mean, run_var, stride=1,
                            out_dtype=jnp.bfloat16)
    out_bf16 = jax.block_until_ready(out_bf16)
    assert out_bf16.shape == (N, C2, H, W), out_bf16.shape
    assert jnp.allclose(out_bf16.astype(jnp.float32), ref, atol=6e-2, rtol=6e-2), (
        float(jnp.max(jnp.abs(out_bf16.astype(jnp.float32) - ref))))

    print("KERNEL_OK")
</pallas_src>

<mosaic_0001>
module attributes {stable_mosaic.version = 11 : i64} {
  func.func @kernel(%arg0: i32, %arg1: i32, %arg2: memref<1x18x18x4xbf16, #tpu.memory_space<vmem>>, %arg3: memref<9x4x128xbf16, #tpu.memory_space<vmem>>, %arg4: memref<1x128xf32, #tpu.memory_space<vmem>>, %arg5: memref<1x128xf32, #tpu.memory_space<vmem>>, %arg6: memref<1x128x128xf32, #tpu.memory_space<vmem>>, %arg7: memref<128x128xf32, #tpu.memory_space<vmem>>) attributes {dimension_semantics = [#tpu.dimension_semantics<parallel>, #tpu.dimension_semantics<parallel>], iteration_bounds = array<i64: 2, 2>, scalar_prefetch = 0 : i64, scratch_operands = 1 : i64, tpu.core_type = #tpu.core_type<tc>, window_params = [{transform_indices = @transform_0, window_bounds = array<i64: 1, 18, 18, 4>}, {pipeline_mode = #tpu.pipeline_mode<synchronous>, transform_indices = @transform_1, window_bounds = array<i64: 9, 4, 128>}, {pipeline_mode = #tpu.pipeline_mode<synchronous>, transform_indices = @transform_2, window_bounds = array<i64: 1, 128>}, {pipeline_mode = #tpu.pipeline_mode<synchronous>, transform_indices = @transform_3, window_bounds = array<i64: 1, 128>}, {transform_indices = @transform_4, window_bounds = array<i64: 1, 128, 128>}]} {
    %c8_i32 = arith.constant 8 : i32
    %0 = arith.muli %arg1, %c8_i32 : i32
    %1 = tpu.assume_multiple %0, 8 : i32
    %c0_i32 = arith.constant 0 : i32
    %2 = arith.addi %1, %c0_i32 : i32
    %c0 = arith.constant 0 : index
    %3 = arith.index_cast %2 : i32 to index
    %c0_0 = arith.constant 0 : index
    %c0_1 = arith.constant 0 : index
    %4 = vector.load %arg2[%c0, %3, %c0_0, %c0_1] : memref<1x18x18x4xbf16, #tpu.memory_space<vmem>>, vector<1x8x16x4xbf16>
    %5 = vector.shape_cast %4 : vector<1x8x16x4xbf16> to vector<8x16x4xbf16>
    %6 = vector.shape_cast %5 : vector<8x16x4xbf16> to vector<128x4xbf16>
    %c0_2 = arith.constant 0 : index
    %c0_3 = arith.constant 0 : index
    %c0_4 = arith.constant 0 : index
    %7 = vector.load %arg3[%c0_2, %c0_3, %c0_4] : memref<9x4x128xbf16, #tpu.memory_space<vmem>>, vector<1x4x128xbf16>
    %8 = vector.shape_cast %7 : vector<1x4x128xbf16> to vector<4x128xbf16>
    %cst = arith.constant dense<0.000000e+00> : vector<128x128xf32>
    %9 = tpu.matmul %6, %8, %cst {dimension_numbers = #tpu.dot_dimension_numbers<[1], [0], [0], [1], [0, 0, 1, 1], [], []>} : vector<128x4xbf16>, vector<4x128xbf16>, vector<128x128xf32> -> vector<128x128xf32>
    %c0_5 = arith.constant 0 : index
    %c0_6 = arith.constant 0 : index
    %10 = vector.load %arg7[%c0_5, %c0_6] : memref<128x128xf32, #tpu.memory_space<vmem>>, vector<128x128xf32>
    tpu.vector_store %arg7[%c0_5, %c0_6], %9 {strides = array<i32>} : memref<128x128xf32, #tpu.memory_space<vmem>>, vector<128x128xf32>,
    %c0_i32_7 = arith.constant 0 : i32
    %11 = arith.addi %1, %c0_i32_7 : i32
    %c0_8 = arith.constant 0 : index
    %12 = arith.index_cast %11 : i32 to index
    %c1 = arith.constant 1 : index
    %c0_9 = arith.constant 0 : index
    %13 = vector.load %arg2[%c0_8, %12, %c1, %c0_9] : memref<1x18x18x4xbf16, #tpu.memory_space<vmem>>, vector<1x8x16x4xbf16>
    %14 = vector.shape_cast %13 : vector<1x8x16x4xbf16> to vector<8x16x4xbf16>
    %15 = vector.shape_cast %14 : vector<8x16x4xbf16> to vector<128x4xbf16>
    %c1_10 = arith.constant 1 : index
    %c0_11 = arith.constant 0 : index
    %c0_12 = arith.constant 0 : index
    %16 = vector.load %arg3[%c1_10, %c0_11, %c0_12] : memref<9x4x128xbf16, #tpu.memory_space<vmem>>, vector<1x4x128xbf16>
    %17 = vector.shape_cast %16 : vector<1x4x128xbf16> to vector<4x128xbf16>
    %cst_13 = arith.constant dense<0.000000e+00> : vector<128x128xf32>
    %18 = tpu.matmul %15, %17, %cst_13 {dimension_numbers = #tpu.dot_dimension_numbers<[1], [0], [0], [1], [0, 0, 1, 1], [], []>} : vector<128x4xbf16>, vector<4x128xbf16>, vector<128x128xf32> -> vector<128x128xf32>
    %c0_14 = arith.constant 0 : index
    %c0_15 = arith.constant 0 : index
    %19 = vector.load %arg7[%c0_14, %c0_15] : memref<128x128xf32, #tpu.memory_space<vmem>>, vector<128x128xf32>
    %20 = arith.addf %19, %18 : vector<128x128xf32>
    %c0_16 = arith.constant 0 : index
    %c0_17 = arith.constant 0 : index
    %21 = vector.load %arg7[%c0_16, %c0_17] : memref<128x128xf32, #tpu.memory_space<vmem>>, vector<128x128xf32>
    tpu.vector_store %arg7[%c0_16, %c0_17], %20 {strides = array<i32>} : memref<128x128xf32, #tpu.memory_space<vmem>>, vector<128x128xf32>,
    %c0_i32_18 = arith.constant 0 : i32
    %22 = arith.addi %1, %c0_i32_18 : i32
    %c0_19 = arith.constant 0 : index
    %23 = arith.index_cast %22 : i32 to index
    %c2 = arith.constant 2 : index
    %c0_20 = arith.constant 0 : index
    %24 = vector.load %arg2[%c0_19, %23, %c2, %c0_20] : memref<1x18x18x4xbf16, #tpu.memory_space<vmem>>, vector<1x8x16x4xbf16>
    %25 = vector.shape_cast %24 : vector<1x8x16x4xbf16> to vector<8x16x4xbf16>
    %26 = vector.shape_cast %25 : vector<8x16x4xbf16> to vector<128x4xbf16>
    %c2_21 = arith.constant 2 : index
    %c0_22 = arith.constant 0 : index
    %c0_23 = arith.constant 0 : index
    %27 = vector.load %arg3[%c2_21, %c0_22, %c0_23] : memref<9x4x128xbf16, #tpu.memory_space<vmem>>, vector<1x4x128xbf16>
    %28 = vector.shape_cast %27 : vector<1x4x128xbf16> to vector<4x128xbf16>
    %cst_24 = arith.constant dense<0.000000e+00> : vector<128x128xf32>
    %29 = tpu.matmul %26, %28, %cst_24 {dimension_numbers = #tpu.dot_dimension_numbers<[1], [0], [0], [1], [0, 0, 1, 1], [], []>} : vector<128x4xbf16>, vector<4x128xbf16>, vector<128x128xf32> -> vector<128x128xf32>
    %c0_25 = arith.constant 0 : index
    %c0_26 = arith.constant 0 : index
    %30 = vector.load %arg7[%c0_25, %c0_26] : memref<128x128xf32, #tpu.memory_space<vmem>>, vector<128x128xf32>
    %31 = arith.addf %30, %29 : vector<128x128xf32>
    %c0_27 = arith.constant 0 : index
    %c0_28 = arith.constant 0 : index
    %32 = vector.load %arg7[%c0_27, %c0_28] : memref<128x128xf32, #tpu.memory_space<vmem>>, vector<128x128xf32>
    tpu.vector_store %arg7[%c0_27, %c0_28], %31 {strides = array<i32>} : memref<128x128xf32, #tpu.memory_space<vmem>>, vector<128x128xf32>,
    %c1_i32 = arith.constant 1 : i32
    %33 = arith.addi %1, %c1_i32 : i32
    %c0_29 = arith.constant 0 : index
    %34 = arith.index_cast %33 : i32 to index
    %c0_30 = arith.constant 0 : index
    %c0_31 = arith.constant 0 : index
    %35 = vector.load %arg2[%c0_29, %34, %c0_30, %c0_31] : memref<1x18x18x4xbf16, #tpu.memory_space<vmem>>, vector<1x8x16x4xbf16>
    %36 = vector.shape_cast %35 : vector<1x8x16x4xbf16> to vector<8x16x4xbf16>
    %37 = vector.shape_cast %36 : vector<8x16x4xbf16> to vector<128x4xbf16>
    %c3 = arith.constant 3 : index
    %c0_32 = arith.constant 0 : index
    %c0_33 = arith.constant 0 : index
    %38 = vector.load %arg3[%c3, %c0_32, %c0_33] : memref<9x4x128xbf16, #tpu.memory_space<vmem>>, vector<1x4x128xbf16>
    %39 = vector.shape_cast %38 : vector<1x4x128xbf16> to vector<4x128xbf16>
    %cst_34 = arith.constant dense<0.000000e+00> : vector<128x128xf32>
    %40 = tpu.matmul %37, %39, %cst_34 {dimension_numbers = #tpu.dot_dimension_numbers<[1], [0], [0], [1], [0, 0, 1, 1], [], []>} : vector<128x4xbf16>, vector<4x128xbf16>, vector<128x128xf32> -> vector<128x128xf32>
    %c0_35 = arith.constant 0 : index
    %c0_36 = arith.constant 0 : index
    %41 = vector.load %arg7[%c0_35, %c0_36] : memref<128x128xf32, #tpu.memory_space<vmem>>, vector<128x128xf32>
    %42 = arith.addf %41, %40 : vector<128x128xf32>
    %c0_37 = arith.constant 0 : index
    %c0_38 = arith.constant 0 : index
    %43 = vector.load %arg7[%c0_37, %c0_38] : memref<128x128xf32, #tpu.memory_space<vmem>>, vector<128x128xf32>
    tpu.vector_store %arg7[%c0_37, %c0_38], %42 {strides = array<i32>} : memref<128x128xf32, #tpu.memory_space<vmem>>, vector<128x128xf32>,
    %c1_i32_39 = arith.constant 1 : i32
    %44 = arith.addi %1, %c1_i32_39 : i32
    %c0_40 = arith.constant 0 : index
    %45 = arith.index_cast %44 : i32 to index
    %c1_41 = arith.constant 1 : index
    %c0_42 = arith.constant 0 : index
    %46 = vector.load %arg2[%c0_40, %45, %c1_41, %c0_42] : memref<1x18x18x4xbf16, #tpu.memory_space<vmem>>, vector<1x8x16x4xbf16>
    %47 = vector.shape_cast %46 : vector<1x8x16x4xbf16> to vector<8x16x4xbf16>
    %48 = vector.shape_cast %47 : vector<8x16x4xbf16> to vector<128x4xbf16>
    %c4 = arith.constant 4 : index
    %c0_43 = arith.constant 0 : index
    %c0_44 = arith.constant 0 : index
    %49 = vector.load %arg3[%c4, %c0_43, %c0_44] : memref<9x4x128xbf16, #tpu.memory_space<vmem>>, vector<1x4x128xbf16>
    %50 = vector.shape_cast %49 : vector<1x4x128xbf16> to vector<4x128xbf16>
    %cst_45 = arith.constant dense<0.000000e+00> : vector<128x128xf32>
    %51 = tpu.matmul %48, %50, %cst_45 {dimension_numbers = #tpu.dot_dimension_numbers<[1], [0], [0], [1], [0, 0, 1, 1], [], []>} : vector<128x4xbf16>, vector<4x128xbf16>, vector<128x128xf32> -> vector<128x128xf32>
    %c0_46 = arith.constant 0 : index
    %c0_47 = arith.constant 0 : index
    %52 = vector.load %arg7[%c0_46, %c0_47] : memref<128x128xf32, #tpu.memory_space<vmem>>, vector<128x128xf32>
    %53 = arith.addf %52, %51 : vector<128x128xf32>
    %c0_48 = arith.constant 0 : index
    %c0_49 = arith.constant 0 : index
    %54 = vector.load %arg7[%c0_48, %c0_49] : memref<128x128xf32, #tpu.memory_space<vmem>>, vector<128x128xf32>
    tpu.vector_store %arg7[%c0_48, %c0_49], %53 {strides = array<i32>} : memref<128x128xf32, #tpu.memory_space<vmem>>, vector<128x128xf32>,
    %c1_i32_50 = arith.constant 1 : i32
    %55 = arith.addi %1, %c1_i32_50 : i32
    %c0_51 = arith.constant 0 : index
    %56 = arith.index_cast %55 : i32 to index
    %c2_52 = arith.constant 2 : index
    %c0_53 = arith.constant 0 : index
    %57 = vector.load %arg2[%c0_51, %56, %c2_52, %c0_53] : memref<1x18x18x4xbf16, #tpu.memory_space<vmem>>, vector<1x8x16x4xbf16>
    %58 = vector.shape_cast %57 : vector<1x8x16x4xbf16> to vector<8x16x4xbf16>
    %59 = vector.shape_cast %58 : vector<8x16x4xbf16> to vector<128x4xbf16>
    %c5 = arith.constant 5 : index
    %c0_54 = arith.constant 0 : index
    %c0_55 = arith.constant 0 : index
    %60 = vector.load %arg3[%c5, %c0_54, %c0_55] : memref<9x4x128xbf16, #tpu.memory_space<vmem>>, vector<1x4x128xbf16>
    %61 = vector.shape_cast %60 : vector<1x4x128xbf16> to vector<4x128xbf16>
    %cst_56 = arith.constant dense<0.000000e+00> : vector<128x128xf32>
    %62 = tpu.matmul %59, %61, %cst_56 {dimension_numbers = #tpu.dot_dimension_numbers<[1], [0], [0], [1], [0, 0, 1, 1], [], []>} : vector<128x4xbf16>, vector<4x128xbf16>, vector<128x128xf32> -> vector<128x128xf32>
    %c0_57 = arith.constant 0 : index
    %c0_58 = arith.constant 0 : index
    %63 = vector.load %arg7[%c0_57, %c0_58] : memref<128x128xf32, #tpu.memory_space<vmem>>, vector<128x128xf32>
    %64 = arith.addf %63, %62 : vector<128x128xf32>
    %c0_59 = arith.constant 0 : index
    %c0_60 = arith.constant 0 : index
    %65 = vector.load %arg7[%c0_59, %c0_60] : memref<128x128xf32, #tpu.memory_space<vmem>>, vector<128x128xf32>
    tpu.vector_store %arg7[%c0_59, %c0_60], %64 {strides = array<i32>} : memref<128x128xf32, #tpu.memory_space<vmem>>, vector<128x128xf32>,
    %c2_i32 = arith.constant 2 : i32
    %66 = arith.addi %1, %c2_i32 : i32
    %c0_61 = arith.constant 0 : index
    %67 = arith.index_cast %66 : i32 to index
    %c0_62 = arith.constant 0 : index
    %c0_63 = arith.constant 0 : index
    %68 = vector.load %arg2[%c0_61, %67, %c0_62, %c0_63] : memref<1x18x18x4xbf16, #tpu.memory_space<vmem>>, vector<1x8x16x4xbf16>
    %69 = vector.shape_cast %68 : vector<1x8x16x4xbf16> to vector<8x16x4xbf16>
    %70 = vector.shape_cast %69 : vector<8x16x4xbf16> to vector<128x4xbf16>
    %c6 = arith.constant 6 : index
    %c0_64 = arith.constant 0 : index
    %c0_65 = arith.constant 0 : index
    %71 = vector.load %arg3[%c6, %c0_64, %c0_65] : memref<9x4x128xbf16, #tpu.memory_space<vmem>>, vector<1x4x128xbf16>
    %72 = vector.shape_cast %71 : vector<1x4x128xbf16> to vector<4x128xbf16>
    %cst_66 = arith.constant dense<0.000000e+00> : vector<128x128xf32>
    %73 = tpu.matmul %70, %72, %cst_66 {dimension_numbers = #tpu.dot_dimension_numbers<[1], [0], [0], [1], [0, 0, 1, 1], [], []>} : vector<128x4xbf16>, vector<4x128xbf16>, vector<128x128xf32> -> vector<128x128xf32>
    %c0_67 = arith.constant 0 : index
    %c0_68 = arith.constant 0 : index
    %74 = vector.load %arg7[%c0_67, %c0_68] : memref<128x128xf32, #tpu.memory_space<vmem>>, vector<128x128xf32>
    %75 = arith.addf %74, %73 : vector<128x128xf32>
    %c0_69 = arith.constant 0 : index
    %c0_70 = arith.constant 0 : index
    %76 = vector.load %arg7[%c0_69, %c0_70] : memref<128x128xf32, #tpu.memory_space<vmem>>, vector<128x128xf32>
    tpu.vector_store %arg7[%c0_69, %c0_70], %75 {strides = array<i32>} : memref<128x128xf32, #tpu.memory_space<vmem>>, vector<128x128xf32>,
    %c2_i32_71 = arith.constant 2 : i32
    %77 = arith.addi %1, %c2_i32_71 : i32
    %c0_72 = arith.constant 0 : index
    %78 = arith.index_cast %77 : i32 to index
    %c1_73 = arith.constant 1 : index
    %c0_74 = arith.constant 0 : index
    %79 = vector.load %arg2[%c0_72, %78, %c1_73, %c0_74] : memref<1x18x18x4xbf16, #tpu.memory_space<vmem>>, vector<1x8x16x4xbf16>
    %80 = vector.shape_cast %79 : vector<1x8x16x4xbf16> to vector<8x16x4xbf16>
    %81 = vector.shape_cast %80 : vector<8x16x4xbf16> to vector<128x4xbf16>
    %c7 = arith.constant 7 : index
    %c0_75 = arith.constant 0 : index
    %c0_76 = arith.constant 0 : index
    %82 = vector.load %arg3[%c7, %c0_75, %c0_76] : memref<9x4x128xbf16, #tpu.memory_space<vmem>>, vector<1x4x128xbf16>
    %83 = vector.shape_cast %82 : vector<1x4x128xbf16> to vector<4x128xbf16>
    %cst_77 = arith.constant dense<0.000000e+00> : vector<128x128xf32>
    %84 = tpu.matmul %81, %83, %cst_77 {dimension_numbers = #tpu.dot_dimension_numbers<[1], [0], [0], [1], [0, 0, 1, 1], [], []>} : vector<128x4xbf16>, vector<4x128xbf16>, vector<128x128xf32> -> vector<128x128xf32>
    %c0_78 = arith.constant 0 : index
    %c0_79 = arith.constant 0 : index
    %85 = vector.load %arg7[%c0_78, %c0_79] : memref<128x128xf32, #tpu.memory_space<vmem>>, vector<128x128xf32>
    %86 = arith.addf %85, %84 : vector<128x128xf32>
    %c0_80 = arith.constant 0 : index
    %c0_81 = arith.constant 0 : index
    %87 = vector.load %arg7[%c0_80, %c0_81] : memref<128x128xf32, #tpu.memory_space<vmem>>, vector<128x128xf32>
    tpu.vector_store %arg7[%c0_80, %c0_81], %86 {strides = array<i32>} : memref<128x128xf32, #tpu.memory_space<vmem>>, vector<128x128xf32>,
    %c2_i32_82 = arith.constant 2 : i32
    %88 = arith.addi %1, %c2_i32_82 : i32
    %c0_83 = arith.constant 0 : index
    %89 = arith.index_cast %88 : i32 to index
    %c2_84 = arith.constant 2 : index
    %c0_85 = arith.constant 0 : index
    %90 = vector.load %arg2[%c0_83, %89, %c2_84, %c0_85] : memref<1x18x18x4xbf16, #tpu.memory_space<vmem>>, vector<1x8x16x4xbf16>
    %91 = vector.shape_cast %90 : vector<1x8x16x4xbf16> to vector<8x16x4xbf16>
    %92 = vector.shape_cast %91 : vector<8x16x4xbf16> to vector<128x4xbf16>
    %c8 = arith.constant 8 : index
    %c0_86 = arith.constant 0 : index
    %c0_87 = arith.constant 0 : index
    %93 = vector.load %arg3[%c8, %c0_86, %c0_87] : memref<9x4x128xbf16, #tpu.memory_space<vmem>>, vector<1x4x128xbf16>
    %94 = vector.shape_cast %93 : vector<1x4x128xbf16> to vector<4x128xbf16>
    %cst_88 = arith.constant dense<0.000000e+00> : vector<128x128xf32>
    %95 = tpu.matmul %92, %94, %cst_88 {dimension_numbers = #tpu.dot_dimension_numbers<[1], [0], [0], [1], [0, 0, 1, 1], [], []>} : vector<128x4xbf16>, vector<4x128xbf16>, vector<128x128xf32> -> vector<128x128xf32>
    %c0_89 = arith.constant 0 : index
    %c0_90 = arith.constant 0 : index
    %96 = vector.load %arg7[%c0_89, %c0_90] : memref<128x128xf32, #tpu.memory_space<vmem>>, vector<128x128xf32>
    %97 = arith.addf %96, %95 : vector<128x128xf32>
    %c0_91 = arith.constant 0 : index
    %c0_92 = arith.constant 0 : index
    %98 = vector.load %arg7[%c0_91, %c0_92] : memref<128x128xf32, #tpu.memory_space<vmem>>, vector<128x128xf32>
    tpu.vector_store %arg7[%c0_91, %c0_92], %97 {strides = array<i32>} : memref<128x128xf32, #tpu.memory_space<vmem>>, vector<128x128xf32>,
    %c0_93 = arith.constant 0 : index
    %c0_94 = arith.constant 0 : index
    %99 = vector.load %arg7[%c0_93, %c0_94] : memref<128x128xf32, #tpu.memory_space<vmem>>, vector<128x128xf32>
    %c0_95 = arith.constant 0 : index
    %c0_96 = arith.constant 0 : index
    %100 = vector.load %arg4[%c0_95, %c0_96] : memref<1x128xf32, #tpu.memory_space<vmem>>, vector<1x128xf32>
    %101 = vector.broadcast %100 : vector<1x128xf32> to vector<128x128xf32>
    %102 = arith.mulf %99, %101 : vector<128x128xf32>
    %c0_97 = arith.constant 0 : index
    %c0_98 = arith.constant 0 : index
    %103 = vector.load %arg5[%c0_97, %c0_98] : memref<1x128xf32, #tpu.memory_space<vmem>>, vector<1x128xf32>
    %104 = vector.broadcast %103 : vector<1x128xf32> to vector<128x128xf32>
    %105 = arith.addf %102, %104 : vector<128x128xf32>
    %cst_99 = arith.constant 0.000000e+00 : f32
    %106 = vector.broadcast %cst_99 : f32 to vector<128x128xf32>
    %107 = arith.subf %106, %105 : vector<128x128xf32>
    %108 = math.exp %107 : vector<128x128xf32>
    %cst_100 = arith.constant 1.000000e+00 : f32
    %109 = vector.broadcast %cst_100 : f32 to vector<128x128xf32>
    %110 = arith.addf %109, %108 : vector<128x128xf32>
    %111 = tpu.reciprocal %110 {approx = true} : vector<128x128xf32> -> vector<128x128xf32>
    %112 = arith.mulf %105, %111 : vector<128x128xf32>
    %c0_101 = arith.constant 0 : index
    %c0_102 = arith.constant 0 : index
    %c0_103 = arith.constant 0 : index
    %113 = vector.load %arg6[%c0_101, %c0_102, %c0_103] : memref<1x128x128xf32, #tpu.memory_space<vmem>>, vector<1x128x128xf32>
    %114 = vector.shape_cast %113 : vector<1x128x128xf32> to vector<128x128xf32>
    %115 = vector.shape_cast %112 : vector<128x128xf32> to vector<1x128x128xf32>
    tpu.vector_store %arg6[%c0_101, %c0_102, %c0_103], %115 {strides = array<i32>} : memref<1x128x128xf32, #tpu.memory_space<vmem>>, vector<1x128x128xf32>,
    return
  }
  func.func @transform_0(%arg0: i32, %arg1: i32) -> (i32, i32, i32, i32) {
    %c0_i32 = arith.constant 0 : i32
    %c0_i32_0 = arith.constant 0 : i32
    %c0_i32_1 = arith.constant 0 : i32
    %c0_i32_2 = arith.constant 0 : i32
    return %arg0, %c0_i32, %c0_i32_0, %c0_i32_1 : i32, i32, i32, i32
  }
  func.func @transform_1(%arg0: i32, %arg1: i32) -> (i32, i32, i32) {
    %c0_i32 = arith.constant 0 : i32
    %c0_i32_0 = arith.constant 0 : i32
    %c0_i32_1 = arith.constant 0 : i32
    %c0_i32_2 = arith.constant 0 : i32
    return %c0_i32, %c0_i32_0, %c0_i32_1 : i32, i32, i32
  }
  func.func @transform_2(%arg0: i32, %arg1: i32) -> (i32, i32) {
    %c0_i32 = arith.constant 0 : i32
    %c0_i32_0 = arith.constant 0 : i32
    %c0_i32_1 = arith.constant 0 : i32
    return %c0_i32, %c0_i32_0 : i32, i32
  }
  func.func @transform_3(%arg0: i32, %arg1: i32) -> (i32, i32) {
    %c0_i32 = arith.constant 0 : i32
    %c0_i32_0 = arith.constant 0 : i32
    %c0_i32_1 = arith.constant 0 : i32
    return %c0_i32, %c0_i32_0 : i32, i32
  }
  func.func @transform_4(%arg0: i32, %arg1: i32) -> (i32, i32, i32) {
    %c0_i32 = arith.constant 0 : i32
    %c0_i32_0 = arith.constant 0 : i32
    return %arg0, %arg1, %c0_i32 : i32, i32, i32
  }
}

</mosaic_0001>

<llo_original>
// kernel: tpu_custom_call.1
$region0: #{tpu_custom_call.1}
  #allocation0 [shape = 'u32[]', space=smem, size = 0x4, offset = 0x4, fixed_abs, tag = 'smem constant byte address 0x4 - core index']
  #allocation1 [shape = 'u32[144,128]{1,0:T(1,128)}', space=vmem, size = 0x12000, scoped, tag = 'internal scratch']
  #allocation2 [shape = 'f32[128,128]{1,0:T(8,128)}', space=vmem, size = 0x10000, scoped, tag = 'scratch operand']
  %s0 = inlined_call_operand.vmem [shape: bf16[2,18,18,4], index: 0, kind: input, shape index: {}]
  %s1 = inlined_call_operand.vmem [shape: bf16[9,4,128], index: 1, kind: input, shape index: {}]
  %s2 = inlined_call_operand.vmem [shape: f32[1,128], index: 2, kind: input, shape index: {}]
  %s3 = inlined_call_operand.vmem [shape: f32[1,128], index: 3, kind: input, shape index: {}]
  %s4 = inlined_call_operand.hbm [shape: f32[2,256,128], index: 4, kind: output, shape index: {}]
  %s5 = sld [smem:[#allocation0]]
  $region49: #{tpu_custom_call.1} parent=0
    _
  %s7 = ssub.s32 1, %s5
  %s8 = scalar_select 0, %s7, %s5
  $region1: #{tpu_custom_call.1} parent=0
    #allocation3 [shape = 'u8[131072]{0}', space=vmem, size = 0x20000, scoped, tag = 'output window, operand 0']
    #allocation4 [shape = 's32[2]{0}', space=sflag, size = 0x8, scoped, tag = 'scoped memory for tpu_custom_call.1']
    %9 = vsyncpa [#allocation4], 0
    %s10 = scalar_lea.sflag [#allocation4], 1
    %11 = vsyncpa %s10, 0
    loop: start=0, step=1, limit=6
    $region2: #{tpu_custom_call.1} parent=1 // loop_pre_header
      _
    $region3: #{tpu_custom_call.1} parent=1 // loop_header
      %s13 = sphi 0, %s17
      %p14 = scmp.ge.s32.totalorder %s13, 6
      %s20 = sphi 0, %s32
      %s21 = sphi 0, %s28
      %s22 = sphi 0, %s20
      %s23 = sphi 0, %s21
      %s24 = sphi 0, %s22
      %s25 = sphi 0, %s23
      %s35 = sphi 0, %s37
      %s38 = sphi 0, %s35
      %s39 = sphi 0, %s38
      %s55 = sphi 0, %s39
      %s59 = sphi 0, %s59
      %s61 = sphi 0, %s59
      %s62 = sphi 0, %s61
      %s76 = sphi 0, %s62
      %s80 = sphi 0, %s80
      %s82 = sphi 0, %s80
      %s83 = sphi 0, %s82
      %s97 = sphi 0, %s83
      %s101 = sphi 0, %s101
      %s103 = sphi 0, %s101
      %s104 = sphi 0, %s103
      %s118 = sphi 0, %s104
      %s126 = sphi 0, %s128
      %s129 = sphi 0, %s126
      %s130 = sphi 0, %s129
      %s146 = sphi 0, %s130
    $region4: #{tpu_custom_call.1} parent=1 // loop_header_branch
      %16 = sbr.rel (%p14) target = $region8
    $region5: #{tpu_custom_call.1} parent=1 // loop_body
      %s18 = ssub.s32 %s13, 1
      %s19 = ssub.s32 %s13, 2
      %s26 = sadd.s32 1, %s21
      %p27 = scmp.ge.s32.totalorder %s26, 2
      %s28 = scalar_select %p27, 0, %s26
      %s29 = sadd.s32 1, %s20
      %s30 = scalar_select %p27, %s29, %s20
      %p31 = scmp.ge.s32.totalorder %s30, 2
      %s32 = scalar_select %p31, 0, %s30
      %s33 = ssub.s32 %s20, %s32
      %p34 = scmp.eq.s32.totalorder %s33, 0
      %s36 = sadd.s32 %s35, 1
      %s37 = scalar_select %p34, %s35, %s36
      %p40 = pneg %p34
      %p41 = scmp.eq.s32.totalorder %s13, 3
      %p42 = por %p40, %p41
      %p43 = scmp.ne.s32.totalorder %s35, %s38
      %p44 = scmp.eq.s32.totalorder %s13, 0
      %p45 = por %p43, %p44
      %p46 = scmp.ne.s32.totalorder %s35, %s38
      %p47 = scmp.eq.s32.totalorder %s18, 3
      %p48 = por %p46, %p47
      %p49 = scmp.ne.s32.totalorder %s38, %s39
      %p50 = scmp.eq.s32.totalorder %s18, 0
      %p51 = por %p49, %p50
      %p52 = scmp.ne.s32.totalorder %s38, %s39
      %p53 = scmp.eq.s32.totalorder %s19, 3
      %p54 = por %p52, %p53
      %p56 = scmp.ne.s32.totalorder %s39, %s55
      %p57 = scmp.eq.s32.totalorder %s19, 0
      %p58 = por %p56, %p57
      %s60 = sadd.s32 %s59, 1
      %p63 = scmp.eq.s32.totalorder %s13, 3
      %p64 = scmp.ne.s32.totalorder %s59, %s61
      %p65 = scmp.eq.s32.totalorder %s13, 0
      %p66 = por %p64, %p65
      %p67 = scmp.ne.s32.totalorder %s59, %s61
      %p68 = scmp.eq.s32.totalorder %s18, 3
      %p69 = por %p67, %p68
      %p70 = scmp.ne.s32.totalorder %s61, %s62
      %p71 = scmp.eq.s32.totalorder %s18, 0
      %p72 = por %p70, %p71
      %p73 = scmp.ne.s32.totalorder %s61, %s62
      %p74 = scmp.eq.s32.totalorder %s19, 3
      %p75 = por %p73, %p74
      %p77 = scmp.ne.s32.totalorder %s62, %s76
      %p78 = scmp.eq.s32.totalorder %s19, 0
      %p79 = por %p77, %p78
      %s81 = sadd.s32 %s80, 1
      %p84 = scmp.eq.s32.totalorder %s13, 3
      %p85 = scmp.ne.s32.totalorder %s80, %s82
      %p86 = scmp.eq.s32.totalorder %s13, 0
      %p87 = por %p85, %p86
      %p88 = scmp.ne.s32.totalorder %s80, %s82
      %p89 = scmp.eq.s32.totalorder %s18, 3
      %p90 = por %p88, %p89
      %p91 = scmp.ne.s32.totalorder %s82, %s83
      %p92 = scmp.eq.s32.totalorder %s18, 0
      %p93 = por %p91, %p92
      %p94 = scmp.ne.s32.totalorder %s82, %s83
      %p95 = scmp.eq.s32.totalorder %s19, 3
      %p96 = por %p94, %p95
      %p98 = scmp.ne.s32.totalorder %s83, %s97
      %p99 = scmp.eq.s32.totalorder %s19, 0
      %p100 = por %p98, %p99
      %s102 = sadd.s32 %s101, 1
      %p105 = scmp.eq.s32.totalorder %s13, 3
      %p106 = scmp.ne.s32.totalorder %s101, %s103
      %p107 = scmp.eq.s32.totalorder %s13, 0
      %p108 = por %p106, %p107
      %p109 = scmp.ne.s32.totalorder %s101, %s103
      %p110 = scmp.eq.s32.totalorder %s18, 3
      %p111 = por %p109, %p110
      %p112 = scmp.ne.s32.totalorder %s103, %s104
      %p113 = scmp.eq.s32.totalorder %s18, 0
      %p114 = por %p112, %p113
      %p115 = scmp.ne.s32.totalorder %s103, %s104
      %p116 = scmp.eq.s32.totalorder %s19, 3
      %p117 = por %p115, %p116
      %p119 = scmp.ne.s32.totalorder %s104, %s118
      %p120 = scmp.eq.s32.totalorder %s19, 0
      %p121 = por %p119, %p120
      %s122 = ssub.s32 %s20, %s32
      %s123 = ssub.s32 %s21, %s28
      %s124 = sor.u32 %s122, %s123
      %p125 = scmp.eq.s32.totalorder %s124, 0
      %s127 = sadd.s32 %s126, 1
      %s128 = scalar_select %p125, %s126, %s127
      %p131 = pneg %p125
      %p132 = scmp.eq.s32.totalorder %s13, 3
      %p133 = por %p131, %p132
      %p134 = scmp.ne.s32.totalorder %s126, %s129
      %p135 = scmp.eq.s32.totalorder %s13, 0
      %p136 = por %p134, %p135
      %p137 = scmp.ne.s32.totalorder %s126, %s129
      %p138 = scmp.eq.s32.totalorder %s18, 3
      %p139 = por %p137, %p138
      %p140 = scmp.ne.s32.totalorder %s129, %s130
      %p141 = scmp.eq.s32.totalorder %s18, 0
      %p142 = por %p140, %p141
      %p143 = scmp.ne.s32.totalorder %s129, %s130
      %p144 = scmp.eq.s32.totalorder %s19, 3
      %p145 = por %p143, %p144
      %p147 = scmp.ne.s32.totalorder %s130, %s146
      %p148 = scmp.eq.s32.totalorder %s19, 0
      %p149 = por %p147, %p148
      %p150 = scmp.le.s32.totalorder 1, %s13
      %p151 = scmp.lt.s32.totalorder %s13, 5
      %p152 = pnand %p150, %p151
      %p153 = pneg %p152
      // Predicated region
      $region9: #{tpu_custom_call.1} parent=5 // pred_check
        _
      $region10: #{tpu_custom_call.1} parent=5 // pred_check_branch
        %155 = sbr.rel (%p152) target = $region12
      $region11: #{tpu_custom_call.1} parent=5 // pred_region
        %s156 = ssub.s32 %s13, 1
        // Predicated region
        $region13: #{tpu_custom_call.1} parent=11 // pred_check
          %p157 = pneg %p72
        $region14: #{tpu_custom_call.1} parent=11 // pred_check_branch
          %159 = sbr.rel (%p157) target = $region16
        $region15: #{tpu_custom_call.1} parent=11 // pred_region
          _
        $region16: #{tpu_custom_call.1} parent=11 // pred_fallthru
          _
        // Predicated region
        $region17: #{tpu_custom_call.1} parent=11 // pred_check
          %p160 = pneg %p93
        $region18: #{tpu_custom_call.1} parent=11 // pred_check_branch
          %162 = sbr.rel (%p160) target = $region20
        $region19: #{tpu_custom_call.1} parent=11 // pred_region
          _
        $region20: #{tpu_custom_call.1} parent=11 // pred_fallthru
          _
        // Predicated region
        $region21: #{tpu_custom_call.1} parent=11 // pred_check
          %p163 = pneg %p114
        $region22: #{tpu_custom_call.1} parent=11 // pred_check_branch
          %165 = sbr.rel (%p163) target = $region24
        $region23: #{tpu_custom_call.1} parent=11 // pred_region
          _
        $region24: #{tpu_custom_call.1} parent=11 // pred_fallthru
          _
      $region12: #{tpu_custom_call.1} parent=5 // pred_fallthru
        _
      %p166 = scmp.lt.s32.totalorder %s13, 4
      // Predicated region
      $region25: #{tpu_custom_call.1} parent=5 // pred_check
        %p167 = pneg %p166
      $region26: #{tpu_custom_call.1} parent=5 // pred_check_branch
        %169 = sbr.rel (%p167) target = $region28
      $region27: #{tpu_custom_call.1} parent=5 // pred_region
        // Predicated region
        $region29: #{tpu_custom_call.1} parent=27 // pred_check
          %p170 = pneg %p45
        $region30: #{tpu_custom_call.1} parent=27 // pred_check_branch
          %172 = sbr.rel (%p170) target = $region32
        $region31: #{tpu_custom_call.1} parent=27 // pred_region
          %p173 = scmp.lt.s32.totalorder %s20, 1
          %s174 = scalar_select %p173, %s20, 1
          %s175 = smul.addr %s174, 54
          %s176 = smul.addr %s175, 4
          %s177 = scalar_lea.vmem %s0, %s176
        $region32: #{tpu_custom_call.1} parent=27 // pred_fallthru
          _
      $region28: #{tpu_custom_call.1} parent=5 // pred_fallthru
        _
      %p178 = scmp.le.s32.totalorder 1, %s13
      %p179 = scmp.lt.s32.totalorder %s13, 5
      %p180 = pnand %p178, %p179
      %p181 = pneg %p180
      // Predicated region
      $region33: #{tpu_custom_call.1} parent=5 // pred_check
        _
      $region34: #{tpu_custom_call.1} parent=5 // pred_check_branch
        %183 = sbr.rel (%p180) target = $region36
      $region35: #{tpu_custom_call.1} parent=5 // pred_region
        %s184 = ssub.s32 %s13, 1
        %p185 = scmp.lt.s32.totalorder %s22, 1
        %s186 = scalar_select %p185, %s22, 1
        %s187 = smul.addr %s186, 54
        %s188 = smul.addr %s187, 4
        %s189 = scalar_lea.vmem %s0, %s188
        %p190 = pneg %p51
        %p191 = pneg %p48
        %p192 = pneg %p72
        %p193 = pneg %p69
        %p194 = pneg %p93
        %p195 = pneg %p90
        %p196 = pneg %p114
        %p197 = pneg %p111
        %p198 = pneg %p142
        %p199 = pneg %p139
        %s200 = sand.u32 %s129, 1
        %s201 = scalar_lea.sflag [#allocation4], %s200
        %s202 = sand.u32 %s129, 1
        %s203 = smul.addr %s202, 128
        %s204 = scalar_lea.vmem [#allocation3], %s203
        %p205 = scmp.lt.s32.totalorder %s22, 1
        %s206 = scalar_select %p205, %s22, 1
        %s207 = smul.addr %s206, 54
        %s208 = smul.addr %s207, 4
        %s209 = scalar_lea.vmem %s0, %s208
        %s210 = smul.u32 16, %s23
        %s212 = smul.u32 %s23, 8
        %s213 = smul.u32 %s212, 3
        %s214 = smul.addr %s213, 4
        %s215 = scalar_lea.vmem %s209, %s214
        %v216 = vld [vmem:[%s215] sm:$0xf]
        %v217 = vld [vmem:[%s215 + $0x4] sm:$0xf]
        %v218 = vld [vmem:[%s215 + $0xc] sm:$0xf]
        %v219 = vld [vmem:[%s215 + $0x10] sm:$0xf]
        %v220 = vld [vmem:[%s215 + $0x18] sm:$0xf]
        %v221 = vld [vmem:[%s215 + $0x1c] sm:$0xf]
        %v222 = vld [vmem:[%s215 + $0x24] sm:$0xf]
        %v223 = vld [vmem:[%s215 + $0x28] sm:$0xf]
        %v224 = vld [vmem:[%s215 + $0x30] sm:$0xf]
        %v225 = vld [vmem:[%s215 + $0x34] sm:$0xf]
        %v226 = vld [vmem:[%s215 + $0x3c] sm:$0xf]
        %v227 = vld [vmem:[%s215 + $0x40] sm:$0xf]
        %v228 = vld [vmem:[%s215 + $0x48] sm:$0xf]
        %v229 = vld [vmem:[%s215 + $0x4c] sm:$0xf]
        %v230 = vld [vmem:[%s215 + $0x54] sm:$0xf]
        %v231 = vld [vmem:[%s215 + $0x58] sm:$0xf]
        %v232 = vld [vmem:[%s1] sm:$0x3]
        %v249 = vunpack.c.l.b16 %v216
        %v250 = vunpack.c.l.b16 %v217
        %v251 = vunpack.c.l.b16 %v218
        %v252 = vunpack.c.l.b16 %v219
        %v253 = vunpack.c.l.b16 %v220
        %v254 = vunpack.c.l.b16 %v221
        %v255 = vunpack.c.l.b16 %v222
        %v256 = vunpack.c.l.b16 %v223
        %v257 = vunpack.c.l.b16 %v224
        %v258 = vunpack.c.l.b16 %v225
        %v259 = vunpack.c.l.b16 %v226
        %v260 = vunpack.c.l.b16 %v227
        %v261 = vunpack.c.l.b16 %v228
        %v262 = vunpack.c.l.b16 %v229
        %v263 = vunpack.c.l.b16 %v230
        %v264 = vunpack.c.l.b16 %v231
        %v265 = vpack.c.b16 %v250, %v249
        %v266 = vpack.c.b16 %v252, %v251
        %v267 = vpack.c.b16 %v254, %v253
        %v268 = vpack.c.b16 %v256, %v255
        %v269 = vpack.c.b16 %v258, %v257
        %v270 = vpack.c.b16 %v260, %v259
        %v271 = vpack.c.b16 %v262, %v261
        %v272 = vpack.c.b16 %v264, %v263
        %vm273 = vcmask 31744
        %v275 = vsel %vm273, %v265, 0
        %v278 = vsel %vm273, %v266, 0
        %v281 = vsel %vm273, %v267, 0
        %v284 = vsel %vm273, %v268, 0
        %v287 = vsel %vm273, %v269, 0
        %v290 = vsel %vm273, %v270, 0
        %v293 = vsel %vm273, %v271, 0
        %v296 = vsel %vm273, %v272, 0
        %vm298 = vcmask 1041408
        %v300 = vsel %vm298, %v232, 0
        %302 = vmatprep.subr.bf16.mxu0 0
        %303 = vmatpush1.bf16.msra.mxu0 0
        %304 = vmatprep.subr.bf16.mxu0 0
        %305 = vmatpush1.bf16.msra.mxu0 0
        %306 = vmatprep.subr.bf16.mxu0 0
        %307 = vmatpush1.bf16.msra.mxu0 0
        %308 = vmatprep.subr.bf16.mxu0 0
        %309 = vmatpush1.bf16.msra.mxu0 0
        %310 = vmatprep.subr.bf16.mxu0 0
        %311 = vmatpush1.bf16.msra.mxu0 0
        %312 = vmatprep.subr.bf16.mxu0 0
        %313 = vmatpush1.bf16.msra.mxu0 0
        %314 = vmatprep.subr.bf16.mxu0 0
        %315 = vmatpush1.bf16.msra.mxu0 0
        %316 = vmatprep.subr.bf16.mxu0 0
        %317 = vmatpush1.bf16.msra.mxu0 %v300
        %318 = vmatprep.subr.bf16.mxu0 0
        %319 = vmatpush2.bf16.msra.mxu0 0
        %320 = vmatprep.subr.bf16.mxu0 0
        %321 = vmatpush2.bf16.msra.mxu0 0
        %322 = vmatprep.subr.bf16.mxu0 0
        %323 = vmatpush2.bf16.msra.mxu0 0
        %324 = vmatprep.subr.bf16.mxu0 0
        %325 = vmatpush2.bf16.msra.mxu0 0
        %326 = vmatprep.subr.bf16.mxu0 0
        %327 = vmatpush2.bf16.msra.mxu0 0
        %328 = vmatprep.subr.bf16.mxu0 0
        %329 = vmatpush2.bf16.msra.mxu0 0
        %330 = vmatprep.subr.bf16.mxu0 0
        %331 = vmatpush2.bf16.msra.mxu0 0
        %332 = vmatprep.subr.bf16.mxu0 0
        %333 = vmatpush2.bf16.msra.mxu0 0
        %334 = vmatprep.mubr.bf16.mxu0 0
        %335 = vmatmul.mubr.bf16.gmra.mxu0 %v275
        %v336 = vpop.f32.mrf.mxu0
        %v337 = vadd.f32 0.0, %v336
        %v338 = vpop.f32.mrf.mxu0
        %v339 = vpop.f32.mrf.mxu0
        %v340 = vadd.f32 0.0, %v339
        %v341 = vpop.f32.mrf.mxu0
        %342 = vmatprep.mubr.bf16.mxu0 0
        %343 = vmatmul.mubr.bf16.gmra.mxu0 %v278
        %v344 = vpop.f32.mrf.mxu0
        %v345 = vadd.f32 0.0, %v344
        %v346 = vpop.f32.mrf.mxu0
        %v347 = vpop.f32.mrf.mxu0
        %v348 = vadd.f32 0.0, %v347
        %v349 = vpop.f32.mrf.mxu0
        %350 = vmatprep.mubr.bf16.mxu0 0
        %351 = vmatmul.mubr.bf16.gmra.mxu0 %v281
        %v352 = vpop.f32.mrf.mxu0
        %v353 = vadd.f32 0.0, %v352
        %v354 = vpop.f32.mrf.mxu0
        %v355 = vpop.f32.mrf.mxu0
        %v356 = vadd.f32 0.0, %v355
        %v357 = vpop.f32.mrf.mxu0
        %358 = vmatprep.mubr.bf16.mxu0 0
        %359 = vmatmul.mubr.bf16.gmra.mxu0 %v284
        %v360 = vpop.f32.mrf.mxu0
        %v361 = vadd.f32 0.0, %v360
        %v362 = vpop.f32.mrf.mxu0
        %v363 = vpop.f32.mrf.mxu0
        %v364 = vadd.f32 0.0, %v363
        %v365 = vpop.f32.mrf.mxu0
        %366 = vmatprep.mubr.bf16.mxu0 0
        %367 = vmatmul.mubr.bf16.gmra.mxu0 %v287
        %v368 = vpop.f32.mrf.mxu0
        %v369 = vadd.f32 0.0, %v368
        %v370 = vpop.f32.mrf.mxu0
        %v371 = vpop.f32.mrf.mxu0
        %v372 = vadd.f32 0.0, %v371
        %v373 = vpop.f32.mrf.mxu0
        %374 = vmatprep.mubr.bf16.mxu0 0
        %375 = vmatmul.mubr.bf16.gmra.mxu0 %v290
        %v376 = vpop.f32.mrf.mxu0
        %v377 = vadd.f32 0.0, %v376
        %v378 = vpop.f32.mrf.mxu0
        %v379 = vpop.f32.mrf.mxu0
        %v380 = vadd.f32 0.0, %v379
        %v381 = vpop.f32.mrf.mxu0
        %382 = vmatprep.mubr.bf16.mxu0 0
        %383 = vmatmul.mubr.bf16.gmra.mxu0 %v293
        %v384 = vpop.f32.mrf.mxu0
        %v385 = vadd.f32 0.0, %v384
        %v386 = vpop.f32.mrf.mxu0
        %v387 = vpop.f32.mrf.mxu0
        %v388 = vadd.f32 0.0, %v387
        %v389 = vpop.f32.mrf.mxu0
        %390 = vmatprep.mubr.bf16.mxu0 0
        %391 = vmatmul.mubr.bf16.gmra.mxu0 %v296
        %v392 = vpop.f32.mrf.mxu0
        %v393 = vadd.f32 0.0, %v392
        %v394 = vpop.f32.mrf.mxu0
        %v395 = vpop.f32.mrf.mxu0
        %v396 = vadd.f32 0.0, %v395
        %v397 = vpop.f32.mrf.mxu0
        %398 = vdwg.mxu0
        %399 = vst [vmem:[#allocation2] sm:$0xff] %v337
        %400 = vst [vmem:[#allocation2 + $0x8] sm:$0xff] %v340
        %401 = vst [vmem:[#allocation2 + $0x10] sm:$0xff] %v345
        %402 = vst [vmem:[#allocation2 + $0x18] sm:$0xff] %v348
        %403 = vst [vmem:[#allocation2 + $0x20] sm:$0xff] %v353
        %404 = vst [vmem:[#allocation2 + $0x28] sm:$0xff] %v356
        %405 = vst [vmem:[#allocation2 + $0x30] sm:$0xff] %v361
        %406 = vst [vmem:[#allocation2 + $0x38] sm:$0xff] %v364
        %407 = vst [vmem:[#allocation2 + $0x40] sm:$0xff] %v369
        %408 = vst [vmem:[#allocation2 + $0x48] sm:$0xff] %v372
        %409 = vst [vmem:[#allocation2 + $0x50] sm:$0xff] %v377
        %410 = vst [vmem:[#allocation2 + $0x58] sm:$0xff] %v380
        %411 = vst [vmem:[#allocation2 + $0x60] sm:$0xff] %v385
        %412 = vst [vmem:[#allocation2 + $0x68] sm:$0xff] %v388
        %413 = vst [vmem:[#allocation2 + $0x70] sm:$0xff] %v393
        %414 = vst [vmem:[#allocation2 + $0x78] sm:$0xff] %v396
        %v415 = vld [vmem:[%s215] sm:$0xf]
        %v416 = vld [vmem:[%s215 + $0x4] sm:$0xf]
        %v417 = vld [vmem:[%s215 + $0x8] sm:$0x1]
        %v418 = vld [vmem:[%s215 + $0xc] sm:$0xf]
        %v419 = vld [vmem:[%s215 + $0x10] sm:$0xf]
        %v420 = vld [vmem:[%s215 + $0x14] sm:$0x1]
        %v421 = vld [vmem:[%s215 + $0x18] sm:$0xf]
        %v422 = vld [vmem:[%s215 + $0x1c] sm:$0xf]
        %v423 = vld [vmem:[%s215 + $0x20] sm:$0x1]
        %v424 = vld [vmem:[%s215 + $0x24] sm:$0xf]
        %v425 = vld [vmem:[%s215 + $0x28] sm:$0xf]
        %v426 = vld [vmem:[%s215 + $0x2c] sm:$0x1]
        %v427 = vld [vmem:[%s215 + $0x30] sm:$0xf]
        %v428 = vld [vmem:[%s215 + $0x34] sm:$0xf]
        %v429 = vld [vmem:[%s215 + $0x38] sm:$0x1]
        %v430 = vld [vmem:[%s215 + $0x3c] sm:$0xf]
        %v431 = vld [vmem:[%s215 + $0x40] sm:$0xf]
        %v432 = vld [vmem:[%s215 + $0x44] sm:$0x1]
        %v433 = vld [vmem:[%s215 + $0x48] sm:$0xf]
        %v434 = vld [vmem:[%s215 + $0x4c] sm:$0xf]
        %v435 = vld [vmem:[%s215 + $0x50] sm:$0x1]
        %v436 = vld [vmem:[%s215 + $0x54] sm:$0xf]
        %v437 = vld [vmem:[%s215 + $0x58] sm:$0xf]
        %v438 = vld [vmem:[%s215 + $0x5c] sm:$0x1]
        %vm439 = vsmask.f32 3328
        %vm440 = vsmask.f32 7440
        %vm441 = vmor %vm439, %vm440
        %v443 = vshrl.u32 %v415, 16
        %v445 = vrot.slane %v443, 4
        %v446 = vshll.u32 %v415, 16
        %v448 = vrot.slane %v446, 5
        %v449 = vor.u32 %v445, %v448
        %v450 = vrot.slane %v449, 4
        %v452 = vshll.u32 %v416, 16
        %v454 = vrot.slane %v452, 5
        %v455 = vsel %vm441, %v450, %v454
        %v456 = vshrl.u32 %v416, 16
        %v458 = vrot.slane %v456, 4
        %v459 = vor.u32 %v458, %v454
        %v460 = vrot.slane %v459, 4
        %v462 = vshll.u32 %v417, 16
        %v464 = vrot.slane %v462, 5
        %v465 = vsel %vm441, %v460, %v464
        %v467 = vshrl.u32 %v418, 16
        %v469 = vrot.slane %v467, 4
        %v470 = vshll.u32 %v418, 16
        %v472 = vrot.slane %v470, 5
        %v473 = vor.u32 %v469, %v472
        %v474 = vrot.slane %v473, 4
        %v476 = vshll.u32 %v419, 16
        %v478 = vrot.slane %v476, 5
        %v479 = vsel %vm441, %v474, %v478
        %v480 = vshrl.u32 %v419, 16
        %v482 = vrot.slane %v480, 4
        %v483 = vor.u32 %v482, %v478
        %v484 = vrot.slane %v483, 4
        %v486 = vshll.u32 %v420, 16
        %v488 = vrot.slane %v486, 5
        %v489 = vsel %vm441, %v484, %v488
        %v491 = vshrl.u32 %v421, 16
        %v493 = vrot.slane %v491, 4
        %v494 = vshll.u32 %v421, 16
        %v496 = vrot.slane %v494, 5
        %v497 = vor.u32 %v493, %v496
        %v498 = vrot.slane %v497, 4
        %v500 = vshll.u32 %v422, 16
        %v502 = vrot.slane %v500, 5
        %v503 = vsel %vm441, %v498, %v502
        %v504 = vshrl.u32 %v422, 16
        %v506 = vrot.slane %v504, 4
        %v507 = vor.u32 %v506, %v502
        %v508 = vrot.slane %v507, 4
        %v510 = vshll.u32 %v423, 16
        %v512 = vrot.slane %v510, 5
        %v513 = vsel %vm441, %v508, %v512
        %v515 = vshrl.u32 %v424, 16
        %v517 = vrot.slane %v515, 4
        %v518 = vshll.u32 %v424, 16
        %v520 = vrot.slane %v518, 5
        %v521 = vor.u32 %v517, %v520
        %v522 = vrot.slane %v521, 4
        %v524 = vshll.u32 %v425, 16
        %v526 = vrot.slane %v524, 5
        %v527 = vsel %vm441, %v522, %v526
        %v528 = vshrl.u32 %v425, 16
        %v530 = vrot.slane %v528, 4
        %v531 = vor.u32 %v530, %v526
        %v532 = vrot.slane %v531, 4
        %v534 = vshll.u32 %v426, 16
        %v536 = vrot.slane %v534, 5
        %v537 = vsel %vm441, %v532, %v536
        %v539 = vshrl.u32 %v427, 16
        %v541 = vrot.slane %v539, 4
        %v542 = vshll.u32 %v427, 16
        %v544 = vrot.slane %v542, 5
        %v545 = vor.u32 %v541, %v544
        %v546 = vrot.slane %v545, 4
        %v548 = vshll.u32 %v428, 16
        %v550 = vrot.slane %v548, 5
        %v551 = vsel %vm441, %v546, %v550
        %v552 = vshrl.u32 %v428, 16
        %v554 = vrot.slane %v552, 4
        %v555 = vor.u32 %v554, %v550
        %v556 = vrot.slane %v555, 4
        %v558 = vshll.u32 %v429, 16
        %v560 = vrot.slane %v558, 5
        %v561 = vsel %vm441, %v556, %v560
        %v563 = vshrl.u32 %v430, 16
        %v565 = vrot.slane %v563, 4
        %v566 = vshll.u32 %v430, 16
        %v568 = vrot.slane %v566, 5
        %v569 = vor.u32 %v565, %v568
        %v570 = vrot.slane %v569, 4
        %v572 = vshll.u32 %v431, 16
        %v574 = vrot.slane %v572, 5
        %v575 = vsel %vm441, %v570, %v574
        %v576 = vshrl.u32 %v431, 16
        %v578 = vrot.slane %v576, 4
        %v579 = vor.u32 %v578, %v574
        %v580 = vrot.slane %v579, 4
        %v582 = vshll.u32 %v432, 16
        %v584 = vrot.slane %v582, 5
        %v585 = vsel %vm441, %v580, %v584
        %v587 = vshrl.u32 %v433, 16
        %v589 = vrot.slane %v587, 4
        %v590 = vshll.u32 %v433, 16
        %v592 = vrot.slane %v590, 5
        %v593 = vor.u32 %v589, %v592
        %v594 = vrot.slane %v593, 4
        %v596 = vshll.u32 %v434, 16
        %v598 = vrot.slane %v596, 5
        %v599 = vsel %vm441, %v594, %v598
        %v600 = vshrl.u32 %v434, 16
        %v602 = vrot.slane %v600, 4
        %v603 = vor.u32 %v602, %v598
        %v604 = vrot.slane %v603, 4
        %v606 = vshll.u32 %v435, 16
        %v608 = vrot.slane %v606, 5
        %v609 = vsel %vm441, %v604, %v608
        %v611 = vshrl.u32 %v436, 16
        %v613 = vrot.slane %v611, 4
        %v614 = vshll.u32 %v436, 16
        %v616 = vrot.slane %v614, 5
        %v617 = vor.u32 %v613, %v616
        %v618 = vrot.slane %v617, 4
        %v620 = vshll.u32 %v437, 16
        %v622 = vrot.slane %v620, 5
        %v623 = vsel %vm441, %v618, %v622
        %v624 = vshrl.u32 %v437, 16
        %v626 = vrot.slane %v624, 4
        %v627 = vor.u32 %v626, %v622
        %v628 = vrot.slane %v627, 4
        %v630 = vshll.u32 %v438, 16
        %v632 = vrot.slane %v630, 5
        %v633 = vsel %vm441, %v628, %v632
        %s634 = scalar_lea.vmem %s1, 2
        %v635 = vld [vmem:[%s634] sm:$0x3]
        %v636 = vunpack.c.l.b16 %v455
        %v637 = vunpack.c.l.b16 %v465
        %v638 = vunpack.c.l.b16 %v479
        %v639 = vunpack.c.l.b16 %v489
        %v640 = vunpack.c.l.b16 %v503
        %v641 = vunpack.c.l.b16 %v513
        %v642 = vunpack.c.l.b16 %v527
        %v643 = vunpack.c.l.b16 %v537
        %v644 = vunpack.c.l.b16 %v551
        %v645 = vunpack.c.l.b16 %v561
        %v646 = vunpack.c.l.b16 %v575
        %v647 = vunpack.c.l.b16 %v585
        %v648 = vunpack.c.l.b16 %v599
        %v649 = vunpack.c.l.b16 %v609
        %v650 = vunpack.c.l.b16 %v623
        %v651 = vunpack.c.l.b16 %v633
        %v652 = vpack.c.b16 %v637, %v636
        %v653 = vpack.c.b16 %v639, %v638
        %v654 = vpack.c.b16 %v641, %v640
        %v655 = vpack.c.b16 %v643, %v642
        %v656 = vpack.c.b16 %v645, %v644
        %v657 = vpack.c.b16 %v647, %v646
        %v658 = vpack.c.b16 %v649, %v648
        %v659 = vpack.c.b16 %v651, %v650
        %v661 = vsel %vm273, %v652, 0
        %v664 = vsel %vm273, %v653, 0
        %v667 = vsel %vm273, %v654, 0
        %v670 = vsel %vm273, %v655, 0
        %v673 = vsel %vm273, %v656, 0
        %v676 = vsel %vm273, %v657, 0
        %v679 = vsel %vm273, %v658, 0
        %v682 = vsel %vm273, %v659, 0
        %v685 = vsel %vm298, %v635, 0
        %687 = vmatprep.subr.bf16.mxu0 0
        %688 = vmatpush1.bf16.msra.mxu0 0
        %689 = vmatprep.subr.bf16.mxu0 0
        %690 = vmatpush1.bf16.msra.mxu0 0
        %691 = vmatprep.subr.bf16.mxu0 0
        %692 = vmatpush1.bf16.msra.mxu0 0
        %693 = vmatprep.subr.bf16.mxu0 0
        %694 = vmatpush1.bf16.msra.mxu0 0
        %695 = vmatprep.subr.bf16.mxu0 0
        %696 = vmatpush1.bf16.msra.mxu0 0
        %697 = vmatprep.subr.bf16.mxu0 0
        %698 = vmatpush1.bf16.msra.mxu0 0
        %699 = vmatprep.subr.bf16.mxu0 0
        %700 = vmatpush1.bf16.msra.mxu0 0
        %701 = vmatprep.subr.bf16.mxu0 0
        %702 = vmatpush1.bf16.msra.mxu0 %v685
        %703 = vmatprep.subr.bf16.mxu0 0
        %704 = vmatpush2.bf16.msra.mxu0 0
        %705 = vmatprep.subr.bf16.mxu0 0
        %706 = vmatpush2.bf16.msra.mxu0 0
        %707 = vmatprep.subr.bf16.mxu0 0
        %708 = vmatpush2.bf16.msra.mxu0 0
        %709 = vmatprep.subr.bf16.mxu0 0
        %710 = vmatpush2.bf16.msra.mxu0 0
        %711 = vmatprep.subr.bf16.mxu0 0
        %712 = vmatpush2.bf16.msra.mxu0 0
        %713 = vmatprep.subr.bf16.mxu0 0
        %714 = vmatpush2.bf16.msra.mxu0 0
        %715 = vmatprep.subr.bf16.mxu0 0
        %716 = vmatpush2.bf16.msra.mxu0 0
        %717 = vmatprep.subr.bf16.mxu0 0
        %718 = vmatpush2.bf16.msra.mxu0 0
        %719 = vmatprep.mubr.bf16.mxu0 0
        %720 = vmatmul.mubr.bf16.gmra.mxu0 %v661
        %v721 = vpop.f32.mrf.mxu0
        %v722 = vadd.f32 0.0, %v721
        %v723 = vpop.f32.mrf.mxu0
        %v724 = vpop.f32.mrf.mxu0
        %v725 = vadd.f32 0.0, %v724
        %v726 = vpop.f32.mrf.mxu0
        %727 = vmatprep.mubr.bf16.mxu0 0
        %728 = vmatmul.mubr.bf16.gmra.mxu0 %v664
        %v729 = vpop.f32.mrf.mxu0
        %v730 = vadd.f32 0.0, %v729
        %v731 = vpop.f32.mrf.mxu0
        %v732 = vpop.f32.mrf.mxu0
        %v733 = vadd.f32 0.0, %v732
        %v734 = vpop.f32.mrf.mxu0
        %735 = vmatprep.mubr.bf16.mxu0 0
        %736 = vmatmul.mubr.bf16.gmra.mxu0 %v667
        %v737 = vpop.f32.mrf.mxu0
        %v738 = vadd.f32 0.0, %v737
        %v739 = vpop.f32.mrf.mxu0
        %v740 = vpop.f32.mrf.mxu0
        %v741 = vadd.f32 0.0, %v740
        %v742 = vpop.f32.mrf.mxu0
        %743 = vmatprep.mubr.bf16.mxu0 0
        %744 = vmatmul.mubr.bf16.gmra.mxu0 %v670
        %v745 = vpop.f32.mrf.mxu0
        %v746 = vadd.f32 0.0, %v745
        %v747 = vpop.f32.mrf.mxu0
        %v748 = vpop.f32.mrf.mxu0
        %v749 = vadd.f32 0.0, %v748
        %v750 = vpop.f32.mrf.mxu0
        %751 = vmatprep.mubr.bf16.mxu0 0
        %752 = vmatmul.mubr.bf16.gmra.mxu0 %v673
        %v753 = vpop.f32.mrf.mxu0
        %v754 = vadd.f32 0.0, %v753
        %v755 = vpop.f32.mrf.mxu0
        %v756 = vpop.f32.mrf.mxu0
        %v757 = vadd.f32 0.0, %v756
        %v758 = vpop.f32.mrf.mxu0
        %759 = vmatprep.mubr.bf16.mxu0 0
        %760 = vmatmul.mubr.bf16.gmra.mxu0 %v676
        %v761 = vpop.f32.mrf.mxu0
        %v762 = vadd.f32 0.0, %v761
        %v763 = vpop.f32.mrf.mxu0
        %v764 = vpop.f32.mrf.mxu0
        %v765 = vadd.f32 0.0, %v764
        %v766 = vpop.f32.mrf.mxu0
        %767 = vmatprep.mubr.bf16.mxu0 0
        %768 = vmatmul.mubr.bf16.gmra.mxu0 %v679
        %v769 = vpop.f32.mrf.mxu0
        %v770 = vadd.f32 0.0, %v769
        %v771 = vpop.f32.mrf.mxu0
        %v772 = vpop.f32.mrf.mxu0
        %v773 = vadd.f32 0.0, %v772
        %v774 = vpop.f32.mrf.mxu0
        %775 = vmatprep.mubr.bf16.mxu0 0
        %776 = vmatmul.mubr.bf16.gmra.mxu0 %v682
        %v777 = vpop.f32.mrf.mxu0
        %v778 = vadd.f32 0.0, %v777
        %v779 = vpop.f32.mrf.mxu0
        %v780 = vpop.f32.mrf.mxu0
        %v781 = vadd.f32 0.0, %v780
        %v782 = vpop.f32.mrf.mxu0
        %783 = vdwg.mxu0
        %v784 = vld [vmem:[#allocation2] sm:$0xff]
        %v785 = vld [vmem:[#allocation2 + $0x8] sm:$0xff]
        %v786 = vld [vmem:[#allocation2 + $0x10] sm:$0xff]
        %v787 = vld [vmem:[#allocation2 + $0x18] sm:$0xff]
        %v788 = vld [vmem:[#allocation2 + $0x20] sm:$0xff]
        %v789 = vld [vmem:[#allocation2 + $0x28] sm:$0xff]
        %v790 = vld [vmem:[#allocation2 + $0x30] sm:$0xff]
        %v791 = vld [vmem:[#allocation2 + $0x38] sm:$0xff]
        %v792 = vld [vmem:[#allocation2 + $0x40] sm:$0xff]
        %v793 = vld [vmem:[#allocation2 + $0x48] sm:$0xff]
        %v794 = vld [vmem:[#allocation2 + $0x50] sm:$0xff]
        %v795 = vld [vmem:[#allocation2 + $0x58] sm:$0xff]
        %v796 = vld [vmem:[#allocation2 + $0x60] sm:$0xff]
        %v797 = vld [vmem:[#allocation2 + $0x68] sm:$0xff]
        %v798 = vld [vmem:[#allocation2 + $0x70] sm:$0xff]
        %v799 = vld [vmem:[#allocation2 + $0x78] sm:$0xff]
        %v800 = vadd.f32 %v784, %v722
        %v801 = vadd.f32 %v785, %v725
        %v802 = vadd.f32 %v786, %v730
        %v803 = vadd.f32 %v787, %v733
        %v804 = vadd.f32 %v788, %v738
        %v805 = vadd.f32 %v789, %v741
        %v806 = vadd.f32 %v790, %v746
        %v807 = vadd.f32 %v791, %v749
        %v808 = vadd.f32 %v792, %v754
        %v809 = vadd.f32 %v793, %v757
        %v810 = vadd.f32 %v794, %v762
        %v811 = vadd.f32 %v795, %v765
        %v812 = vadd.f32 %v796, %v770
        %v813 = vadd.f32 %v797, %v773
        %v814 = vadd.f32 %v798, %v778
        %v815 = vadd.f32 %v799, %v781
        %816 = vst [vmem:[#allocation2] sm:$0xff] %v800
        %817 = vst [vmem:[#allocation2 + $0x8] sm:$0xff] %v801
        %818 = vst [vmem:[#allocation2 + $0x10] sm:$0xff] %v802
        %819 = vst [vmem:[#allocation2 + $0x18] sm:$0xff] %v803
        %820 = vst [vmem:[#allocation2 + $0x20] sm:$0xff] %v804
        %821 = vst [vmem:[#allocation2 + $0x28] sm:$0xff] %v805
        %822 = vst [vmem:[#allocation2 + $0x30] sm:$0xff] %v806
        %823 = vst [vmem:[#allocation2 + $0x38] sm:$0xff] %v807
        %824 = vst [vmem:[#allocation2 + $0x40] sm:$0xff] %v808
        %825 = vst [vmem:[#allocation2 + $0x48] sm:$0xff] %v809
        %826 = vst [vmem:[#allocation2 + $0x50] sm:$0xff] %v810
        %827 = vst [vmem:[#allocation2 + $0x58] sm:$0xff] %v811
        %828 = vst [vmem:[#allocation2 + $0x60] sm:$0xff] %v812
        %829 = vst [vmem:[#allocation2 + $0x68] sm:$0xff] %v813
        %830 = vst [vmem:[#allocation2 + $0x70] sm:$0xff] %v814
        %831 = vst [vmem:[#allocation2 + $0x78] sm:$0xff] %v815
        %v832 = vld [vmem:[%s215] sm:$0xe]
        %v833 = vld [vmem:[%s215 + $0x4] sm:$0xf]
        %v834 = vld [vmem:[%s215 + $0x8] sm:$0x1]
        %v835 = vld [vmem:[%s215 + $0xc] sm:$0xe]
        %v836 = vld [vmem:[%s215 + $0x10] sm:$0xf]
        %v837 = vld [vmem:[%s215 + $0x14] sm:$0x1]
        %v838 = vld [vmem:[%s215 + $0x18] sm:$0xe]
        %v839 = vld [vmem:[%s215 + $0x1c] sm:$0xf]
        %v840 = vld [vmem:[%s215 + $0x20] sm:$0x1]
        %v841 = vld [vmem:[%s215 + $0x24] sm:$0xe]
        %v842 = vld [vmem:[%s215 + $0x28] sm:$0xf]
        %v843 = vld [vmem:[%s215 + $0x2c] sm:$0x1]
        %v844 = vld [vmem:[%s215 + $0x30] sm:$0xe]
        %v845 = vld [vmem:[%s215 + $0x34] sm:$0xf]
        %v846 = vld [vmem:[%s215 + $0x38] sm:$0x1]
        %v847 = vld [vmem:[%s215 + $0x3c] sm:$0xe]
        %v848 = vld [vmem:[%s215 + $0x40] sm:$0xf]
        %v849 = vld [vmem:[%s215 + $0x44] sm:$0x1]
        %v850 = vld [vmem:[%s215 + $0x48] sm:$0xe]
        %v851 = vld [vmem:[%s215 + $0x4c] sm:$0xf]
        %v852 = vld [vmem:[%s215 + $0x50] sm:$0x1]
        %v853 = vld [vmem:[%s215 + $0x54] sm:$0xe]
        %v854 = vld [vmem:[%s215 + $0x58] sm:$0xf]
        %v855 = vld [vmem:[%s215 + $0x5c] sm:$0x1]
        %vm880 = vcmask 1042432
        %vm881 = vcmask 1046532
        %vm882 = vmor %vm880, %vm881
        %v883 = vrot.slane %v832, 5
        %v884 = vrot.slane %v883, 4
        %v885 = vrot.slane %v833, 5
        %v886 = vsel %vm882, %v884, %v885
        %v887 = vrot.slane %v885, 4
        %v888 = vrot.slane %v834, 5
        %v889 = vsel %vm882, %v887, %v888
        %v890 = vrot.slane %v835, 5
        %v891 = vrot.slane %v890, 4
        %v892 = vrot.slane %v836, 5
        %v893 = vsel %vm882, %v891, %v892
        %v894 = vrot.slane %v892, 4
        %v895 = vrot.slane %v837, 5
        %v896 = vsel %vm882, %v894, %v895
        %v897 = vrot.slane %v838, 5
        %v898 = vrot.slane %v897, 4
        %v899 = vrot.slane %v839, 5
        %v900 = vsel %vm882, %v898, %v899
        %v901 = vrot.slane %v899, 4
        %v902 = vrot.slane %v840, 5
        %v903 = vsel %vm882, %v901, %v902
        %v904 = vrot.slane %v841, 5
        %v905 = vrot.slane %v904, 4
        %v906 = vrot.slane %v842, 5
        %v907 = vsel %vm882, %v905, %v906
        %v908 = vrot.slane %v906, 4
        %v909 = vrot.slane %v843, 5
        %v910 = vsel %vm882, %v908, %v909
        %v911 = vrot.slane %v844, 5
        %v912 = vrot.slane %v911, 4
        %v913 = vrot.slane %v845, 5
        %v914 = vsel %vm882, %v912, %v913
        %v915 = vrot.slane %v913, 4
        %v916 = vrot.slane %v846, 5
        %v917 = vsel %vm882, %v915, %v916
        %v918 = vrot.slane %v847, 5
        %v919 = vrot.slane %v918, 4
        %v920 = vrot.slane %v848, 5
        %v921 = vsel %vm882, %v919, %v920
        %v922 = vrot.slane %v920, 4
        %v923 = vrot.slane %v849, 5
        %v924 = vsel %vm882, %v922, %v923
        %v925 = vrot.slane %v850, 5
        %v926 = vrot.slane %v925, 4
        %v927 = vrot.slane %v851, 5
        %v928 = vsel %vm882, %v926, %v927
        %v929 = vrot.slane %v927, 4
        %v930 = vrot.slane %v852, 5
        %v931 = vsel %vm882, %v929, %v930
        %v932 = vrot.slane %v853, 5
        %v933 = vrot.slane %v932, 4
        %v934 = vrot.slane %v854, 5
        %v935 = vsel %vm882, %v933, %v934
        %v936 = vrot.slane %v934, 4
        %v937 = vrot.slane %v855, 5
        %v938 = vsel %vm882, %v936, %v937
        %s939 = scalar_lea.vmem %s1, 4
        %v940 = vld [vmem:[%s939] sm:$0x3]
        %v941 = vunpack.c.l.b16 %v886
        %v942 = vunpack.c.l.b16 %v889
        %v943 = vunpack.c.l.b16 %v893
        %v944 = vunpack.c.l.b16 %v896
        %v945 = vunpack.c.l.b16 %v900
        %v946 = vunpack.c.l.b16 %v903
        %v947 = vunpack.c.l.b16 %v907
        %v948 = vunpack.c.l.b16 %v910
        %v949 = vunpack.c.l.b16 %v914
        %v950 = vunpack.c.l.b16 %v917
        %v951 = vunpack.c.l.b16 %v921
        %v952 = vunpack.c.l.b16 %v924
        %v953 = vunpack.c.l.b16 %v928
        %v954 = vunpack.c.l.b16 %v931
        %v955 = vunpack.c.l.b16 %v935
        %v956 = vunpack.c.l.b16 %v938
        %v957 = vpack.c.b16 %v942, %v941
        %v958 = vpack.c.b16 %v944, %v943
        %v959 = vpack.c.b16 %v946, %v945
        %v960 = vpack.c.b16 %v948, %v947
        %v961 = vpack.c.b16 %v950, %v949
        %v962 = vpack.c.b16 %v952, %v951
        %v963 = vpack.c.b16 %v954, %v953
        %v964 = vpack.c.b16 %v956, %v955
        %v966 = vsel %vm273, %v957, 0
        %v969 = vsel %vm273, %v958, 0
        %v972 = vsel %vm273, %v959, 0
        %v975 = vsel %vm273, %v960, 0
        %v978 = vsel %vm273, %v961, 0
        %v981 = vsel %vm273, %v962, 0
        %v984 = vsel %vm273, %v963, 0
        %v987 = vsel %vm273, %v964, 0
        %v990 = vsel %vm298, %v940, 0
        %992 = vmatprep.subr.bf16.mxu0 0
        %993 = vmatpush1.bf16.msra.mxu0 0
        %994 = vmatprep.subr.bf16.mxu0 0
        %995 = vmatpush1.bf16.msra.mxu0 0
        %996 = vmatprep.subr.bf16.mxu0 0
        %997 = vmatpush1.bf16.msra.mxu0 0
        %998 = vmatprep.subr.bf16.mxu0 0
        %999 = vmatpush1.bf16.msra.mxu0 0
        %1000 = vmatprep.subr.bf16.mxu0 0
        %1001 = vmatpush1.bf16.msra.mxu0 0
        %1002 = vmatprep.subr.bf16.mxu0 0
        %1003 = vmatpush1.bf16.msra.mxu0 0
        %1004 = vmatprep.subr.bf16.mxu0 0
        %1005 = vmatpush1.bf16.msra.mxu0 0
        %1006 = vmatprep.subr.bf16.mxu0 0
        %1007 = vmatpush1.bf16.msra.mxu0 %v990
        %1008 = vmatprep.subr.bf16.mxu0 0
        %1009 = vmatpush2.bf16.msra.mxu0 0
        %1010 = vmatprep.subr.bf16.mxu0 0
        %1011 = vmatpush2.bf16.msra.mxu0 0
        %1012 = vmatprep.subr.bf16.mxu0 0
        %1013 = vmatpush2.bf16.msra.mxu0 0
        %1014 = vmatprep.subr.bf16.mxu0 0
        %1015 = vmatpush2.bf16.msra.mxu0 0
        %1016 = vmatprep.subr.bf16.mxu0 0
        %1017 = vmatpush2.bf16.msra.mxu0 0
        %1018 = vmatprep.subr.bf16.mxu0 0
        %1019 = vmatpush2.bf16.msra.mxu0 0
        %1020 = vmatprep.subr.bf16.mxu0 0
        %1021 = vmatpush2.bf16.msra.mxu0 0
        %1022 = vmatprep.subr.bf16.mxu0 0
        %1023 = vmatpush2.bf16.msra.mxu0 0
        %1024 = vmatprep.mubr.bf16.mxu0 0
        %1025 = vmatmul.mubr.bf16.gmra.mxu0 %v966
        %v1026 = vpop.f32.mrf.mxu0
        %v1027 = vadd.f32 0.0, %v1026
        %v1028 = vpop.f32.mrf.mxu0
        %v1029 = vpop.f32.mrf.mxu0
        %v1030 = vadd.f32 0.0, %v1029
        %v1031 = vpop.f32.mrf.mxu0
        %1032 = vmatprep.mubr.bf16.mxu0 0
        %1033 = vmatmul.mubr.bf16.gmra.mxu0 %v969
        %v1034 = vpop.f32.mrf.mxu0
        %v1035 = vadd.f32 0.0, %v1034
        %v1036 = vpop.f32.mrf.mxu0
        %v1037 = vpop.f32.mrf.mxu0
        %v1038 = vadd.f32 0.0, %v1037
        %v1039 = vpop.f32.mrf.mxu0
        %1040 = vmatprep.mubr.bf16.mxu0 0
        %1041 = vmatmul.mubr.bf16.gmra.mxu0 %v972
        %v1042 = vpop.f32.mrf.mxu0
        %v1043 = vadd.f32 0.0, %v1042
        %v1044 = vpop.f32.mrf.mxu0
        %v1045 = vpop.f32.mrf.mxu0
        %v1046 = vadd.f32 0.0, %v1045
        %v1047 = vpop.f32.mrf.mxu0
        %1048 = vmatprep.mubr.bf16.mxu0 0
        %1049 = vmatmul.mubr.bf16.gmra.mxu0 %v975
        %v1050 = vpop.f32.mrf.mxu0
        %v1051 = vadd.f32 0.0, %v1050
        %v1052 = vpop.f32.mrf.mxu0
        %v1053 = vpop.f32.mrf.mxu0
        %v1054 = vadd.f32 0.0, %v1053
        %v1055 = vpop.f32.mrf.mxu0
        %1056 = vmatprep.mubr.bf16.mxu0 0
        %1057 = vmatmul.mubr.bf16.gmra.mxu0 %v978
        %v1058 = vpop.f32.mrf.mxu0
        %v1059 = vadd.f32 0.0, %v1058
        %v1060 = vpop.f32.mrf.mxu0
        %v1061 = vpop.f32.mrf.mxu0
        %v1062 = vadd.f32 0.0, %v1061
        %v1063 = vpop.f32.mrf.mxu0
        %1064 = vmatprep.mubr.bf16.mxu0 0
        %1065 = vmatmul.mubr.bf16.gmra.mxu0 %v981
        %v1066 = vpop.f32.mrf.mxu0
        %v1067 = vadd.f32 0.0, %v1066
        %v1068 = vpop.f32.mrf.mxu0
        %v1069 = vpop.f32.mrf.mxu0
        %v1070 = vadd.f32 0.0, %v1069
        %v1071 = vpop.f32.mrf.mxu0
        %1072 = vmatprep.mubr.bf16.mxu0 0
        %1073 = vmatmul.mubr.bf16.gmra.mxu0 %v984
        %v1074 = vpop.f32.mrf.mxu0
        %v1075 = vadd.f32 0.0, %v1074
        %v1076 = vpop.f32.mrf.mxu0
        %v1077 = vpop.f32.mrf.mxu0
        %v1078 = vadd.f32 0.0, %v1077
        %v1079 = vpop.f32.mrf.mxu0
        %1080 = vmatprep.mubr.bf16.mxu0 0
        %1081 = vmatmul.mubr.bf16.gmra.mxu0 %v987
        %v1082 = vpop.f32.mrf.mxu0
        %v1083 = vadd.f32 0.0, %v1082
        %v1084 = vpop.f32.mrf.mxu0
        %v1085 = vpop.f32.mrf.mxu0
        %v1086 = vadd.f32 0.0, %v1085
        %v1087 = vpop.f32.mrf.mxu0
        %1088 = vdwg.mxu0
        %v1089 = vld [vmem:[#allocation2] sm:$0xff]
        %v1090 = vld [vmem:[#allocation2 + $0x8] sm:$0xff]
        %v1091 = vld [vmem:[#allocation2 + $0x10] sm:$0xff]
        %v1092 = vld [vmem:[#allocation2 + $0x18] sm:$0xff]
        %v1093 = vld [vmem:[#allocation2 + $0x20] sm:$0xff]
        %v1094 = vld [vmem:[#allocation2 + $0x28] sm:$0xff]
        %v1095 = vld [vmem:[#allocation2 + $0x30] sm:$0xff]
        %v1096 = vld [vmem:[#allocation2 + $0x38] sm:$0xff]
        %v1097 = vld [vmem:[#allocation2 + $0x40] sm:$0xff]
        %v1098 = vld [vmem:[#allocation2 + $0x48] sm:$0xff]
        %v1099 = vld [vmem:[#allocation2 + $0x50] sm:$0xff]
        %v1100 = vld [vmem:[#allocation2 + $0x58] sm:$0xff]
        %v1101 = vld [vmem:[#allocation2 + $0x60] sm:$0xff]
        %v1102 = vld [vmem:[#allocation2 + $0x68] sm:$0xff]
        %v1103 = vld [vmem:[#allocation2 + $0x70] sm:$0xff]
        %v1104 = vld [vmem:[#allocation2 + $0x78] sm:$0xff]
        %v1105 = vadd.f32 %v1089, %v1027
        %v1106 = vadd.f32 %v1090, %v1030
        %v1107 = vadd.f32 %v1091, %v1035
        %v1108 = vadd.f32 %v1092, %v1038
        %v1109 = vadd.f32 %v1093, %v1043
        %v1110 = vadd.f32 %v1094, %v1046
        %v1111 = vadd.f32 %v1095, %v1051
        %v1112 = vadd.f32 %v1096, %v1054
        %v1113 = vadd.f32 %v1097, %v1059
        %v1114 = vadd.f32 %v1098, %v1062
        %v1115 = vadd.f32 %v1099, %v1067
        %v1116 = vadd.f32 %v1100, %v1070
        %v1117 = vadd.f32 %v1101, %v1075
        %v1118 = vadd.f32 %v1102, %v1078
        %v1119 = vadd.f32 %v1103, %v1083
        %v1120 = vadd.f32 %v1104, %v1086
        %1121 = vst [vmem:[#allocation2] sm:$0xff] %v1105
        %1122 = vst [vmem:[#allocation2 + $0x8] sm:$0xff] %v1106
        %1123 = vst [vmem:[#allocation2 + $0x10] sm:$0xff] %v1107
        %1124 = vst [vmem:[#allocation2 + $0x18] sm:$0xff] %v1108
        %1125 = vst [vmem:[#allocation2 + $0x20] sm:$0xff] %v1109
        %1126 = vst [vmem:[#allocation2 + $0x28] sm:$0xff] %v1110
        %1127 = vst [vmem:[#allocation2 + $0x30] sm:$0xff] %v1111
        %1128 = vst [vmem:[#allocation2 + $0x38] sm:$0xff] %v1112
        %1129 = vst [vmem:[#allocation2 + $0x40] sm:$0xff] %v1113
        %1130 = vst [vmem:[#allocation2 + $0x48] sm:$0xff] %v1114
        %1131 = vst [vmem:[#allocation2 + $0x50] sm:$0xff] %v1115
        %1132 = vst [vmem:[#allocation2 + $0x58] sm:$0xff] %v1116
        %1133 = vst [vmem:[#allocation2 + $0x60] sm:$0xff] %v1117
        %1134 = vst [vmem:[#allocation2 + $0x68] sm:$0xff] %v1118
        %1135 = vst [vmem:[#allocation2 + $0x70] sm:$0xff] %v1119
        %1136 = vst [vmem:[#allocation2 + $0x78] sm:$0xff] %v1120
        %s1137 = sadd.s32 %s212, 1
        %s1138 = smul.u32 %s1137, 3
        %s1139 = smul.addr %s1138, 4
        %s1140 = scalar_lea.vmem %s209, %s1139
        %v1141 = vld [vmem:[%s1140] sm:$0xf]
        %v1142 = vld [vmem:[%s1140 + $0x4] sm:$0xf]
        %v1143 = vld [vmem:[%s1140 + $0xc] sm:$0xf]
        %v1144 = vld [vmem:[%s1140 + $0x10] sm:$0xf]
        %v1145 = vld [vmem:[%s1140 + $0x18] sm:$0xf]
        %v1146 = vld [vmem:[%s1140 + $0x1c] sm:$0xf]
        %v1147 = vld [vmem:[%s1140 + $0x24] sm:$0xf]
        %v1148 = vld [vmem:[%s1140 + $0x28] sm:$0xf]
        %v1149 = vld [vmem:[%s1140 + $0x30] sm:$0xf]
        %v1150 = vld [vmem:[%s1140 + $0x34] sm:$0xf]
        %v1151 = vld [vmem:[%s1140 + $0x3c] sm:$0xf]
        %v1152 = vld [vmem:[%s1140 + $0x40] sm:$0xf]
        %v1153 = vld [vmem:[%s1140 + $0x48] sm:$0xf]
        %v1154 = vld [vmem:[%s1140 + $0x4c] sm:$0xf]
        %v1155 = vld [vmem:[%s1140 + $0x54] sm:$0xf]
        %v1156 = vld [vmem:[%s1140 + $0x58] sm:$0xf]
        %s1157 = scalar_lea.vmem %s1, 6
        %v1158 = vld [vmem:[%s1157] sm:$0x3]
        %v1175 = vunpack.c.l.b16 %v1141
        %v1176 = vunpack.c.l.b16 %v1142
        %v1177 = vunpack.c.l.b16 %v1143
        %v1178 = vunpack.c.l.b16 %v1144
        %v1179 = vunpack.c.l.b16 %v1145
        %v1180 = vunpack.c.l.b16 %v1146
        %v1181 = vunpack.c.l.b16 %v1147
        %v1182 = vunpack.c.l.b16 %v1148
        %v1183 = vunpack.c.l.b16 %v1149
        %v1184 = vunpack.c.l.b16 %v1150
        %v1185 = vunpack.c.l.b16 %v1151
        %v1186 = vunpack.c.l.b16 %v1152
        %v1187 = vunpack.c.l.b16 %v1153
        %v1188 = vunpack.c.l.b16 %v1154
        %v1189 = vunpack.c.l.b16 %v1155
        %v1190 = vunpack.c.l.b16 %v1156
        %v1191 = vpack.c.b16 %v1176, %v1175
        %v1192 = vpack.c.b16 %v1178, %v1177
        %v1193 = vpack.c.b16 %v1180, %v1179
        %v1194 = vpack.c.b16 %v1182, %v1181
        %v1195 = vpack.c.b16 %v1184, %v1183
        %v1196 = vpack.c.b16 %v1186, %v1185
        %v1197 = vpack.c.b16 %v1188, %v1187
        %v1198 = vpack.c.b16 %v1190, %v1189
        %v1200 = vsel %vm273, %v1191, 0
        %v1203 = vsel %vm273, %v1192, 0
        %v1206 = vsel %vm273, %v1193, 0
        %v1209 = vsel %vm273, %v1194, 0
        %v1212 = vsel %vm273, %v1195, 0
        %v1215 = vsel %vm273, %v1196, 0
        %v1218 = vsel %vm273, %v1197, 0
        %v1221 = vsel %vm273, %v1198, 0
        %v1224 = vsel %vm298, %v1158, 0
        %1226 = vmatprep.subr.bf16.mxu0 0
        %1227 = vmatpush1.bf16.msra.mxu0 0
        %1228 = vmatprep.subr.bf16.mxu0 0
        %1229 = vmatpush1.bf16.msra.mxu0 0
        %1230 = vmatprep.subr.bf16.mxu0 0
        %1231 = vmatpush1.bf16.msra.mxu0 0
        %1232 = vmatprep.subr.bf16.mxu0 0
        %1233 = vmatpush1.bf16.msra.mxu0 0
        %1234 = vmatprep.subr.bf16.mxu0 0
        %1235 = vmatpush1.bf16.msra.mxu0 0
        %1236 = vmatprep.subr.bf16.mxu0 0
        %1237 = vmatpush1.bf16.msra.mxu0 0
        %1238 = vmatprep.subr.bf16.mxu0 0
        %1239 = vmatpush1.bf16.msra.mxu0 0
        %1240 = vmatprep.subr.bf16.mxu0 0
        %1241 = vmatpush1.bf16.msra.mxu0 %v1224
        %1242 = vmatprep.subr.bf16.mxu0 0
        %1243 = vmatpush2.bf16.msra.mxu0 0
        %1244 = vmatprep.subr.bf16.mxu0 0
        %1245 = vmatpush2.bf16.msra.mxu0 0
        %1246 = vmatprep.subr.bf16.mxu0 0
        %1247 = vmatpush2.bf16.msra.mxu0 0
        %1248 = vmatprep.subr.bf16.mxu0 0
        %1249 = vmatpush2.bf16.msra.mxu0 0
        %1250 = vmatprep.subr.bf16.mxu0 0
        %1251 = vmatpush2.bf16.msra.mxu0 0
        %1252 = vmatprep.subr.bf16.mxu0 0
        %1253 = vmatpush2.bf16.msra.mxu0 0
        %1254 = vmatprep.subr.bf16.mxu0 0
        %1255 = vmatpush2.bf16.msra.mxu0 0
        %1256 = vmatprep.subr.bf16.mxu0 0
        %1257 = vmatpush2.bf16.msra.mxu0 0
        %1258 = vmatprep.mubr.bf16.mxu0 0
        %1259 = vmatmul.mubr.bf16.gmra.mxu0 %v1200
        %v1260 = vpop.f32.mrf.mxu0
        %v1261 = vadd.f32 0.0, %v1260
        %v1262 = vpop.f32.mrf.mxu0
        %v1263 = vpop.f32.mrf.mxu0
        %v1264 = vadd.f32 0.0, %v1263
        %v1265 = vpop.f32.mrf.mxu0
        %1266 = vmatprep.mubr.bf16.mxu0 0
        %1267 = vmatmul.mubr.bf16.gmra.mxu0 %v1203
        %v1268 = vpop.f32.mrf.mxu0
        %v1269 = vadd.f32 0.0, %v1268
        %v1270 = vpop.f32.mrf.mxu0
        %v1271 = vpop.f32.mrf.mxu0
        %v1272 = vadd.f32 0.0, %v1271
        %v1273 = vpop.f32.mrf.mxu0
        %1274 = vmatprep.mubr.bf16.mxu0 0
        %1275 = vmatmul.mubr.bf16.gmra.mxu0 %v1206
        %v1276 = vpop.f32.mrf.mxu0
        %v1277 = vadd.f32 0.0, %v1276
        %v1278 = vpop.f32.mrf.mxu0
        %v1279 = vpop.f32.mrf.mxu0
        %v1280 = vadd.f32 0.0, %v1279
        %v1281 = vpop.f32.mrf.mxu0
        %1282 = vmatprep.mubr.bf16.mxu0 0
        %1283 = vmatmul.mubr.bf16.gmra.mxu0 %v1209
        %v1284 = vpop.f32.mrf.mxu0
        %v1285 = vadd.f32 0.0, %v1284
        %v1286 = vpop.f32.mrf.mxu0
        %v1287 = vpop.f32.mrf.mxu0
        %v1288 = vadd.f32 0.0, %v1287
        %v1289 = vpop.f32.mrf.mxu0
        %1290 = vmatprep.mubr.bf16.mxu0 0
        %1291 = vmatmul.mubr.bf16.gmra.mxu0 %v1212
        %v1292 = vpop.f32.mrf.mxu0
        %v1293 = vadd.f32 0.0, %v1292
        %v1294 = vpop.f32.mrf.mxu0
        %v1295 = vpop.f32.mrf.mxu0
        %v1296 = vadd.f32 0.0, %v1295
        %v1297 = vpop.f32.mrf.mxu0
        %1298 = vmatprep.mubr.bf16.mxu0 0
        %1299 = vmatmul.mubr.bf16.gmra.mxu0 %v1215
        %v1300 = vpop.f32.mrf.mxu0
        %v1301 = vadd.f32 0.0, %v1300
        %v1302 = vpop.f32.mrf.mxu0
        %v1303 = vpop.f32.mrf.mxu0
        %v1304 = vadd.f32 0.0, %v1303
        %v1305 = vpop.f32.mrf.mxu0
        %1306 = vmatprep.mubr.bf16.mxu0 0
        %1307 = vmatmul.mubr.bf16.gmra.mxu0 %v1218
        %v1308 = vpop.f32.mrf.mxu0
        %v1309 = vadd.f32 0.0, %v1308
        %v1310 = vpop.f32.mrf.mxu0
        %v1311 = vpop.f32.mrf.mxu0
        %v1312 = vadd.f32 0.0, %v1311
        %v1313 = vpop.f32.mrf.mxu0
        %1314 = vmatprep.mubr.bf16.mxu0 0
        %1315 = vmatmul.mubr.bf16.gmra.mxu0 %v1221
        %v1316 = vpop.f32.mrf.mxu0
        %v1317 = vadd.f32 0.0, %v1316
        %v1318 = vpop.f32.mrf.mxu0
        %v1319 = vpop.f32.mrf.mxu0
        %v1320 = vadd.f32 0.0, %v1319
        %v1321 = vpop.f32.mrf.mxu0
        %1322 = vdwg.mxu0
        %v1323 = vld [vmem:[#allocation2] sm:$0xff]
        %v1324 = vld [vmem:[#allocation2 + $0x8] sm:$0xff]
        %v1325 = vld [vmem:[#allocation2 + $0x10] sm:$0xff]
        %v1326 = vld [vmem:[#allocation2 + $0x18] sm:$0xff]
        %v1327 = vld [vmem:[#allocation2 + $0x20] sm:$0xff]
        %v1328 = vld [vmem:[#allocation2 + $0x28] sm:$0xff]
        %v1329 = vld [vmem:[#allocation2 + $0x30] sm:$0xff]
        %v1330 = vld [vmem:[#allocation2 + $0x38] sm:$0xff]
        %v1331 = vld [vmem:[#allocation2 + $0x40] sm:$0xff]
        %v1332 = vld [vmem:[#allocation2 + $0x48] sm:$0xff]
        %v1333 = vld [vmem:[#allocation2 + $0x50] sm:$0xff]
        %v1334 = vld [vmem:[#allocation2 + $0x58] sm:$0xff]
        %v1335 = vld [vmem:[#allocation2 + $0x60] sm:$0xff]
        %v1336 = vld [vmem:[#allocation2 + $0x68] sm:$0xff]
        %v1337 = vld [vmem:[#allocation2 + $0x70] sm:$0xff]
        %v1338 = vld [vmem:[#allocation2 + $0x78] sm:$0xff]
        %v1339 = vadd.f32 %v1323, %v1261
        %v1340 = vadd.f32 %v1324, %v1264
        %v1341 = vadd.f32 %v1325, %v1269
        %v1342 = vadd.f32 %v1326, %v1272
        %v1343 = vadd.f32 %v1327, %v1277
        %v1344 = vadd.f32 %v1328, %v1280
        %v1345 = vadd.f32 %v1329, %v1285
        %v1346 = vadd.f32 %v1330, %v1288
        %v1347 = vadd.f32 %v1331, %v1293
        %v1348 = vadd.f32 %v1332, %v1296
        %v1349 = vadd.f32 %v1333, %v1301
        %v1350 = vadd.f32 %v1334, %v1304
        %v1351 = vadd.f32 %v1335, %v1309
        %v1352 = vadd.f32 %v1336, %v1312
        %v1353 = vadd.f32 %v1337, %v1317
        %v1354 = vadd.f32 %v1338, %v1320
        %1355 = vst [vmem:[#allocation2] sm:$0xff] %v1339
        %1356 = vst [vmem:[#allocation2 + $0x8] sm:$0xff] %v1340
        %1357 = vst [vmem:[#allocation2 + $0x10] sm:$0xff] %v1341
        %1358 = vst [vmem:[#allocation2 + $0x18] sm:$0xff] %v1342
        %1359 = vst [vmem:[#allocation2 + $0x20] sm:$0xff] %v1343
        %1360 = vst [vmem:[#allocation2 + $0x28] sm:$0xff] %v1344
        %1361 = vst [vmem:[#allocation2 + $0x30] sm:$0xff] %v1345
        %1362 = vst [vmem:[#allocation2 + $0x38] sm:$0xff] %v1346
        %1363 = vst [vmem:[#allocation2 + $0x40] sm:$0xff] %v1347
        %1364 = vst [vmem:[#allocation2 + $0x48] sm:$0xff] %v1348
        %1365 = vst [vmem:[#allocation2 + $0x50] sm:$0xff] %v1349
        %1366 = vst [vmem:[#allocation2 + $0x58] sm:$0xff] %v1350
        %1367 = vst [vmem:[#allocation2 + $0x60] sm:$0xff] %v1351
        %1368 = vst [vmem:[#allocation2 + $0x68] sm:$0xff] %v1352
        %1369 = vst [vmem:[#allocation2 + $0x70] sm:$0xff] %v1353
        %1370 = vst [vmem:[#allocation2 + $0x78] sm:$0xff] %v1354
        %v1371 = vld [vmem:[%s1140] sm:$0xf]
        %v1372 = vld [vmem:[%s1140 + $0x4] sm:$0xf]
        %v1373 = vld [vmem:[%s1140 + $0x8] sm:$0x1]
        %v1374 = vld [vmem:[%s1140 + $0xc] sm:$0xf]
        %v1375 = vld [vmem:[%s1140 + $0x10] sm:$0xf]
        %v1376 = vld [vmem:[%s1140 + $0x14] sm:$0x1]
        %v1377 = vld [vmem:[%s1140 + $0x18] sm:$0xf]
        %v1378 = vld [vmem:[%s1140 + $0x1c] sm:$0xf]
        %v1379 = vld [vmem:[%s1140 + $0x20] sm:$0x1]
        %v1380 = vld [vmem:[%s1140 + $0x24] sm:$0xf]
        %v1381 = vld [vmem:[%s1140 + $0x28] sm:$0xf]
        %v1382 = vld [vmem:[%s1140 + $0x2c] sm:$0x1]
        %v1383 = vld [vmem:[%s1140 + $0x30] sm:$0xf]
        %v1384 = vld [vmem:[%s1140 + $0x34] sm:$0xf]
        %v1385 = vld [vmem:[%s1140 + $0x38] sm:$0x1]
        %v1386 = vld [vmem:[%s1140 + $0x3c] sm:$0xf]
        %v1387 = vld [vmem:[%s1140 + $0x40] sm:$0xf]
        %v1388 = vld [vmem:[%s1140 + $0x44] sm:$0x1]
        %v1389 = vld [vmem:[%s1140 + $0x48] sm:$0xf]
        %v1390 = vld [vmem:[%s1140 + $0x4c] sm:$0xf]
        %v1391 = vld [vmem:[%s1140 + $0x50] sm:$0x1]
        %v1392 = vld [vmem:[%s1140 + $0x54] sm:$0xf]
        %v1393 = vld [vmem:[%s1140 + $0x58] sm:$0xf]
        %v1394 = vld [vmem:[%s1140 + $0x5c] sm:$0x1]
        %v1396 = vshrl.u32 %v1371, 16
        %v1398 = vrot.slane %v1396, 4
        %v1399 = vshll.u32 %v1371, 16
        %v1401 = vrot.slane %v1399, 5
        %v1402 = vor.u32 %v1398, %v1401
        %v1403 = vrot.slane %v1402, 4
        %v1405 = vshll.u32 %v1372, 16
        %v1407 = vrot.slane %v1405, 5
        %v1408 = vsel %vm441, %v1403, %v1407
        %v1409 = vshrl.u32 %v1372, 16
        %v1411 = vrot.slane %v1409, 4
        %v1412 = vor.u32 %v1411, %v1407
        %v1413 = vrot.slane %v1412, 4
        %v1415 = vshll.u32 %v1373, 16
        %v1417 = vrot.slane %v1415, 5
        %v1418 = vsel %vm441, %v1413, %v1417
        %v1420 = vshrl.u32 %v1374, 16
        %v1422 = vrot.slane %v1420, 4
        %v1423 = vshll.u32 %v1374, 16
        %v1425 = vrot.slane %v1423, 5
        %v1426 = vor.u32 %v1422, %v1425
        %v1427 = vrot.slane %v1426, 4
        %v1429 = vshll.u32 %v1375, 16
        %v1431 = vrot.slane %v1429, 5
        %v1432 = vsel %vm441, %v1427, %v1431
        %v1433 = vshrl.u32 %v1375, 16
        %v1435 = vrot.slane %v1433, 4
        %v1436 = vor.u32 %v1435, %v1431
        %v1437 = vrot.slane %v1436, 4
        %v1439 = vshll.u32 %v1376, 16
        %v1441 = vrot.slane %v1439, 5
        %v1442 = vsel %vm441, %v1437, %v1441
        %v1444 = vshrl.u32 %v1377, 16
        %v1446 = vrot.slane %v1444, 4
        %v1447 = vshll.u32 %v1377, 16
        %v1449 = vrot.slane %v1447, 5
        %v1450 = vor.u32 %v1446, %v1449
        %v1451 = vrot.slane %v1450, 4
        %v1453 = vshll.u32 %v1378, 16
        %v1455 = vrot.slane %v1453, 5
        %v1456 = vsel %vm441, %v1451, %v1455
        %v1457 = vshrl.u32 %v1378, 16
        %v1459 = vrot.slane %v1457, 4
        %v1460 = vor.u32 %v1459, %v1455
        %v1461 = vrot.slane %v1460, 4
        %v1463 = vshll.u32 %v1379, 16
        %v1465 = vrot.slane %v1463, 5
        %v1466 = vsel %vm441, %v1461, %v1465
        %v1468 = vshrl.u32 %v1380, 16
        %v1470 = vrot.slane %v1468, 4
        %v1471 = vshll.u32 %v1380, 16
        %v1473 = vrot.slane %v1471, 5
        %v1474 = vor.u32 %v1470, %v1473
        %v1475 = vrot.slane %v1474, 4
        %v1477 = vshll.u32 %v1381, 16
        %v1479 = vrot.slane %v1477, 5
        %v1480 = vsel %vm441, %v1475, %v1479
        %v1481 = vshrl.u32 %v1381, 16
        %v1483 = vrot.slane %v1481, 4
        %v1484 = vor.u32 %v1483, %v1479
        %v1485 = vrot.slane %v1484, 4
        %v1487 = vshll.u32 %v1382, 16
        %v1489 = vrot.slane %v1487, 5
        %v1490 = vsel %vm441, %v1485, %v1489
        %v1492 = vshrl.u32 %v1383, 16
        %v1494 = vrot.slane %v1492, 4
        %v1495 = vshll.u32 %v1383, 16
        %v1497 = vrot.slane %v1495, 5
        %v1498 = vor.u32 %v1494, %v1497
        %v1499 = vrot.slane %v1498, 4
        %v1501 = vshll.u32 %v1384, 16
        %v1503 = vrot.slane %v1501, 5
        %v1504 = vsel %vm441, %v1499, %v1503
        %v1505 = vshrl.u32 %v1384, 16
        %v1507 = vrot.slane %v1505, 4
        %v1508 = vor.u32 %v1507, %v1503
        %v1509 = vrot.slane %v1508, 4
        %v1511 = vshll.u32 %v1385, 16
        %v1513 = vrot.slane %v1511, 5
        %v1514 = vsel %vm441, %v1509, %v1513
        %v1516 = vshrl.u32 %v1386, 16
        %v1518 = vrot.slane %v1516, 4
        %v1519 = vshll.u32 %v1386, 16
        %v1521 = vrot.slane %v1519, 5
        %v1522 = vor.u32 %v1518, %v1521
        %v1523 = vrot.slane %v1522, 4
        %v1525 = vshll.u32 %v1387, 16
        %v1527 = vrot.slane %v1525, 5
        %v1528 = vsel %vm441, %v1523, %v1527
        %v1529 = vshrl.u32 %v1387, 16
        %v1531 = vrot.slane %v1529, 4
        %v1532 = vor.u32 %v1531, %v1527
        %v1533 = vrot.slane %v1532, 4
        %v1535 = vshll.u32 %v1388, 16
        %v1537 = vrot.slane %v1535, 5
        %v1538 = vsel %vm441, %v1533, %v1537
        %v1540 = vshrl.u32 %v1389, 16
        %v1542 = vrot.slane %v1540, 4
        %v1543 = vshll.u32 %v1389, 16
        %v1545 = vrot.slane %v1543, 5
        %v1546 = vor.u32 %v1542, %v1545
        %v1547 = vrot.slane %v1546, 4
        %v1549 = vshll.u32 %v1390, 16
        %v1551 = vrot.slane %v1549, 5
        %v1552 = vsel %vm441, %v1547, %v1551
        %v1553 = vshrl.u32 %v1390, 16
        %v1555 = vrot.slane %v1553, 4
        %v1556 = vor.u32 %v1555, %v1551
        %v1557 = vrot.slane %v1556, 4
        %v1559 = vshll.u32 %v1391, 16
        %v1561 = vrot.slane %v1559, 5
        %v1562 = vsel %vm441, %v1557, %v1561
        %v1564 = vshrl.u32 %v1392, 16
        %v1566 = vrot.slane %v1564, 4
        %v1567 = vshll.u32 %v1392, 16
        %v1569 = vrot.slane %v1567, 5
        %v1570 = vor.u32 %v1566, %v1569
        %v1571 = vrot.slane %v1570, 4
        %v1573 = vshll.u32 %v1393, 16
        %v1575 = vrot.slane %v1573, 5
        %v1576 = vsel %vm441, %v1571, %v1575
        %v1577 = vshrl.u32 %v1393, 16
        %v1579 = vrot.slane %v1577, 4
        %v1580 = vor.u32 %v1579, %v1575
        %v1581 = vrot.slane %v1580, 4
        %v1583 = vshll.u32 %v1394, 16
        %v1585 = vrot.slane %v1583, 5
        %v1586 = vsel %vm441, %v1581, %v1585
        %s1587 = scalar_lea.vmem %s1, 8
        %v1588 = vld [vmem:[%s1587] sm:$0x3]
        %v1589 = vunpack.c.l.b16 %v1408
        %v1590 = vunpack.c.l.b16 %v1418
        %v1591 = vunpack.c.l.b16 %v1432
        %v1592 = vunpack.c.l.b16 %v1442
        %v1593 = vunpack.c.l.b16 %v1456
        %v1594 = vunpack.c.l.b16 %v1466
        %v1595 = vunpack.c.l.b16 %v1480
        %v1596 = vunpack.c.l.b16 %v1490
        %v1597 = vunpack.c.l.b16 %v1504
        %v1598 = vunpack.c.l.b16 %v1514
        %v1599 = vunpack.c.l.b16 %v1528
        %v1600 = vunpack.c.l.b16 %v1538
        %v1601 = vunpack.c.l.b16 %v1552
        %v1602 = vunpack.c.l.b16 %v1562
        %v1603 = vunpack.c.l.b16 %v1576
        %v1604 = vunpack.c.l.b16 %v1586
        %v1605 = vpack.c.b16 %v1590, %v1589
        %v1606 = vpack.c.b16 %v1592, %v1591
        %v1607 = vpack.c.b16 %v1594, %v1593
        %v1608 = vpack.c.b16 %v1596, %v1595
        %v1609 = vpack.c.b16 %v1598, %v1597
        %v1610 = vpack.c.b16 %v1600, %v1599
        %v1611 = vpack.c.b16 %v1602, %v1601
        %v1612 = vpack.c.b16 %v1604, %v1603
        %v1614 = vsel %vm273, %v1605, 0
        %v1617 = vsel %vm273, %v1606, 0
        %v1620 = vsel %vm273, %v1607, 0
        %v1623 = vsel %vm273, %v1608, 0
        %v1626 = vsel %vm273, %v1609, 0
        %v1629 = vsel %vm273, %v1610, 0
        %v1632 = vsel %vm273, %v1611, 0
        %v1635 = vsel %vm273, %v1612, 0
        %v1638 = vsel %vm298, %v1588, 0
        %1640 = vmatprep.subr.bf16.mxu0 0
        %1641 = vmatpush1.bf16.msra.mxu0 0
        %1642 = vmatprep.subr.bf16.mxu0 0
        %1643 = vmatpush1.bf16.msra.mxu0 0
        %1644 = vmatprep.subr.bf16.mxu0 0
        %1645 = vmatpush1.bf16.msra.mxu0 0
        %1646 = vmatprep.subr.bf16.mxu0 0
        %1647 = vmatpush1.bf16.msra.mxu0 0
        %1648 = vmatprep.subr.bf16.mxu0 0
        %1649 = vmatpush1.bf16.msra.mxu0 0
        %1650 = vmatprep.subr.bf16.mxu0 0
        %1651 = vmatpush1.bf16.msra.mxu0 0
        %1652 = vmatprep.subr.bf16.mxu0 0
        %1653 = vmatpush1.bf16.msra.mxu0 0
        %1654 = vmatprep.subr.bf16.mxu0 0
        %1655 = vmatpush1.bf16.msra.mxu0 %v1638
        %1656 = vmatprep.subr.bf16.mxu0 0
        %1657 = vmatpush2.bf16.msra.mxu0 0
        %1658 = vmatprep.subr.bf16.mxu0 0
        %1659 = vmatpush2.bf16.msra.mxu0 0
        %1660 = vmatprep.subr.bf16.mxu0 0
        %1661 = vmatpush2.bf16.msra.mxu0 0
        %1662 = vmatprep.subr.bf16.mxu0 0
        %1663 = vmatpush2.bf16.msra.mxu0 0
        %1664 = vmatprep.subr.bf16.mxu0 0
        %1665 = vmatpush2.bf16.msra.mxu0 0
        %1666 = vmatprep.subr.bf16.mxu0 0
        %1667 = vmatpush2.bf16.msra.mxu0 0
        %1668 = vmatprep.subr.bf16.mxu0 0
        %1669 = vmatpush2.bf16.msra.mxu0 0
        %1670 = vmatprep.subr.bf16.mxu0 0
        %1671 = vmatpush2.bf16.msra.mxu0 0
        %1672 = vmatprep.mubr.bf16.mxu0 0
        %1673 = vmatmul.mubr.bf16.gmra.mxu0 %v1614
        %v1674 = vpop.f32.mrf.mxu0
        %v1675 = vadd.f32 0.0, %v1674
        %v1676 = vpop.f32.mrf.mxu0
        %v1677 = vpop.f32.mrf.mxu0
        %v1678 = vadd.f32 0.0, %v1677
        %v1679 = vpop.f32.mrf.mxu0
        %1680 = vmatprep.mubr.bf16.mxu0 0
        %1681 = vmatmul.mubr.bf16.gmra.mxu0 %v1617
        %v1682 = vpop.f32.mrf.mxu0
        %v1683 = vadd.f32 0.0, %v1682
        %v1684 = vpop.f32.mrf.mxu0
        %v1685 = vpop.f32.mrf.mxu0
        %v1686 = vadd.f32 0.0, %v1685
        %v1687 = vpop.f32.mrf.mxu0
        %1688 = vmatprep.mubr.bf16.mxu0 0
        %1689 = vmatmul.mubr.bf16.gmra.mxu0 %v1620
        %v1690 = vpop.f32.mrf.mxu0
        %v1691 = vadd.f32 0.0, %v1690
        %v1692 = vpop.f32.mrf.mxu0
        %v1693 = vpop.f32.mrf.mxu0
        %v1694 = vadd.f32 0.0, %v1693
        %v1695 = vpop.f32.mrf.mxu0
        %1696 = vmatprep.mubr.bf16.mxu0 0
        %1697 = vmatmul.mubr.bf16.gmra.mxu0 %v1623
        %v1698 = vpop.f32.mrf.mxu0
        %v1699 = vadd.f32 0.0, %v1698
        %v1700 = vpop.f32.mrf.mxu0
        %v1701 = vpop.f32.mrf.mxu0
        %v1702 = vadd.f32 0.0, %v1701
        %v1703 = vpop.f32.mrf.mxu0
        %1704 = vmatprep.mubr.bf16.mxu0 0
        %1705 = vmatmul.mubr.bf16.gmra.mxu0 %v1626
        %v1706 = vpop.f32.mrf.mxu0
        %v1707 = vadd.f32 0.0, %v1706
        %v1708 = vpop.f32.mrf.mxu0
        %v1709 = vpop.f32.mrf.mxu0
        %v1710 = vadd.f32 0.0, %v1709
        %v1711 = vpop.f32.mrf.mxu0
        %1712 = vmatprep.mubr.bf16.mxu0 0
        %1713 = vmatmul.mubr.bf16.gmra.mxu0 %v1629
        %v1714 = vpop.f32.mrf.mxu0
        %v1715 = vadd.f32 0.0, %v1714
        %v1716 = vpop.f32.mrf.mxu0
        %v1717 = vpop.f32.mrf.mxu0
        %v1718 = vadd.f32 0.0, %v1717
        %v1719 = vpop.f32.mrf.mxu0
        %1720 = vmatprep.mubr.bf16.mxu0 0
        %1721 = vmatmul.mubr.bf16.gmra.mxu0 %v1632
        %v1722 = vpop.f32.mrf.mxu0
        %v1723 = vadd.f32 0.0, %v1722
        %v1724 = vpop.f32.mrf.mxu0
        %v1725 = vpop.f32.mrf.mxu0
        %v1726 = vadd.f32 0.0, %v1725
        %v1727 = vpop.f32.mrf.mxu0
        %1728 = vmatprep.mubr.bf16.mxu0 0
        %1729 = vmatmul.mubr.bf16.gmra.mxu0 %v1635
        %v1730 = vpop.f32.mrf.mxu0
        %v1731 = vadd.f32 0.0, %v1730
        %v1732 = vpop.f32.mrf.mxu0
        %v1733 = vpop.f32.mrf.mxu0
        %v1734 = vadd.f32 0.0, %v1733
        %v1735 = vpop.f32.mrf.mxu0
        %1736 = vdwg.mxu0
        %v1737 = vld [vmem:[#allocation2] sm:$0xff]
        %v1738 = vld [vmem:[#allocation2 + $0x8] sm:$0xff]
        %v1739 = vld [vmem:[#allocation2 + $0x10] sm:$0xff]
        %v1740 = vld [vmem:[#allocation2 + $0x18] sm:$0xff]
        %v1741 = vld [vmem:[#allocation2 + $0x20] sm:$0xff]
        %v1742 = vld [vmem:[#allocation2 + $0x28] sm:$0xff]
        %v1743 = vld [vmem:[#allocation2 + $0x30] sm:$0xff]
        %v1744 = vld [vmem:[#allocation2 + $0x38] sm:$0xff]
        %v1745 = vld [vmem:[#allocation2 + $0x40] sm:$0xff]
        %v1746 = vld [vmem:[#allocation2 + $0x48] sm:$0xff]
        %v1747 = vld [vmem:[#allocation2 + $0x50] sm:$0xff]
        %v1748 = vld [vmem:[#allocation2 + $0x58] sm:$0xff]
        %v1749 = vld [vmem:[#allocation2 + $0x60] sm:$0xff]
        %v1750 = vld [vmem:[#allocation2 + $0x68] sm:$0xff]
        %v1751 = vld [vmem:[#allocation2 + $0x70] sm:$0xff]
        %v1752 = vld [vmem:[#allocation2 + $0x78] sm:$0xff]
        %v1753 = vadd.f32 %v1737, %v1675
        %v1754 = vadd.f32 %v1738, %v1678
        %v1755 = vadd.f32 %v1739, %v1683
        %v1756 = vadd.f32 %v1740, %v1686
        %v1757 = vadd.f32 %v1741, %v1691
        %v1758 = vadd.f32 %v1742, %v1694
        %v1759 = vadd.f32 %v1743, %v1699
        %v1760 = vadd.f32 %v1744, %v1702
        %v1761 = vadd.f32 %v1745, %v1707
        %v1762 = vadd.f32 %v1746, %v1710
        %v1763 = vadd.f32 %v1747, %v1715
        %v1764 = vadd.f32 %v1748, %v1718
        %v1765 = vadd.f32 %v1749, %v1723
        %v1766 = vadd.f32 %v1750, %v1726
        %v1767 = vadd.f32 %v1751, %v1731
        %v1768 = vadd.f32 %v1752, %v1734
        %1769 = vst [vmem:[#allocation2] sm:$0xff] %v1753
        %1770 = vst [vmem:[#allocation2 + $0x8] sm:$0xff] %v1754
        %1771 = vst [vmem:[#allocation2 + $0x10] sm:$0xff] %v1755
        %1772 = vst [vmem:[#allocation2 + $0x18] sm:$0xff] %v1756
        %1773 = vst [vmem:[#allocation2 + $0x20] sm:$0xff] %v1757
        %1774 = vst [vmem:[#allocation2 + $0x28] sm:$0xff] %v1758
        %1775 = vst [vmem:[#allocation2 + $0x30] sm:$0xff] %v1759
        %1776 = vst [vmem:[#allocation2 + $0x38] sm:$0xff] %v1760
        %1777 = vst [vmem:[#allocation2 + $0x40] sm:$0xff] %v1761
        %1778 = vst [vmem:[#allocation2 + $0x48] sm:$0xff] %v1762
        %1779 = vst [vmem:[#allocation2 + $0x50] sm:$0xff] %v1763
        %1780 = vst [vmem:[#allocation2 + $0x58] sm:$0xff] %v1764
        %1781 = vst [vmem:[#allocation2 + $0x60] sm:$0xff] %v1765
        %1782 = vst [vmem:[#allocation2 + $0x68] sm:$0xff] %v1766
        %1783 = vst [vmem:[#allocation2 + $0x70] sm:$0xff] %v1767
        %1784 = vst [vmem:[#allocation2 + $0x78] sm:$0xff] %v1768
        %v1785 = vld [vmem:[%s1140] sm:$0xe]
        %v1786 = vld [vmem:[%s1140 + $0x4] sm:$0xf]
        %v1787 = vld [vmem:[%s1140 + $0x8] sm:$0x1]
        %v1788 = vld [vmem:[%s1140 + $0xc] sm:$0xe]
        %v1789 = vld [vmem:[%s1140 + $0x10] sm:$0xf]
        %v1790 = vld [vmem:[%s1140 + $0x14] sm:$0x1]
        %v1791 = vld [vmem:[%s1140 + $0x18] sm:$0xe]
        %v1792 = vld [vmem:[%s1140 + $0x1c] sm:$0xf]
        %v1793 = vld [vmem:[%s1140 + $0x20] sm:$0x1]
        %v1794 = vld [vmem:[%s1140 + $0x24] sm:$0xe]
        %v1795 = vld [vmem:[%s1140 + $0x28] sm:$0xf]
        %v1796 = vld [vmem:[%s1140 + $0x2c] sm:$0x1]
        %v1797 = vld [vmem:[%s1140 + $0x30] sm:$0xe]
        %v1798 = vld [vmem:[%s1140 + $0x34] sm:$0xf]
        %v1799 = vld [vmem:[%s1140 + $0x38] sm:$0x1]
        %v1800 = vld [vmem:[%s1140 + $0x3c] sm:$0xe]
        %v1801 = vld [vmem:[%s1140 + $0x40] sm:$0xf]
        %v1802 = vld [vmem:[%s1140 + $0x44] sm:$0x1]
        %v1803 = vld [vmem:[%s1140 + $0x48] sm:$0xe]
        %v1804 = vld [vmem:[%s1140 + $0x4c] sm:$0xf]
        %v1805 = vld [vmem:[%s1140 + $0x50] sm:$0x1]
        %v1806 = vld [vmem:[%s1140 + $0x54] sm:$0xe]
        %v1807 = vld [vmem:[%s1140 + $0x58] sm:$0xf]
        %v1808 = vld [vmem:[%s1140 + $0x5c] sm:$0x1]
        %v1833 = vrot.slane %v1785, 5
        %v1834 = vrot.slane %v1833, 4
        %v1835 = vrot.slane %v1786, 5
        %v1836 = vsel %vm882, %v1834, %v1835
        %v1837 = vrot.slane %v1835, 4
        %v1838 = vrot.slane %v1787, 5
        %v1839 = vsel %vm882, %v1837, %v1838
        %v1840 = vrot.slane %v1788, 5
        %v1841 = vrot.slane %v1840, 4
        %v1842 = vrot.slane %v1789, 5
        %v1843 = vsel %vm882, %v1841, %v1842
        %v1844 = vrot.slane %v1842, 4
        %v1845 = vrot.slane %v1790, 5
        %v1846 = vsel %vm882, %v1844, %v1845
        %v1847 = vrot.slane %v1791, 5
        %v1848 = vrot.slane %v1847, 4
        %v1849 = vrot.slane %v1792, 5
        %v1850 = vsel %vm882, %v1848, %v1849
        %v1851 = vrot.slane %v1849, 4
        %v1852 = vrot.slane %v1793, 5
        %v1853 = vsel %vm882, %v1851, %v1852
        %v1854 = vrot.slane %v1794, 5
        %v1855 = vrot.slane %v1854, 4
        %v1856 = vrot.slane %v1795, 5
        %v1857 = vsel %vm882, %v1855, %v1856
        %v1858 = vrot.slane %v1856, 4
        %v1859 = vrot.slane %v1796, 5
        %v1860 = vsel %vm882, %v1858, %v1859
        %v1861 = vrot.slane %v1797, 5
        %v1862 = vrot.slane %v1861, 4
        %v1863 = vrot.slane %v1798, 5
        %v1864 = vsel %vm882, %v1862, %v1863
        %v1865 = vrot.slane %v1863, 4
        %v1866 = vrot.slane %v1799, 5
        %v1867 = vsel %vm882, %v1865, %v1866
        %v1868 = vrot.slane %v1800, 5
        %v1869 = vrot.slane %v1868, 4
        %v1870 = vrot.slane %v1801, 5
        %v1871 = vsel %vm882, %v1869, %v1870
        %v1872 = vrot.slane %v1870, 4
        %v1873 = vrot.slane %v1802, 5
        %v1874 = vsel %vm882, %v1872, %v1873
        %v1875 = vrot.slane %v1803, 5
        %v1876 = vrot.slane %v1875, 4
        %v1877 = vrot.slane %v1804, 5
        %v1878 = vsel %vm882, %v1876, %v1877
        %v1879 = vrot.slane %v1877, 4
        %v1880 = vrot.slane %v1805, 5
        %v1881 = vsel %vm882, %v1879, %v1880
        %v1882 = vrot.slane %v1806, 5
        %v1883 = vrot.slane %v1882, 4
        %v1884 = vrot.slane %v1807, 5
        %v1885 = vsel %vm882, %v1883, %v1884
        %v1886 = vrot.slane %v1884, 4
        %v1887 = vrot.slane %v1808, 5
        %v1888 = vsel %vm882, %v1886, %v1887
        %s1889 = scalar_lea.vmem %s1, 10
        %v1890 = vld [vmem:[%s1889] sm:$0x3]
        %v1891 = vunpack.c.l.b16 %v1836
        %v1892 = vunpack.c.l.b16 %v1839
        %v1893 = vunpack.c.l.b16 %v1843
        %v1894 = vunpack.c.l.b16 %v1846
        %v1895 = vunpack.c.l.b16 %v1850
        %v1896 = vunpack.c.l.b16 %v1853
        %v1897 = vunpack.c.l.b16 %v1857
        %v1898 = vunpack.c.l.b16 %v1860
        %v1899 = vunpack.c.l.b16 %v1864
        %v1900 = vunpack.c.l.b16 %v1867
        %v1901 = vunpack.c.l.b16 %v1871
        %v1902 = vunpack.c.l.b16 %v1874
        %v1903 = vunpack.c.l.b16 %v1878
        %v1904 = vunpack.c.l.b16 %v1881
        %v1905 = vunpack.c.l.b16 %v1885
        %v1906 = vunpack.c.l.b16 %v1888
        %v1907 = vpack.c.b16 %v1892, %v1891
        %v1908 = vpack.c.b16 %v1894, %v1893
        %v1909 = vpack.c.b16 %v1896, %v1895
        %v1910 = vpack.c.b16 %v1898, %v1897
        %v1911 = vpack.c.b16 %v1900, %v1899
        %v1912 = vpack.c.b16 %v1902, %v1901
        %v1913 = vpack.c.b16 %v1904, %v1903
        %v1914 = vpack.c.b16 %v1906, %v1905
        %v1916 = vsel %vm273, %v1907, 0
        %v1919 = vsel %vm273, %v1908, 0
        %v1922 = vsel %vm273, %v1909, 0
        %v1925 = vsel %vm273, %v1910, 0
        %v1928 = vsel %vm273, %v1911, 0
        %v1931 = vsel %vm273, %v1912, 0
        %v1934 = vsel %vm273, %v1913, 0
        %v1937 = vsel %vm273, %v1914, 0
        %v1940 = vsel %vm298, %v1890, 0
        %1942 = vmatprep.subr.bf16.mxu0 0
        %1943 = vmatpush1.bf16.msra.mxu0 0
        %1944 = vmatprep.subr.bf16.mxu0 0
        %1945 = vmatpush1.bf16.msra.mxu0 0
        %1946 = vmatprep.subr.bf16.mxu0 0
        %1947 = vmatpush1.bf16.msra.mxu0 0
        %1948 = vmatprep.subr.bf16.mxu0 0
        %1949 = vmatpush1.bf16.msra.mxu0 0
        %1950 = vmatprep.subr.bf16.mxu0 0
        %1951 = vmatpush1.bf16.msra.mxu0 0
        %1952 = vmatprep.subr.bf16.mxu0 0
        %1953 = vmatpush1.bf16.msra.mxu0 0
        %1954 = vmatprep.subr.bf16.mxu0 0
        %1955 = vmatpush1.bf16.msra.mxu0 0
        %1956 = vmatprep.subr.bf16.mxu0 0
        %1957 = vmatpush1.bf16.msra.mxu0 %v1940
        %1958 = vmatprep.subr.bf16.mxu0 0
        %1959 = vmatpush2.bf16.msra.mxu0 0
        %1960 = vmatprep.subr.bf16.mxu0 0
        %1961 = vmatpush2.bf16.msra.mxu0 0
        %1962 = vmatprep.subr.bf16.mxu0 0
        %1963 = vmatpush2.bf16.msra.mxu0 0
        %1964 = vmatprep.subr.bf16.mxu0 0
        %1965 = vmatpush2.bf16.msra.mxu0 0
        %1966 = vmatprep.subr.bf16.mxu0 0
        %1967 = vmatpush2.bf16.msra.mxu0 0
        %1968 = vmatprep.subr.bf16.mxu0 0
        %1969 = vmatpush2.bf16.msra.mxu0 0
        %1970 = vmatprep.subr.bf16.mxu0 0
        %1971 = vmatpush2.bf16.msra.mxu0 0
        %1972 = vmatprep.subr.bf16.mxu0 0
        %1973 = vmatpush2.bf16.msra.mxu0 0
        %1974 = vmatprep.mubr.bf16.mxu0 0
        %1975 = vmatmul.mubr.bf16.gmra.mxu0 %v1916
        %v1976 = vpop.f32.mrf.mxu0
        %v1977 = vadd.f32 0.0, %v1976
        %v1978 = vpop.f32.mrf.mxu0
        %v1979 = vpop.f32.mrf.mxu0
        %v1980 = vadd.f32 0.0, %v1979
        %v1981 = vpop.f32.mrf.mxu0
        %1982 = vmatprep.mubr.bf16.mxu0 0
        %1983 = vmatmul.mubr.bf16.gmra.mxu0 %v1919
        %v1984 = vpop.f32.mrf.mxu0
        %v1985 = vadd.f32 0.0, %v1984
        %v1986 = vpop.f32.mrf.mxu0
        %v1987 = vpop.f32.mrf.mxu0
        %v1988 = vadd.f32 0.0, %v1987
        %v1989 = vpop.f32.mrf.mxu0
        %1990 = vmatprep.mubr.bf16.mxu0 0
        %1991 = vmatmul.mubr.bf16.gmra.mxu0 %v1922
        %v1992 = vpop.f32.mrf.mxu0
        %v1993 = vadd.f32 0.0, %v1992
        %v1994 = vpop.f32.mrf.mxu0
        %v1995 = vpop.f32.mrf.mxu0
        %v1996 = vadd.f32 0.0, %v1995
        %v1997 = vpop.f32.mrf.mxu0
        %1998 = vmatprep.mubr.bf16.mxu0 0
        %1999 = vmatmul.mubr.bf16.gmra.mxu0 %v1925
        %v2000 = vpop.f32.mrf.mxu0
        %v2001 = vadd.f32 0.0, %v2000
        %v2002 = vpop.f32.mrf.mxu0
        %v2003 = vpop.f32.mrf.mxu0
        %v2004 = vadd.f32 0.0, %v2003
        %v2005 = vpop.f32.mrf.mxu0
        %2006 = vmatprep.mubr.bf16.mxu0 0
        %2007 = vmatmul.mubr.bf16.gmra.mxu0 %v1928
        %v2008 = vpop.f32.mrf.mxu0
        %v2009 = vadd.f32 0.0, %v2008
        %v2010 = vpop.f32.mrf.mxu0
        %v2011 = vpop.f32.mrf.mxu0
        %v2012 = vadd.f32 0.0, %v2011
        %v2013 = vpop.f32.mrf.mxu0
        %2014 = vmatprep.mubr.bf16.mxu0 0
        %2015 = vmatmul.mubr.bf16.gmra.mxu0 %v1931
        %v2016 = vpop.f32.mrf.mxu0
        %v2017 = vadd.f32 0.0, %v2016
        %v2018 = vpop.f32.mrf.mxu0
        %v2019 = vpop.f32.mrf.mxu0
        %v2020 = vadd.f32 0.0, %v2019
        %v2021 = vpop.f32.mrf.mxu0
        %2022 = vmatprep.mubr.bf16.mxu0 0
        %2023 = vmatmul.mubr.bf16.gmra.mxu0 %v1934
        %v2024 = vpop.f32.mrf.mxu0
        %v2025 = vadd.f32 0.0, %v2024
        %v2026 = vpop.f32.mrf.mxu0
        %v2027 = vpop.f32.mrf.mxu0
        %v2028 = vadd.f32 0.0, %v2027
        %v2029 = vpop.f32.mrf.mxu0
        %2030 = vmatprep.mubr.bf16.mxu0 0
        %2031 = vmatmul.mubr.bf16.gmra.mxu0 %v1937
        %v2032 = vpop.f32.mrf.mxu0
        %v2033 = vadd.f32 0.0, %v2032
        %v2034 = vpop.f32.mrf.mxu0
        %v2035 = vpop.f32.mrf.mxu0
        %v2036 = vadd.f32 0.0, %v2035
        %v2037 = vpop.f32.mrf.mxu0
        %2038 = vdwg.mxu0
        %v2039 = vld [vmem:[#allocation2] sm:$0xff]
        %v2040 = vld [vmem:[#allocation2 + $0x8] sm:$0xff]
        %v2041 = vld [vmem:[#allocation2 + $0x10] sm:$0xff]
        %v2042 = vld [vmem:[#allocation2 + $0x18] sm:$0xff]
        %v2043 = vld [vmem:[#allocation2 + $0x20] sm:$0xff]
        %v2044 = vld [vmem:[#allocation2 + $0x28] sm:$0xff]
        %v2045 = vld [vmem:[#allocation2 + $0x30] sm:$0xff]
        %v2046 = vld [vmem:[#allocation2 + $0x38] sm:$0xff]
        %v2047 = vld [vmem:[#allocation2 + $0x40] sm:$0xff]
        %v2048 = vld [vmem:[#allocation2 + $0x48] sm:$0xff]
        %v2049 = vld [vmem:[#allocation2 + $0x50] sm:$0xff]
        %v2050 = vld [vmem:[#allocation2 + $0x58] sm:$0xff]
        %v2051 = vld [vmem:[#allocation2 + $0x60] sm:$0xff]
        %v2052 = vld [vmem:[#allocation2 + $0x68] sm:$0xff]
        %v2053 = vld [vmem:[#allocation2 + $0x70] sm:$0xff]
        %v2054 = vld [vmem:[#allocation2 + $0x78] sm:$0xff]
        %v2055 = vadd.f32 %v2039, %v1977
        %v2056 = vadd.f32 %v2040, %v1980
        %v2057 = vadd.f32 %v2041, %v1985
        %v2058 = vadd.f32 %v2042, %v1988
        %v2059 = vadd.f32 %v2043, %v1993
        %v2060 = vadd.f32 %v2044, %v1996
        %v2061 = vadd.f32 %v2045, %v2001
        %v2062 = vadd.f32 %v2046, %v2004
        %v2063 = vadd.f32 %v2047, %v2009
        %v2064 = vadd.f32 %v2048, %v2012
        %v2065 = vadd.f32 %v2049, %v2017
        %v2066 = vadd.f32 %v2050, %v2020
        %v2067 = vadd.f32 %v2051, %v2025
        %v2068 = vadd.f32 %v2052, %v2028
        %v2069 = vadd.f32 %v2053, %v2033
        %v2070 = vadd.f32 %v2054, %v2036
        %2071 = vst [vmem:[#allocation2] sm:$0xff] %v2055
        %2072 = vst [vmem:[#allocation2 + $0x8] sm:$0xff] %v2056
        %2073 = vst [vmem:[#allocation2 + $0x10] sm:$0xff] %v2057
        %2074 = vst [vmem:[#allocation2 + $0x18] sm:$0xff] %v2058
        %2075 = vst [vmem:[#allocation2 + $0x20] sm:$0xff] %v2059
        %2076 = vst [vmem:[#allocation2 + $0x28] sm:$0xff] %v2060
        %2077 = vst [vmem:[#allocation2 + $0x30] sm:$0xff] %v2061
        %2078 = vst [vmem:[#allocation2 + $0x38] sm:$0xff] %v2062
        %2079 = vst [vmem:[#allocation2 + $0x40] sm:$0xff] %v2063
        %2080 = vst [vmem:[#allocation2 + $0x48] sm:$0xff] %v2064
        %2081 = vst [vmem:[#allocation2 + $0x50] sm:$0xff] %v2065
        %2082 = vst [vmem:[#allocation2 + $0x58] sm:$0xff] %v2066
        %2083 = vst [vmem:[#allocation2 + $0x60] sm:$0xff] %v2067
        %2084 = vst [vmem:[#allocation2 + $0x68] sm:$0xff] %v2068
        %2085 = vst [vmem:[#allocation2 + $0x70] sm:$0xff] %v2069
        %2086 = vst [vmem:[#allocation2 + $0x78] sm:$0xff] %v2070
        %s2087 = sadd.s32 %s212, 2
        %s2088 = smul.u32 %s2087, 3
        %s2089 = smul.addr %s2088, 4
        %s2090 = scalar_lea.vmem %s209, %s2089
        %v2091 = vld [vmem:[%s2090] sm:$0xf]
        %v2092 = vld [vmem:[%s2090 + $0x4] sm:$0xf]
        %v2093 = vld [vmem:[%s2090 + $0xc] sm:$0xf]
        %v2094 = vld [vmem:[%s2090 + $0x10] sm:$0xf]
        %v2095 = vld [vmem:[%s2090 + $0x18] sm:$0xf]
        %v2096 = vld [vmem:[%s2090 + $0x1c] sm:$0xf]
        %v2097 = vld [vmem:[%s2090 + $0x24] sm:$0xf]
        %v2098 = vld [vmem:[%s2090 + $0x28] sm:$0xf]
        %v2099 = vld [vmem:[%s2090 + $0x30] sm:$0xf]
        %v2100 = vld [vmem:[%s2090 + $0x34] sm:$0xf]
        %v2101 = vld [vmem:[%s2090 + $0x3c] sm:$0xf]
        %v2102 = vld [vmem:[%s2090 + $0x40] sm:$0xf]
        %v2103 = vld [vmem:[%s2090 + $0x48] sm:$0xf]
        %v2104 = vld [vmem:[%s2090 + $0x4c] sm:$0xf]
        %v2105 = vld [vmem:[%s2090 + $0x54] sm:$0xf]
        %v2106 = vld [vmem:[%s2090 + $0x58] sm:$0xf]
        %s2107 = scalar_lea.vmem %s1, 12
        %v2108 = vld [vmem:[%s2107] sm:$0x3]
        %v2125 = vunpack.c.l.b16 %v2091
        %v2126 = vunpack.c.l.b16 %v2092
        %v2127 = vunpack.c.l.b16 %v2093
        %v2128 = vunpack.c.l.b16 %v2094
        %v2129 = vunpack.c.l.b16 %v2095
        %v2130 = vunpack.c.l.b16 %v2096
        %v2131 = vunpack.c.l.b16 %v2097
        %v2132 = vunpack.c.l.b16 %v2098
        %v2133 = vunpack.c.l.b16 %v2099
        %v2134 = vunpack.c.l.b16 %v2100
        %v2135 = vunpack.c.l.b16 %v2101
        %v2136 = vunpack.c.l.b16 %v2102
        %v2137 = vunpack.c.l.b16 %v2103
        %v2138 = vunpack.c.l.b16 %v2104
        %v2139 = vunpack.c.l.b16 %v2105
        %v2140 = vunpack.c.l.b16 %v2106
        %v2141 = vpack.c.b16 %v2126, %v2125
        %v2142 = vpack.c.b16 %v2128, %v2127
        %v2143 = vpack.c.b16 %v2130, %v2129
        %v2144 = vpack.c.b16 %v2132, %v2131
        %v2145 = vpack.c.b16 %v2134, %v2133
        %v2146 = vpack.c.b16 %v2136, %v2135
        %v2147 = vpack.c.b16 %v2138, %v2137
        %v2148 = vpack.c.b16 %v2140, %v2139
        %v2150 = vsel %vm273, %v2141, 0
        %v2153 = vsel %vm273, %v2142, 0
        %v2156 = vsel %vm273, %v2143, 0
        %v2159 = vsel %vm273, %v2144, 0
        %v2162 = vsel %vm273, %v2145, 0
        %v2165 = vsel %vm273, %v2146, 0
        %v2168 = vsel %vm273, %v2147, 0
        %v2171 = vsel %vm273, %v2148, 0
        %v2174 = vsel %vm298, %v2108, 0
        %2176 = vmatprep.subr.bf16.mxu0 0
        %2177 = vmatpush1.bf16.msra.mxu0 0
        %2178 = vmatprep.subr.bf16.mxu0 0
        %2179 = vmatpush1.bf16.msra.mxu0 0
        %2180 = vmatprep.subr.bf16.mxu0 0
        %2181 = vmatpush1.bf16.msra.mxu0 0
        %2182 = vmatprep.subr.bf16.mxu0 0
        %2183 = vmatpush1.bf16.msra.mxu0 0
        %2184 = vmatprep.subr.bf16.mxu0 0
        %2185 = vmatpush1.bf16.msra.mxu0 0
        %2186 = vmatprep.subr.bf16.mxu0 0
        %2187 = vmatpush1.bf16.msra.mxu0 0
        %2188 = vmatprep.subr.bf16.mxu0 0
        %2189 = vmatpush1.bf16.msra.mxu0 0
        %2190 = vmatprep.subr.bf16.mxu0 0
        %2191 = vmatpush1.bf16.msra.mxu0 %v2174
        %2192 = vmatprep.subr.bf16.mxu0 0
        %2193 = vmatpush2.bf16.msra.mxu0 0
        %2194 = vmatprep.subr.bf16.mxu0 0
        %2195 = vmatpush2.bf16.msra.mxu0 0
        %2196 = vmatprep.subr.bf16.mxu0 0
        %2197 = vmatpush2.bf16.msra.mxu0 0
        %2198 = vmatprep.subr.bf16.mxu0 0
        %2199 = vmatpush2.bf16.msra.mxu0 0
        %2200 = vmatprep.subr.bf16.mxu0 0
        %2201 = vmatpush2.bf16.msra.mxu0 0
        %2202 = vmatprep.subr.bf16.mxu0 0
        %2203 = vmatpush2.bf16.msra.mxu0 0
        %2204 = vmatprep.subr.bf16.mxu0 0
        %2205 = vmatpush2.bf16.msra.mxu0 0
        %2206 = vmatprep.subr.bf16.mxu0 0
        %2207 = vmatpush2.bf16.msra.mxu0 0
        %2208 = vmatprep.mubr.bf16.mxu0 0
        %2209 = vmatmul.mubr.bf16.gmra.mxu0 %v2150
        %v2210 = vpop.f32.mrf.mxu0
        %v2211 = vadd.f32 0.0, %v2210
        %v2212 = vpop.f32.mrf.mxu0
        %v2213 = vpop.f32.mrf.mxu0
        %v2214 = vadd.f32 0.0, %v2213
        %v2215 = vpop.f32.mrf.mxu0
        %2216 = vmatprep.mubr.bf16.mxu0 0
        %2217 = vmatmul.mubr.bf16.gmra.mxu0 %v2153
        %v2218 = vpop.f32.mrf.mxu0
        %v2219 = vadd.f32 0.0, %v2218
        %v2220 = vpop.f32.mrf.mxu0
        %v2221 = vpop.f32.mrf.mxu0
        %v2222 = vadd.f32 0.0, %v2221
        %v2223 = vpop.f32.mrf.mxu0
        %2224 = vmatprep.mubr.bf16.mxu0 0
        %2225 = vmatmul.mubr.bf16.gmra.mxu0 %v2156
        %v2226 = vpop.f32.mrf.mxu0
        %v2227 = vadd.f32 0.0, %v2226
        %v2228 = vpop.f32.mrf.mxu0
        %v2229 = vpop.f32.mrf.mxu0
        %v2230 = vadd.f32 0.0, %v2229
        %v2231 = vpop.f32.mrf.mxu0
        %2232 = vmatprep.mubr.bf16.mxu0 0
        %2233 = vmatmul.mubr.bf16.gmra.mxu0 %v2159
        %v2234 = vpop.f32.mrf.mxu0
        %v2235 = vadd.f32 0.0, %v2234
        %v2236 = vpop.f32.mrf.mxu0
        %v2237 = vpop.f32.mrf.mxu0
        %v2238 = vadd.f32 0.0, %v2237
        %v2239 = vpop.f32.mrf.mxu0
        %2240 = vmatprep.mubr.bf16.mxu0 0
        %2241 = vmatmul.mubr.bf16.gmra.mxu0 %v2162
        %v2242 = vpop.f32.mrf.mxu0
        %v2243 = vadd.f32 0.0, %v2242
        %v2244 = vpop.f32.mrf.mxu0
        %v2245 = vpop.f32.mrf.mxu0
        %v2246 = vadd.f32 0.0, %v2245
        %v2247 = vpop.f32.mrf.mxu0
        %2248 = vmatprep.mubr.bf16.mxu0 0
        %2249 = vmatmul.mubr.bf16.gmra.mxu0 %v2165
        %v2250 = vpop.f32.mrf.mxu0
        %v2251 = vadd.f32 0.0, %v2250
        %v2252 = vpop.f32.mrf.mxu0
        %v2253 = vpop.f32.mrf.mxu0
        %v2254 = vadd.f32 0.0, %v2253
        %v2255 = vpop.f32.mrf.mxu0
        %2256 = vmatprep.mubr.bf16.mxu0 0
        %2257 = vmatmul.mubr.bf16.gmra.mxu0 %v2168
        %v2258 = vpop.f32.mrf.mxu0
        %v2259 = vadd.f32 0.0, %v2258
        %v2260 = vpop.f32.mrf.mxu0
        %v2261 = vpop.f32.mrf.mxu0
        %v2262 = vadd.f32 0.0, %v2261
        %v2263 = vpop.f32.mrf.mxu0
        %2264 = vmatprep.mubr.bf16.mxu0 0
        %2265 = vmatmul.mubr.bf16.gmra.mxu0 %v2171
        %v2266 = vpop.f32.mrf.mxu0
        %v2267 = vadd.f32 0.0, %v2266
        %v2268 = vpop.f32.mrf.mxu0
        %v2269 = vpop.f32.mrf.mxu0
        %v2270 = vadd.f32 0.0, %v2269
        %v2271 = vpop.f32.mrf.mxu0
        %2272 = vdwg.mxu0
        %v2273 = vld [vmem:[#allocation2] sm:$0xff]
        %v2274 = vld [vmem:[#allocation2 + $0x8] sm:$0xff]
        %v2275 = vld [vmem:[#allocation2 + $0x10] sm:$0xff]
        %v2276 = vld [vmem:[#allocation2 + $0x18] sm:$0xff]
        %v2277 = vld [vmem:[#allocation2 + $0x20] sm:$0xff]
        %v2278 = vld [vmem:[#allocation2 + $0x28] sm:$0xff]
        %v2279 = vld [vmem:[#allocation2 + $0x30] sm:$0xff]
        %v2280 = vld [vmem:[#allocation2 + $0x38] sm:$0xff]
        %v2281 = vld [vmem:[#allocation2 + $0x40] sm:$0xff]
        %v2282 = vld [vmem:[#allocation2 + $0x48] sm:$0xff]
        %v2283 = vld [vmem:[#allocation2 + $0x50] sm:$0xff]
        %v2284 = vld [vmem:[#allocation2 + $0x58] sm:$0xff]
        %v2285 = vld [vmem:[#allocation2 + $0x60] sm:$0xff]
        %v2286 = vld [vmem:[#allocation2 + $0x68] sm:$0xff]
        %v2287 = vld [vmem:[#allocation2 + $0x70] sm:$0xff]
        %v2288 = vld [vmem:[#allocation2 + $0x78] sm:$0xff]
        %v2289 = vadd.f32 %v2273, %v2211
        %v2290 = vadd.f32 %v2274, %v2214
        %v2291 = vadd.f32 %v2275, %v2219
        %v2292 = vadd.f32 %v2276, %v2222
        %v2293 = vadd.f32 %v2277, %v2227
        %v2294 = vadd.f32 %v2278, %v2230
        %v2295 = vadd.f32 %v2279, %v2235
        %v2296 = vadd.f32 %v2280, %v2238
        %v2297 = vadd.f32 %v2281, %v2243
        %v2298 = vadd.f32 %v2282, %v2246
        %v2299 = vadd.f32 %v2283, %v2251
        %v2300 = vadd.f32 %v2284, %v2254
        %v2301 = vadd.f32 %v2285, %v2259
        %v2302 = vadd.f32 %v2286, %v2262
        %v2303 = vadd.f32 %v2287, %v2267
        %v2304 = vadd.f32 %v2288, %v2270
        %2305 = vst [vmem:[#allocation2] sm:$0xff] %v2289
        %2306 = vst [vmem:[#allocation2 + $0x8] sm:$0xff] %v2290
        %2307 = vst [vmem:[#allocation2 + $0x10] sm:$0xff] %v2291
        %2308 = vst [vmem:[#allocation2 + $0x18] sm:$0xff] %v2292
        %2309 = vst [vmem:[#allocation2 + $0x20] sm:$0xff] %v2293
        %2310 = vst [vmem:[#allocation2 + $0x28] sm:$0xff] %v2294
        %2311 = vst [vmem:[#allocation2 + $0x30] sm:$0xff] %v2295
        %2312 = vst [vmem:[#allocation2 + $0x38] sm:$0xff] %v2296
        %2313 = vst [vmem:[#allocation2 + $0x40] sm:$0xff] %v2297
        %2314 = vst [vmem:[#allocation2 + $0x48] sm:$0xff] %v2298
        %2315 = vst [vmem:[#allocation2 + $0x50] sm:$0xff] %v2299
        %2316 = vst [vmem:[#allocation2 + $0x58] sm:$0xff] %v2300
        %2317 = vst [vmem:[#allocation2 + $0x60] sm:$0xff] %v2301
        %2318 = vst [vmem:[#allocation2 + $0x68] sm:$0xff] %v2302
        %2319 = vst [vmem:[#allocation2 + $0x70] sm:$0xff] %v2303
        %2320 = vst [vmem:[#allocation2 + $0x78] sm:$0xff] %v2304
        %v2321 = vld [vmem:[%s2090] sm:$0xf]
        %v2322 = vld [vmem:[%s2090 + $0x4] sm:$0xf]
        %v2323 = vld [vmem:[%s2090 + $0x8] sm:$0x1]
        %v2324 = vld [vmem:[%s2090 + $0xc] sm:$0xf]
        %v2325 = vld [vmem:[%s2090 + $0x10] sm:$0xf]
        %v2326 = vld [vmem:[%s2090 + $0x14] sm:$0x1]
        %v2327 = vld [vmem:[%s2090 + $0x18] sm:$0xf]
        %v2328 = vld [vmem:[%s2090 + $0x1c] sm:$0xf]
        %v2329 = vld [vmem:[%s2090 + $0x20] sm:$0x1]
        %v2330 = vld [vmem:[%s2090 + $0x24] sm:$0xf]
        %v2331 = vld [vmem:[%s2090 + $0x28] sm:$0xf]
        %v2332 = vld [vmem:[%s2090 + $0x2c] sm:$0x1]
        %v2333 = vld [vmem:[%s2090 + $0x30] sm:$0xf]
        %v2334 = vld [vmem:[%s2090 + $0x34] sm:$0xf]
        %v2335 = vld [vmem:[%s2090 + $0x38] sm:$0x1]
        %v2336 = vld [vmem:[%s2090 + $0x3c] sm:$0xf]
        %v2337 = vld [vmem:[%s2090 + $0x40] sm:$0xf]
        %v2338 = vld [vmem:[%s2090 + $0x44] sm:$0x1]
        %v2339 = vld [vmem:[%s2090 + $0x48] sm:$0xf]
        %v2340 = vld [vmem:[%s2090 + $0x4c] sm:$0xf]
        %v2341 = vld [vmem:[%s2090 + $0x50] sm:$0x1]
        %v2342 = vld [vmem:[%s2090 + $0x54] sm:$0xf]
        %v2343 = vld [vmem:[%s2090 + $0x58] sm:$0xf]
        %v2344 = vld [vmem:[%s2090 + $0x5c] sm:$0x1]
        %v2346 = vshrl.u32 %v2321, 16
        %v2348 = vrot.slane %v2346, 4
        %v2349 = vshll.u32 %v2321, 16
        %v2351 = vrot.slane %v2349, 5
        %v2352 = vor.u32 %v2348, %v2351
        %v2353 = vrot.slane %v2352, 4
        %v2355 = vshll.u32 %v2322, 16
        %v2357 = vrot.slane %v2355, 5
        %v2358 = vsel %vm441, %v2353, %v2357
        %v2359 = vshrl.u32 %v2322, 16
        %v2361 = vrot.slane %v2359, 4
        %v2362 = vor.u32 %v2361, %v2357
        %v2363 = vrot.slane %v2362, 4
        %v2365 = vshll.u32 %v2323, 16
        %v2367 = vrot.slane %v2365, 5
        %v2368 = vsel %vm441, %v2363, %v2367
        %v2370 = vshrl.u32 %v2324, 16
        %v2372 = vrot.slane %v2370, 4
        %v2373 = vshll.u32 %v2324, 16
        %v2375 = vrot.slane %v2373, 5
        %v2376 = vor.u32 %v2372, %v2375
        %v2377 = vrot.slane %v2376, 4
        %v2379 = vshll.u32 %v2325, 16
        %v2381 = vrot.slane %v2379, 5
        %v2382 = vsel %vm441, %v2377, %v2381
        %v2383 = vshrl.u32 %v2325, 16
        %v2385 = vrot.slane %v2383, 4
        %v2386 = vor.u32 %v2385, %v2381
        %v2387 = vrot.slane %v2386, 4
        %v2389 = vshll.u32 %v2326, 16
        %v2391 = vrot.slane %v2389, 5
        %v2392 = vsel %vm441, %v2387, %v2391
        %v2394 = vshrl.u32 %v2327, 16
        %v2396 = vrot.slane %v2394, 4
        %v2397 = vshll.u32 %v2327, 16
        %v2399 = vrot.slane %v2397, 5
        %v2400 = vor.u32 %v2396, %v2399
        %v2401 = vrot.slane %v2400, 4
        %v2403 = vshll.u32 %v2328, 16
        %v2405 = vrot.slane %v2403, 5
        %v2406 = vsel %vm441, %v2401, %v2405
        %v2407 = vshrl.u32 %v2328, 16
        %v2409 = vrot.slane %v2407, 4
        %v2410 = vor.u32 %v2409, %v2405
        %v2411 = vrot.slane %v2410, 4
        %v2413 = vshll.u32 %v2329, 16
        %v2415 = vrot.slane %v2413, 5
        %v2416 = vsel %vm441, %v2411, %v2415
        %v2418 = vshrl.u32 %v2330, 16
        %v2420 = vrot.slane %v2418, 4
        %v2421 = vshll.u32 %v2330, 16
        %v2423 = vrot.slane %v2421, 5
        %v2424 = vor.u32 %v2420, %v2423
        %v2425 = vrot.slane %v2424, 4
        %v2427 = vshll.u32 %v2331, 16
        %v2429 = vrot.slane %v2427, 5
        %v2430 = vsel %vm441, %v2425, %v2429
        %v2431 = vshrl.u32 %v2331, 16
        %v2433 = vrot.slane %v2431, 4
        %v2434 = vor.u32 %v2433, %v2429
        %v2435 = vrot.slane %v2434, 4
        %v2437 = vshll.u32 %v2332, 16
        %v2439 = vrot.slane %v2437, 5
        %v2440 = vsel %vm441, %v2435, %v2439
        %v2442 = vshrl.u32 %v2333, 16
        %v2444 = vrot.slane %v2442, 4
        %v2445 = vshll.u32 %v2333, 16
        %v2447 = vrot.slane %v2445, 5
        %v2448 = vor.u32 %v2444, %v2447
        %v2449 = vrot.slane %v2448, 4
        %v2451 = vshll.u32 %v2334, 16
        %v2453 = vrot.slane %v2451, 5
        %v2454 = vsel %vm441, %v2449, %v2453
        %v2455 = vshrl.u32 %v2334, 16
        %v2457 = vrot.slane %v2455, 4
        %v2458 = vor.u32 %v2457, %v2453
        %v2459 = vrot.slane %v2458, 4
        %v2461 = vshll.u32 %v2335, 16
        %v2463 = vrot.slane %v2461, 5
        %v2464 = vsel %vm441, %v2459, %v2463
        %v2466 = vshrl.u32 %v2336, 16
        %v2468 = vrot.slane %v2466, 4
        %v2469 = vshll.u32 %v2336, 16
        %v2471 = vrot.slane %v2469, 5
        %v2472 = vor.u32 %v2468, %v2471
        %v2473 = vrot.slane %v2472, 4
        %v2475 = vshll.u32 %v2337, 16
        %v2477 = vrot.slane %v2475, 5
        %v2478 = vsel %vm441, %v2473, %v2477
        %v2479 = vshrl.u32 %v2337, 16
        %v2481 = vrot.slane %v2479, 4
        %v2482 = vor.u32 %v2481, %v2477
        %v2483 = vrot.slane %v2482, 4
        %v2485 = vshll.u32 %v2338, 16
        %v2487 = vrot.slane %v2485, 5
        %v2488 = vsel %vm441, %v2483, %v2487
        %v2490 = vshrl.u32 %v2339, 16
        %v2492 = vrot.slane %v2490, 4
        %v2493 = vshll.u32 %v2339, 16
        %v2495 = vrot.slane %v2493, 5
        %v2496 = vor.u32 %v2492, %v2495
        %v2497 = vrot.slane %v2496, 4
        %v2499 = vshll.u32 %v2340, 16
        %v2501 = vrot.slane %v2499, 5
        %v2502 = vsel %vm441, %v2497, %v2501
        %v2503 = vshrl.u32 %v2340, 16
        %v2505 = vrot.slane %v2503, 4
        %v2506 = vor.u32 %v2505, %v2501
        %v2507 = vrot.slane %v2506, 4
        %v2509 = vshll.u32 %v2341, 16
        %v2511 = vrot.slane %v2509, 5
        %v2512 = vsel %vm441, %v2507, %v2511
        %v2514 = vshrl.u32 %v2342, 16
        %v2516 = vrot.slane %v2514, 4
        %v2517 = vshll.u32 %v2342, 16
        %v2519 = vrot.slane %v2517, 5
        %v2520 = vor.u32 %v2516, %v2519
        %v2521 = vrot.slane %v2520, 4
        %v2523 = vshll.u32 %v2343, 16
        %v2525 = vrot.slane %v2523, 5
        %v2526 = vsel %vm441, %v2521, %v2525
        %v2527 = vshrl.u32 %v2343, 16
        %v2529 = vrot.slane %v2527, 4
        %v2530 = vor.u32 %v2529, %v2525
        %v2531 = vrot.slane %v2530, 4
        %v2533 = vshll.u32 %v2344, 16
        %v2535 = vrot.slane %v2533, 5
        %v2536 = vsel %vm441, %v2531, %v2535
        %s2537 = scalar_lea.vmem %s1, 14
        %v2538 = vld [vmem:[%s2537] sm:$0x3]
        %v2539 = vunpack.c.l.b16 %v2358
        %v2540 = vunpack.c.l.b16 %v2368
        %v2541 = vunpack.c.l.b16 %v2382
        %v2542 = vunpack.c.l.b16 %v2392
        %v2543 = vunpack.c.l.b16 %v2406
        %v2544 = vunpack.c.l.b16 %v2416
        %v2545 = vunpack.c.l.b16 %v2430
        %v2546 = vunpack.c.l.b16 %v2440
        %v2547 = vunpack.c.l.b16 %v2454
        %v2548 = vunpack.c.l.b16 %v2464
        %v2549 = vunpack.c.l.b16 %v2478
        %v2550 = vunpack.c.l.b16 %v2488
        %v2551 = vunpack.c.l.b16 %v2502
        %v2552 = vunpack.c.l.b16 %v2512
        %v2553 = vunpack.c.l.b16 %v2526
        %v2554 = vunpack.c.l.b16 %v2536
        %v2555 = vpack.c.b16 %v2540, %v2539
        %v2556 = vpack.c.b16 %v2542, %v2541
        %v2557 = vpack.c.b16 %v2544, %v2543
        %v2558 = vpack.c.b16 %v2546, %v2545
        %v2559 = vpack.c.b16 %v2548, %v2547
        %v2560 = vpack.c.b16 %v2550, %v2549
        %v2561 = vpack.c.b16 %v2552, %v2551
        %v2562 = vpack.c.b16 %v2554, %v2553
        %v2564 = vsel %vm273, %v2555, 0
        %v2567 = vsel %vm273, %v2556, 0
        %v2570 = vsel %vm273, %v2557, 0
        %v2573 = vsel %vm273, %v2558, 0
        %v2576 = vsel %vm273, %v2559, 0
        %v2579 = vsel %vm273, %v2560, 0
        %v2582 = vsel %vm273, %v2561, 0
        %v2585 = vsel %vm273, %v2562, 0
        %v2588 = vsel %vm298, %v2538, 0
        %2590 = vmatprep.subr.bf16.mxu0 0
        %2591 = vmatpush1.bf16.msra.mxu0 0
        %2592 = vmatprep.subr.bf16.mxu0 0
        %2593 = vmatpush1.bf16.msra.mxu0 0
        %2594 = vmatprep.subr.bf16.mxu0 0
        %2595 = vmatpush1.bf16.msra.mxu0 0
        %2596 = vmatprep.subr.bf16.mxu0 0
        %2597 = vmatpush1.bf16.msra.mxu0 0
        %2598 = vmatprep.subr.bf16.mxu0 0
        %2599 = vmatpush1.bf16.msra.mxu0 0
        %2600 = vmatprep.subr.bf16.mxu0 0
        %2601 = vmatpush1.bf16.msra.mxu0 0
        %2602 = vmatprep.subr.bf16.mxu0 0
        %2603 = vmatpush1.bf16.msra.mxu0 0
        %2604 = vmatprep.subr.bf16.mxu0 0
        %2605 = vmatpush1.bf16.msra.mxu0 %v2588
        %2606 = vmatprep.subr.bf16.mxu0 0
        %2607 = vmatpush2.bf16.msra.mxu0 0
        %2608 = vmatprep.subr.bf16.mxu0 0
        %2609 = vmatpush2.bf16.msra.mxu0 0
        %2610 = vmatprep.subr.bf16.mxu0 0
        %2611 = vmatpush2.bf16.msra.mxu0 0
        %2612 = vmatprep.subr.bf16.mxu0 0
        %2613 = vmatpush2.bf16.msra.mxu0 0
        %2614 = vmatprep.subr.bf16.mxu0 0
        %2615 = vmatpush2.bf16.msra.mxu0 0
        %2616 = vmatprep.subr.bf16.mxu0 0
        %2617 = vmatpush2.bf16.msra.mxu0 0
        %2618 = vmatprep.subr.bf16.mxu0 0
        %2619 = vmatpush2.bf16.msra.mxu0 0
        %2620 = vmatprep.subr.bf16.mxu0 0
        %2621 = vmatpush2.bf16.msra.mxu0 0
        %2622 = vmatprep.mubr.bf16.mxu0 0
        %2623 = vmatmul.mubr.bf16.gmra.mxu0 %v2564
        %v2624 = vpop.f32.mrf.mxu0
        %v2625 = vadd.f32 0.0, %v2624
        %v2626 = vpop.f32.mrf.mxu0
        %v2627 = vpop.f32.mrf.mxu0
        %v2628 = vadd.f32 0.0, %v2627
        %v2629 = vpop.f32.mrf.mxu0
        %2630 = vmatprep.mubr.bf16.mxu0 0
        %2631 = vmatmul.mubr.bf16.gmra.mxu0 %v2567
        %v2632 = vpop.f32.mrf.mxu0
        %v2633 = vadd.f32 0.0, %v2632
        %v2634 = vpop.f32.mrf.mxu0
        %v2635 = vpop.f32.mrf.mxu0
        %v2636 = vadd.f32 0.0, %v2635
        %v2637 = vpop.f32.mrf.mxu0
        %2638 = vmatprep.mubr.bf16.mxu0 0
        %2639 = vmatmul.mubr.bf16.gmra.mxu0 %v2570
        %v2640 = vpop.f32.mrf.mxu0
        %v2641 = vadd.f32 0.0, %v2640
        %v2642 = vpop.f32.mrf.mxu0
        %v2643 = vpop.f32.mrf.mxu0
        %v2644 = vadd.f32 0.0, %v2643
        %v2645 = vpop.f32.mrf.mxu0
        %2646 = vmatprep.mubr.bf16.mxu0 0
        %2647 = vmatmul.mubr.bf16.gmra.mxu0 %v2573
        %v2648 = vpop.f32.mrf.mxu0
        %v2649 = vadd.f32 0.0, %v2648
        %v2650 = vpop.f32.mrf.mxu0
        %v2651 = vpop.f32.mrf.mxu0
        %v2652 = vadd.f32 0.0, %v2651
        %v2653 = vpop.f32.mrf.mxu0
        %2654 = vmatprep.mubr.bf16.mxu0 0
        %2655 = vmatmul.mubr.bf16.gmra.mxu0 %v2576
        %v2656 = vpop.f32.mrf.mxu0
        %v2657 = vadd.f32 0.0, %v2656
        %v2658 = vpop.f32.mrf.mxu0
        %v2659 = vpop.f32.mrf.mxu0
        %v2660 = vadd.f32 0.0, %v2659
        %v2661 = vpop.f32.mrf.mxu0
        %2662 = vmatprep.mubr.bf16.mxu0 0
        %2663 = vmatmul.mubr.bf16.gmra.mxu0 %v2579
        %v2664 = vpop.f32.mrf.mxu0
        %v2665 = vadd.f32 0.0, %v2664
        %v2666 = vpop.f32.mrf.mxu0
        %v2667 = vpop.f32.mrf.mxu0
        %v2668 = vadd.f32 0.0, %v2667
        %v2669 = vpop.f32.mrf.mxu0
        %2670 = vmatprep.mubr.bf16.mxu0 0
        %2671 = vmatmul.mubr.bf16.gmra.mxu0 %v2582
        %v2672 = vpop.f32.mrf.mxu0
        %v2673 = vadd.f32 0.0, %v2672
        %v2674 = vpop.f32.mrf.mxu0
        %v2675 = vpop.f32.mrf.mxu0
        %v2676 = vadd.f32 0.0, %v2675
        %v2677 = vpop.f32.mrf.mxu0
        %2678 = vmatprep.mubr.bf16.mxu0 0
        %2679 = vmatmul.mubr.bf16.gmra.mxu0 %v2585
        %v2680 = vpop.f32.mrf.mxu0
        %v2681 = vadd.f32 0.0, %v2680
        %v2682 = vpop.f32.mrf.mxu0
        %v2683 = vpop.f32.mrf.mxu0
        %v2684 = vadd.f32 0.0, %v2683
        %v2685 = vpop.f32.mrf.mxu0
        %2686 = vdwg.mxu0
        %v2687 = vld [vmem:[#allocation2] sm:$0xff]
        %v2688 = vld [vmem:[#allocation2 + $0x8] sm:$0xff]
        %v2689 = vld [vmem:[#allocation2 + $0x10] sm:$0xff]
        %v2690 = vld [vmem:[#allocation2 + $0x18] sm:$0xff]
        %v2691 = vld [vmem:[#allocation2 + $0x20] sm:$0xff]
        %v2692 = vld [vmem:[#allocation2 + $0x28] sm:$0xff]
        %v2693 = vld [vmem:[#allocation2 + $0x30] sm:$0xff]
        %v2694 = vld [vmem:[#allocation2 + $0x38] sm:$0xff]
        %v2695 = vld [vmem:[#allocation2 + $0x40] sm:$0xff]
        %v2696 = vld [vmem:[#allocation2 + $0x48] sm:$0xff]
        %v2697 = vld [vmem:[#allocation2 + $0x50] sm:$0xff]
        %v2698 = vld [vmem:[#allocation2 + $0x58] sm:$0xff]
        %v2699 = vld [vmem:[#allocation2 + $0x60] sm:$0xff]
        %v2700 = vld [vmem:[#allocation2 + $0x68] sm:$0xff]
        %v2701 = vld [vmem:[#allocation2 + $0x70] sm:$0xff]
        %v2702 = vld [vmem:[#allocation2 + $0x78] sm:$0xff]
        %v2703 = vadd.f32 %v2687, %v2625
        %v2704 = vadd.f32 %v2688, %v2628
        %v2705 = vadd.f32 %v2689, %v2633
        %v2706 = vadd.f32 %v2690, %v2636
        %v2707 = vadd.f32 %v2691, %v2641
        %v2708 = vadd.f32 %v2692, %v2644
        %v2709 = vadd.f32 %v2693, %v2649
        %v2710 = vadd.f32 %v2694, %v2652
        %v2711 = vadd.f32 %v2695, %v2657
        %v2712 = vadd.f32 %v2696, %v2660
        %v2713 = vadd.f32 %v2697, %v2665
        %v2714 = vadd.f32 %v2698, %v2668
        %v2715 = vadd.f32 %v2699, %v2673
        %v2716 = vadd.f32 %v2700, %v2676
        %v2717 = vadd.f32 %v2701, %v2681
        %v2718 = vadd.f32 %v2702, %v2684
        %2719 = vst [vmem:[#allocation2] sm:$0xff] %v2703
        %2720 = vst [vmem:[#allocation2 + $0x8] sm:$0xff] %v2704
        %2721 = vst [vmem:[#allocation2 + $0x10] sm:$0xff] %v2705
        %2722 = vst [vmem:[#allocation2 + $0x18] sm:$0xff] %v2706
        %2723 = vst [vmem:[#allocation2 + $0x20] sm:$0xff] %v2707
        %2724 = vst [vmem:[#allocation2 + $0x28] sm:$0xff] %v2708
        %2725 = vst [vmem:[#allocation2 + $0x30] sm:$0xff] %v2709
        %2726 = vst [vmem:[#allocation2 + $0x38] sm:$0xff] %v2710
        %2727 = vst [vmem:[#allocation2 + $0x40] sm:$0xff] %v2711
        %2728 = vst [vmem:[#allocation2 + $0x48] sm:$0xff] %v2712
        %2729 = vst [vmem:[#allocation2 + $0x50] sm:$0xff] %v2713
        %2730 = vst [vmem:[#allocation2 + $0x58] sm:$0xff] %v2714
        %2731 = vst [vmem:[#allocation2 + $0x60] sm:$0xff] %v2715
        %2732 = vst [vmem:[#allocation2 + $0x68] sm:$0xff] %v2716
        %2733 = vst [vmem:[#allocation2 + $0x70] sm:$0xff] %v2717
        %2734 = vst [vmem:[#allocation2 + $0x78] sm:$0xff] %v2718
        %v2735 = vld [vmem:[%s2090] sm:$0xe]
        %v2736 = vld [vmem:[%s2090 + $0x4] sm:$0xf]
        %v2737 = vld [vmem:[%s2090 + $0x8] sm:$0x1]
        %v2738 = vld [vmem:[%s2090 + $0xc] sm:$0xe]
        %v2739 = vld [vmem:[%s2090 + $0x10] sm:$0xf]
        %v2740 = vld [vmem:[%s2090 + $0x14] sm:$0x1]
        %v2741 = vld [vmem:[%s2090 + $0x18] sm:$0xe]
        %v2742 = vld [vmem:[%s2090 + $0x1c] sm:$0xf]
        %v2743 = vld [vmem:[%s2090 + $0x20] sm:$0x1]
        %v2744 = vld [vmem:[%s2090 + $0x24] sm:$0xe]
        %v2745 = vld [vmem:[%s2090 + $0x28] sm:$0xf]
        %v2746 = vld [vmem:[%s2090 + $0x2c] sm:$0x1]
        %v2747 = vld [vmem:[%s2090 + $0x30] sm:$0xe]
        %v2748 = vld [vmem:[%s2090 + $0x34] sm:$0xf]
        %v2749 = vld [vmem:[%s2090 + $0x38] sm:$0x1]
        %v2750 = vld [vmem:[%s2090 + $0x3c] sm:$0xe]
        %v2751 = vld [vmem:[%s2090 + $0x40] sm:$0xf]
        %v2752 = vld [vmem:[%s2090 + $0x44] sm:$0x1]
        %v2753 = vld [vmem:[%s2090 + $0x48] sm:$0xe]
        %v2754 = vld [vmem:[%s2090 + $0x4c] sm:$0xf]
        %v2755 = vld [vmem:[%s2090 + $0x50] sm:$0x1]
        %v2756 = vld [vmem:[%s2090 + $0x54] sm:$0xe]
        %v2757 = vld [vmem:[%s2090 + $0x58] sm:$0xf]
        %v2758 = vld [vmem:[%s2090 + $0x5c] sm:$0x1]
        %v2783 = vrot.slane %v2735, 5
        %v2784 = vrot.slane %v2783, 4
        %v2785 = vrot.slane %v2736, 5
        %v2786 = vsel %vm882, %v2784, %v2785
        %v2787 = vrot.slane %v2785, 4
        %v2788 = vrot.slane %v2737, 5
        %v2789 = vsel %vm882, %v2787, %v2788
        %v2790 = vrot.slane %v2738, 5
        %v2791 = vrot.slane %v2790, 4
        %v2792 = vrot.slane %v2739, 5
        %v2793 = vsel %vm882, %v2791, %v2792
        %v2794 = vrot.slane %v2792, 4
        %v2795 = vrot.slane %v2740, 5
        %v2796 = vsel %vm882, %v2794, %v2795
        %v2797 = vrot.slane %v2741, 5
        %v2798 = vrot.slane %v2797, 4
        %v2799 = vrot.slane %v2742, 5
        %v2800 = vsel %vm882, %v2798, %v2799
        %v2801 = vrot.slane %v2799, 4
        %v2802 = vrot.slane %v2743, 5
        %v2803 = vsel %vm882, %v2801, %v2802
        %v2804 = vrot.slane %v2744, 5
        %v2805 = vrot.slane %v2804, 4
        %v2806 = vrot.slane %v2745, 5
        %v2807 = vsel %vm882, %v2805, %v2806
        %v2808 = vrot.slane %v2806, 4
        %v2809 = vrot.slane %v2746, 5
        %v2810 = vsel %vm882, %v2808, %v2809
        %v2811 = vrot.slane %v2747, 5
        %v2812 = vrot.slane %v2811, 4
        %v2813 = vrot.slane %v2748, 5
        %v2814 = vsel %vm882, %v2812, %v2813
        %v2815 = vrot.slane %v2813, 4
        %v2816 = vrot.slane %v2749, 5
        %v2817 = vsel %vm882, %v2815, %v2816
        %v2818 = vrot.slane %v2750, 5
        %v2819 = vrot.slane %v2818, 4
        %v2820 = vrot.slane %v2751, 5
        %v2821 = vsel %vm882, %v2819, %v2820
        %v2822 = vrot.slane %v2820, 4
        %v2823 = vrot.slane %v2752, 5
        %v2824 = vsel %vm882, %v2822, %v2823
        %v2825 = vrot.slane %v2753, 5
        %v2826 = vrot.slane %v2825, 4
        %v2827 = vrot.slane %v2754, 5
        %v2828 = vsel %vm882, %v2826, %v2827
        %v2829 = vrot.slane %v2827, 4
        %v2830 = vrot.slane %v2755, 5
        %v2831 = vsel %vm882, %v2829, %v2830
        %v2832 = vrot.slane %v2756, 5
        %v2833 = vrot.slane %v2832, 4
        %v2834 = vrot.slane %v2757, 5
        %v2835 = vsel %vm882, %v2833, %v2834
        %v2836 = vrot.slane %v2834, 4
        %v2837 = vrot.slane %v2758, 5
        %v2838 = vsel %vm882, %v2836, %v2837
        %s2839 = scalar_lea.vmem %s1, 16
        %v2840 = vld [vmem:[%s2839] sm:$0x3]
        %v2841 = vunpack.c.l.b16 %v2786
        %v2842 = vunpack.c.l.b16 %v2789
        %v2843 = vunpack.c.l.b16 %v2793
        %v2844 = vunpack.c.l.b16 %v2796
        %v2845 = vunpack.c.l.b16 %v2800
        %v2846 = vunpack.c.l.b16 %v2803
        %v2847 = vunpack.c.l.b16 %v2807
        %v2848 = vunpack.c.l.b16 %v2810
        %v2849 = vunpack.c.l.b16 %v2814
        %v2850 = vunpack.c.l.b16 %v2817
        %v2851 = vunpack.c.l.b16 %v2821
        %v2852 = vunpack.c.l.b16 %v2824
        %v2853 = vunpack.c.l.b16 %v2828
        %v2854 = vunpack.c.l.b16 %v2831
        %v2855 = vunpack.c.l.b16 %v2835
        %v2856 = vunpack.c.l.b16 %v2838
        %v2857 = vpack.c.b16 %v2842, %v2841
        %v2858 = vpack.c.b16 %v2844, %v2843
        %v2859 = vpack.c.b16 %v2846, %v2845
        %v2860 = vpack.c.b16 %v2848, %v2847
        %v2861 = vpack.c.b16 %v2850, %v2849
        %v2862 = vpack.c.b16 %v2852, %v2851
        %v2863 = vpack.c.b16 %v2854, %v2853
        %v2864 = vpack.c.b16 %v2856, %v2855
        %v2866 = vsel %vm273, %v2857, 0
        %v2869 = vsel %vm273, %v2858, 0
        %v2872 = vsel %vm273, %v2859, 0
        %v2875 = vsel %vm273, %v2860, 0
        %v2878 = vsel %vm273, %v2861, 0
        %v2881 = vsel %vm273, %v2862, 0
        %v2884 = vsel %vm273, %v2863, 0
        %v2887 = vsel %vm273, %v2864, 0
        %v2890 = vsel %vm298, %v2840, 0
        %2892 = vmatprep.subr.bf16.mxu0 0
        %2893 = vmatpush1.bf16.msra.mxu0 0
        %2894 = vmatprep.subr.bf16.mxu0 0
        %2895 = vmatpush1.bf16.msra.mxu0 0
        %2896 = vmatprep.subr.bf16.mxu0 0
        %2897 = vmatpush1.bf16.msra.mxu0 0
        %2898 = vmatprep.subr.bf16.mxu0 0
        %2899 = vmatpush1.bf16.msra.mxu0 0
        %2900 = vmatprep.subr.bf16.mxu0 0
        %2901 = vmatpush1.bf16.msra.mxu0 0
        %2902 = vmatprep.subr.bf16.mxu0 0
        %2903 = vmatpush1.bf16.msra.mxu0 0
        %2904 = vmatprep.subr.bf16.mxu0 0
        %2905 = vmatpush1.bf16.msra.mxu0 0
        %2906 = vmatprep.subr.bf16.mxu0 0
        %2907 = vmatpush1.bf16.msra.mxu0 %v2890
        %2908 = vmatprep.subr.bf16.mxu0 0
        %2909 = vmatpush2.bf16.msra.mxu0 0
        %2910 = vmatprep.subr.bf16.mxu0 0
        %2911 = vmatpush2.bf16.msra.mxu0 0
        %2912 = vmatprep.subr.bf16.mxu0 0
        %2913 = vmatpush2.bf16.msra.mxu0 0
        %2914 = vmatprep.subr.bf16.mxu0 0
        %2915 = vmatpush2.bf16.msra.mxu0 0
        %2916 = vmatprep.subr.bf16.mxu0 0
        %2917 = vmatpush2.bf16.msra.mxu0 0
        %2918 = vmatprep.subr.bf16.mxu0 0
        %2919 = vmatpush2.bf16.msra.mxu0 0
        %2920 = vmatprep.subr.bf16.mxu0 0
        %2921 = vmatpush2.bf16.msra.mxu0 0
        %2922 = vmatprep.subr.bf16.mxu0 0
        %2923 = vmatpush2.bf16.msra.mxu0 0
        %2924 = vmatprep.mubr.bf16.mxu0 0
        %2925 = vmatmul.mubr.bf16.gmra.mxu0 %v2866
        %v2926 = vpop.f32.mrf.mxu0
        %v2927 = vadd.f32 0.0, %v2926
        %v2928 = vpop.f32.mrf.mxu0
        %v2929 = vpop.f32.mrf.mxu0
        %v2930 = vadd.f32 0.0, %v2929
        %v2931 = vpop.f32.mrf.mxu0
        %2932 = vmatprep.mubr.bf16.mxu0 0
        %2933 = vmatmul.mubr.bf16.gmra.mxu0 %v2869
        %v2934 = vpop.f32.mrf.mxu0
        %v2935 = vadd.f32 0.0, %v2934
        %v2936 = vpop.f32.mrf.mxu0
        %v2937 = vpop.f32.mrf.mxu0
        %v2938 = vadd.f32 0.0, %v2937
        %v2939 = vpop.f32.mrf.mxu0
        %2940 = vmatprep.mubr.bf16.mxu0 0
        %2941 = vmatmul.mubr.bf16.gmra.mxu0 %v2872
        %v2942 = vpop.f32.mrf.mxu0
        %v2943 = vadd.f32 0.0, %v2942
        %v2944 = vpop.f32.mrf.mxu0
        %v2945 = vpop.f32.mrf.mxu0
        %v2946 = vadd.f32 0.0, %v2945
        %v2947 = vpop.f32.mrf.mxu0
        %2948 = vmatprep.mubr.bf16.mxu0 0
        %2949 = vmatmul.mubr.bf16.gmra.mxu0 %v2875
        %v2950 = vpop.f32.mrf.mxu0
        %v2951 = vadd.f32 0.0, %v2950
        %v2952 = vpop.f32.mrf.mxu0
        %v2953 = vpop.f32.mrf.mxu0
        %v2954 = vadd.f32 0.0, %v2953
        %v2955 = vpop.f32.mrf.mxu0
        %2956 = vmatprep.mubr.bf16.mxu0 0
        %2957 = vmatmul.mubr.bf16.gmra.mxu0 %v2878
        %v2958 = vpop.f32.mrf.mxu0
        %v2959 = vadd.f32 0.0, %v2958
        %v2960 = vpop.f32.mrf.mxu0
        %v2961 = vpop.f32.mrf.mxu0
        %v2962 = vadd.f32 0.0, %v2961
        %v2963 = vpop.f32.mrf.mxu0
        %2964 = vmatprep.mubr.bf16.mxu0 0
        %2965 = vmatmul.mubr.bf16.gmra.mxu0 %v2881
        %v2966 = vpop.f32.mrf.mxu0
        %v2967 = vadd.f32 0.0, %v2966
        %v2968 = vpop.f32.mrf.mxu0
        %v2969 = vpop.f32.mrf.mxu0
        %v2970 = vadd.f32 0.0, %v2969
        %v2971 = vpop.f32.mrf.mxu0
        %2972 = vmatprep.mubr.bf16.mxu0 0
        %2973 = vmatmul.mubr.bf16.gmra.mxu0 %v2884
        %v2974 = vpop.f32.mrf.mxu0
        %v2975 = vadd.f32 0.0, %v2974
        %v2976 = vpop.f32.mrf.mxu0
        %v2977 = vpop.f32.mrf.mxu0
        %v2978 = vadd.f32 0.0, %v2977
        %v2979 = vpop.f32.mrf.mxu0
        %2980 = vmatprep.mubr.bf16.mxu0 0
        %2981 = vmatmul.mubr.bf16.gmra.mxu0 %v2887
        %v2982 = vpop.f32.mrf.mxu0
        %v2983 = vadd.f32 0.0, %v2982
        %v2984 = vpop.f32.mrf.mxu0
        %v2985 = vpop.f32.mrf.mxu0
        %v2986 = vadd.f32 0.0, %v2985
        %v2987 = vpop.f32.mrf.mxu0
        %2988 = vdwg.mxu0
        %v2989 = vld [vmem:[#allocation2] sm:$0xff]
        %v2990 = vld [vmem:[#allocation2 + $0x8] sm:$0xff]
        %v2991 = vld [vmem:[#allocation2 + $0x10] sm:$0xff]
        %v2992 = vld [vmem:[#allocation2 + $0x18] sm:$0xff]
        %v2993 = vld [vmem:[#allocation2 + $0x20] sm:$0xff]
        %v2994 = vld [vmem:[#allocation2 + $0x28] sm:$0xff]
        %v2995 = vld [vmem:[#allocation2 + $0x30] sm:$0xff]
        %v2996 = vld [vmem:[#allocation2 + $0x38] sm:$0xff]
        %v2997 = vld [vmem:[#allocation2 + $0x40] sm:$0xff]
        %v2998 = vld [vmem:[#allocation2 + $0x48] sm:$0xff]
        %v2999 = vld [vmem:[#allocation2 + $0x50] sm:$0xff]
        %v3000 = vld [vmem:[#allocation2 + $0x58] sm:$0xff]
        %v3001 = vld [vmem:[#allocation2 + $0x60] sm:$0xff]
        %v3002 = vld [vmem:[#allocation2 + $0x68] sm:$0xff]
        %v3003 = vld [vmem:[#allocation2 + $0x70] sm:$0xff]
        %v3004 = vld [vmem:[#allocation2 + $0x78] sm:$0xff]
        %v3005 = vadd.f32 %v2989, %v2927
        %v3006 = vadd.f32 %v2990, %v2930
        %v3007 = vadd.f32 %v2991, %v2935
        %v3008 = vadd.f32 %v2992, %v2938
        %v3009 = vadd.f32 %v2993, %v2943
        %v3010 = vadd.f32 %v2994, %v2946
        %v3011 = vadd.f32 %v2995, %v2951
        %v3012 = vadd.f32 %v2996, %v2954
        %v3013 = vadd.f32 %v2997, %v2959
        %v3014 = vadd.f32 %v2998, %v2962
        %v3015 = vadd.f32 %v2999, %v2967
        %v3016 = vadd.f32 %v3000, %v2970
        %v3017 = vadd.f32 %v3001, %v2975
        %v3018 = vadd.f32 %v3002, %v2978
        %v3019 = vadd.f32 %v3003, %v2983
        %v3020 = vadd.f32 %v3004, %v2986
        %3021 = vst [vmem:[#allocation2] sm:$0xff] %v3005
        %3022 = vst [vmem:[#allocation2 + $0x8] sm:$0xff] %v3006
        %3023 = vst [vmem:[#allocation2 + $0x10] sm:$0xff] %v3007
        %3024 = vst [vmem:[#allocation2 + $0x18] sm:$0xff] %v3008
        %3025 = vst [vmem:[#allocation2 + $0x20] sm:$0xff] %v3009
        %3026 = vst [vmem:[#allocation2 + $0x28] sm:$0xff] %v3010
        %3027 = vst [vmem:[#allocation2 + $0x30] sm:$0xff] %v3011
        %3028 = vst [vmem:[#allocation2 + $0x38] sm:$0xff] %v3012
        %3029 = vst [vmem:[#allocation2 + $0x40] sm:$0xff] %v3013
        %3030 = vst [vmem:[#allocation2 + $0x48] sm:$0xff] %v3014
        %3031 = vst [vmem:[#allocation2 + $0x50] sm:$0xff] %v3015
        %3032 = vst [vmem:[#allocation2 + $0x58] sm:$0xff] %v3016
        %3033 = vst [vmem:[#allocation2 + $0x60] sm:$0xff] %v3017
        %3034 = vst [vmem:[#allocation2 + $0x68] sm:$0xff] %v3018
        %3035 = vst [vmem:[#allocation2 + $0x70] sm:$0xff] %v3019
        %3036 = vst [vmem:[#allocation2 + $0x78] sm:$0xff] %v3020
        %v3037 = vld [vmem:[#allocation2] sm:$0xff]
        %v3038 = vld [vmem:[#allocation2 + $0x8] sm:$0xff]
        %v3039 = vld [vmem:[#allocation2 + $0x10] sm:$0xff]
        %v3040 = vld [vmem:[#allocation2 + $0x18] sm:$0xff]
        %v3041 = vld [vmem:[#allocation2 + $0x20] sm:$0xff]
        %v3042 = vld [vmem:[#allocation2 + $0x28] sm:$0xff]
        %v3043 = vld [vmem:[#allocation2 + $0x30] sm:$0xff]
        %v3044 = vld [vmem:[#allocation2 + $0x38] sm:$0xff]
        %v3045 = vld [vmem:[#allocation2 + $0x40] sm:$0xff]
        %v3046 = vld [vmem:[#allocation2 + $0x48] sm:$0xff]
        %v3047 = vld [vmem:[#allocation2 + $0x50] sm:$0xff]
        %v3048 = vld [vmem:[#allocation2 + $0x58] sm:$0xff]
        %v3049 = vld [vmem:[#allocation2 + $0x60] sm:$0xff]
        %v3050 = vld [vmem:[#allocation2 + $0x68] sm:$0xff]
        %v3051 = vld [vmem:[#allocation2 + $0x70] sm:$0xff]
        %v3052 = vld [vmem:[#allocation2 + $0x78] sm:$0xff]
        %v3053 = vld [vmem:[%s2] sm:$0x1]
        %v3055 = vlaneseq
        %v3056 = vshrl.u32 %v3055, 7
        %v3057 = vsub.s32 0, %v3056
        %v3058 = vrot.slane %v3053, %v3057
        %v3060 = vmul.f32 %v3037, %v3058
        %v3061 = vmul.f32 %v3038, %v3058
        %v3062 = vmul.f32 %v3039, %v3058
        %v3063 = vmul.f32 %v3040, %v3058
        %v3064 = vmul.f32 %v3041, %v3058
        %v3065 = vmul.f32 %v3042, %v3058
        %v3066 = vmul.f32 %v3043, %v3058
        %v3067 = vmul.f32 %v3044, %v3058
        %v3068 = vmul.f32 %v3045, %v3058
        %v3069 = vmul.f32 %v3046, %v3058
        %v3070 = vmul.f32 %v3047, %v3058
        %v3071 = vmul.f32 %v3048, %v3058
        %v3072 = vmul.f32 %v3049, %v3058
        %v3073 = vmul.f32 %v3050, %v3058
        %v3074 = vmul.f32 %v3051, %v3058
        %v3075 = vmul.f32 %v3052, %v3058
        %v3076 = vld [vmem:[%s3] sm:$0x1]
        %v3078 = vlaneseq
        %v3079 = vshrl.u32 %v3078, 7
        %v3080 = vsub.s32 0, %v3079
        %v3081 = vrot.slane %v3076, %v3080
        %v3083 = vadd.f32 %v3060, %v3081
        %v3084 = vadd.f32 %v3061, %v3081
        %v3085 = vadd.f32 %v3062, %v3081
        %v3086 = vadd.f32 %v3063, %v3081
        %v3087 = vadd.f32 %v3064, %v3081
        %v3088 = vadd.f32 %v3065, %v3081
        %v3089 = vadd.f32 %v3066, %v3081
        %v3090 = vadd.f32 %v3067, %v3081
        %v3091 = vadd.f32 %v3068, %v3081
        %v3092 = vadd.f32 %v3069, %v3081
        %v3093 = vadd.f32 %v3070, %v3081
        %v3094 = vadd.f32 %v3071, %v3081
        %v3095 = vadd.f32 %v3072, %v3081
        %v3096 = vadd.f32 %v3073, %v3081
        %v3097 = vadd.f32 %v3074, %v3081
        %v3098 = vadd.f32 %v3075, %v3081
        %v3099 = vsub.f32 0.0, %v3083
        %v3100 = vsub.f32 0.0, %v3084
        %v3101 = vsub.f32 0.0, %v3085
        %v3102 = vsub.f32 0.0, %v3086
        %v3103 = vsub.f32 0.0, %v3087
        %v3104 = vsub.f32 0.0, %v3088
        %v3105 = vsub.f32 0.0, %v3089
        %v3106 = vsub.f32 0.0, %v3090
        %v3107 = vsub.f32 0.0, %v3091
        %v3108 = vsub.f32 0.0, %v3092
        %v3109 = vsub.f32 0.0, %v3093
        %v3110 = vsub.f32 0.0, %v3094
        %v3111 = vsub.f32 0.0, %v3095
        %v3112 = vsub.f32 0.0, %v3096
        %v3113 = vsub.f32 0.0, %v3097
        %v3114 = vsub.f32 0.0, %v3098
        %v3115 = vmul.f32 %v3099, 1.442695
        %v3116 = vpow.pop %v3115
        %v3117 = vmul.f32 %v3100, 1.442695
        %v3118 = vpow.pop %v3117
        %v3119 = vmul.f32 %v3101, 1.442695
        %v3120 = vpow.pop %v3119
        %v3121 = vmul.f32 %v3102, 1.442695
        %v3122 = vpow.pop %v3121
        %v3123 = vmul.f32 %v3103, 1.442695
        %v3124 = vpow.pop %v3123
        %v3125 = vmul.f32 %v3104, 1.442695
        %v3126 = vpow.pop %v3125
        %v3127 = vmul.f32 %v3105, 1.442695
        %v3128 = vpow.pop %v3127
        %v3129 = vmul.f32 %v3106, 1.442695
        %v3130 = vpow.pop %v3129
        %v3131 = vmul.f32 %v3107, 1.442695
        %v3132 = vpow.pop %v3131
        %v3133 = vmul.f32 %v3108, 1.442695
        %v3134 = vpow.pop %v3133
        %v3135 = vmul.f32 %v3109, 1.442695
        %v3136 = vpow.pop %v3135
        %v3137 = vmul.f32 %v3110, 1.442695
        %v3138 = vpow.pop %v3137
        %v3139 = vmul.f32 %v3111, 1.442695
        %v3140 = vpow.pop %v3139
        %v3141 = vmul.f32 %v3112, 1.442695
        %v3142 = vpow.pop %v3141
        %v3143 = vmul.f32 %v3113, 1.442695
        %v3144 = vpow.pop %v3143
        %v3145 = vmul.f32 %v3114, 1.442695
        %v3146 = vpow.pop %v3145
        %v3147 = vadd.f32 %v3116, 1.0
        %v3148 = vadd.f32 %v3118, 1.0
        %v3149 = vadd.f32 %v3120, 1.0
        %v3150 = vadd.f32 %v3122, 1.0
        %v3151 = vadd.f32 %v3124, 1.0
        %v3152 = vadd.f32 %v3126, 1.0
        %v3153 = vadd.f32 %v3128, 1.0
        %v3154 = vadd.f32 %v3130, 1.0
        %v3155 = vadd.f32 %v3132, 1.0
        %v3156 = vadd.f32 %v3134, 1.0
        %v3157 = vadd.f32 %v3136, 1.0
        %v3158 = vadd.f32 %v3138, 1.0
        %v3159 = vadd.f32 %v3140, 1.0
        %v3160 = vadd.f32 %v3142, 1.0
        %v3161 = vadd.f32 %v3144, 1.0
        %v3162 = vadd.f32 %v3146, 1.0
        %v3163 = vrcp.pop %v3147
        %v3164 = vrcp.pop %v3148
        %v3165 = vrcp.pop %v3149
        %v3166 = vrcp.pop %v3150
        %v3167 = vrcp.pop %v3151
        %v3168 = vrcp.pop %v3152
        %v3169 = vrcp.pop %v3153
        %v3170 = vrcp.pop %v3154
        %v3171 = vrcp.pop %v3155
        %v3172 = vrcp.pop %v3156
        %v3173 = vrcp.pop %v3157
        %v3174 = vrcp.pop %v3158
        %v3175 = vrcp.pop %v3159
        %v3176 = vrcp.pop %v3160
        %v3177 = vrcp.pop %v3161
        %v3178 = vrcp.pop %v3162
        %v3179 = vmul.f32 %v3083, %v3163
        %v3180 = vmul.f32 %v3084, %v3164
        %v3181 = vmul.f32 %v3085, %v3165
        %v3182 = vmul.f32 %v3086, %v3166
        %v3183 = vmul.f32 %v3087, %v3167
        %v3184 = vmul.f32 %v3088, %v3168
        %v3185 = vmul.f32 %v3089, %v3169
        %v3186 = vmul.f32 %v3090, %v3170
        %v3187 = vmul.f32 %v3091, %v3171
        %v3188 = vmul.f32 %v3092, %v3172
        %v3189 = vmul.f32 %v3093, %v3173
        %v3190 = vmul.f32 %v3094, %v3174
        %v3191 = vmul.f32 %v3095, %v3175
        %v3192 = vmul.f32 %v3096, %v3176
        %v3193 = vmul.f32 %v3097, %v3177
        %v3194 = vmul.f32 %v3098, %v3178
        %3195 = vst [vmem:[%s204] sm:$0xff] %v3179
        %3196 = vst [vmem:[%s204 + $0x8] sm:$0xff] %v3180
        %3197 = vst [vmem:[%s204 + $0x10] sm:$0xff] %v3181
        %3198 = vst [vmem:[%s204 + $0x18] sm:$0xff] %v3182
        %3199 = vst [vmem:[%s204 + $0x20] sm:$0xff] %v3183
        %3200 = vst [vmem:[%s204 + $0x28] sm:$0xff] %v3184
        %3201 = vst [vmem:[%s204 + $0x30] sm:$0xff] %v3185
        %3202 = vst [vmem:[%s204 + $0x38] sm:$0xff] %v3186
        %3203 = vst [vmem:[%s204 + $0x40] sm:$0xff] %v3187
        %3204 = vst [vmem:[%s204 + $0x48] sm:$0xff] %v3188
        %3205 = vst [vmem:[%s204 + $0x50] sm:$0xff] %v3189
        %3206 = vst [vmem:[%s204 + $0x58] sm:$0xff] %v3190
        %3207 = vst [vmem:[%s204 + $0x60] sm:$0xff] %v3191
        %3208 = vst [vmem:[%s204 + $0x68] sm:$0xff] %v3192
        %3209 = vst [vmem:[%s204 + $0x70] sm:$0xff] %v3193
        %3210 = vst [vmem:[%s204 + $0x78] sm:$0xff] %v3194
        %s3211 = sand.u32 %s129, 1
        %s3212 = scalar_lea.sflag [#allocation4], %s3211
        %s3213 = sand.u32 %s129, 1
        %s3214 = smul.addr %s3213, 128
        %s3215 = scalar_lea.vmem [#allocation3], %s3214
        // Predicated region
        $region37: #{tpu_custom_call.1} parent=35 // pred_check
          %p3216 = pneg %p139
        $region38: #{tpu_custom_call.1} parent=35 // pred_check_branch
          %3218 = sbr.rel (%p3216) target = $region40
        $region39: #{tpu_custom_call.1} parent=35 // pred_region
          %s3219 = smul.u32 16, %s23
          %s3221 = ssub.s32 2048, 2048
          %3222 = vsyncadd %s3212, %s3221
          %s3223 = smul.addr %s22, 32
          %s3224 = sadd.s32 %s3219, %s3223
          %s3225 = smul.addr %s3224, 128
          %s3226 = scalar_lea.hbm %s4, %s3225
          %s3227 = sshll.u32 %s3215, 4
          %s3228 = int_to_ptr.vmem [resolvable:$true] %s3227
          %3233 = dma.vmem_to_hbm [thread:$0]  %s3228, 2048, %s3226, %s3212, 128, 128, 8
        $region40: #{tpu_custom_call.1} parent=35 // pred_fallthru
          _
      $region36: #{tpu_custom_call.1} parent=5 // pred_fallthru
        _
      %p3234 = scmp.le.s32.totalorder 2, %s13
      // Predicated region
      $region41: #{tpu_custom_call.1} parent=5 // pred_check
        %p3235 = pneg %p3234
      $region42: #{tpu_custom_call.1} parent=5 // pred_check_branch
        %3237 = sbr.rel (%p3235) target = $region44
      $region43: #{tpu_custom_call.1} parent=5 // pred_region
        %s3238 = ssub.s32 %s13, 2
        // Predicated region
        $region45: #{tpu_custom_call.1} parent=43 // pred_check
          %p3239 = pneg %p145
        $region46: #{tpu_custom_call.1} parent=43 // pred_check_branch
          %3241 = sbr.rel (%p3239) target = $region48
        $region47: #{tpu_custom_call.1} parent=43 // pred_region
          %s3242 = sand.u32 %s130, 1
          %s3243 = scalar_lea.sflag [#allocation4], %s3242
          %s3244 = sand.u32 %s130, 1
          %s3245 = smul.addr %s3244, 128
          %s3246 = scalar_lea.vmem [#allocation3], %s3245
          %3247 = dma.done %s3243, 2048
        $region48: #{tpu_custom_call.1} parent=43 // pred_fallthru
          _
      $region44: #{tpu_custom_call.1} parent=5 // pred_fallthru
        _
    $region6: #{tpu_custom_call.1} parent=1 // loop_footer
      %s17 = sadd.s32 1, %s13
    $region7: #{tpu_custom_call.1} parent=1 // loop_footer_branch
      %12 = sbr.rel target = $region3
    $region8: #{tpu_custom_call.1} parent=1 // loop_exit
      _
    %3248 = vsyncpa [#allocation4], 1
    %s3249 = scalar_lea.sflag [#allocation4], 1
    %3250 = vsyncpa %s3249, 1

</llo_original>
